<compile_context>
chip_gen: v7x
topology: tpu7x:2x2x1
jax: 0.10.0
libtpu: 0.0.40
codegen_flags: <defaults>
</compile_context>

<pallas_src>
import jax
import jax.numpy as jnp
from jax.experimental import pallas as pl
from jax.experimental.pallas import tpu as pltpu


def _leaky_relu(x, slope=0.1):
    return jnp.where(x > 0, x, slope * x)


def graph_pooling_kernel(a_ref, x_ref, w1_ref, b1_ref, w2_ref, b2_ref,
                         w3_ref, b3_ref, st_ref, out_ref):
    Bt, N, _ = a_ref.shape
    A = a_ref[...]                                      # (Bt, N, N) f32

    def gcn_layer(h, w_ref, b_ref, activate):
        f_in = h.shape[-1]
        f_out = w_ref.shape[-1]
        # Fused per-node projection: one (Bt*N, f_in) @ (f_in, f_out) MXU pass.
        p = jnp.dot(h.reshape(Bt * N, f_in), w_ref[...],
                    preferred_element_type=jnp.float32).reshape(Bt, N, f_out)
        # Per-graph aggregation A @ p on the VPU (contraction depth = N, tiny).
        ah = A[:, :, 0:1] * p[:, 0:1, :]
        for j in range(1, N):
            ah = ah + A[:, :, j:j + 1] * p[:, j:j + 1, :]
        ah = ah + b_ref[...]                            # (1,1,f_out) broadcast
        return _leaky_relu(ah) if activate else ah

    h = gcn_layer(x_ref[...], w1_ref, b1_ref, True)     # (Bt, N, h1)
    h = gcn_layer(h, w2_ref, b2_ref, True)              # (Bt, N, h2)
    h = gcn_layer(h, w3_ref, b3_ref, False)             # (Bt, N, dim_out)

    # Pooling Z = h @ S^T, then softmax over the K clusters (torch dim=1).
    K = st_ref.shape[-1]
    z = jnp.dot(h.reshape(Bt * N, h.shape[-1]), st_ref[...],
                preferred_element_type=jnp.float32)     # (Bt*N, K)
    m = jnp.max(z, axis=-1, keepdims=True)
    e = jnp.exp(z - m)
    d = jnp.sum(e, axis=-1, keepdims=True)
    r = pl.reciprocal(d, approx=True)                   # EUP vrcp (free-ish slot)
    r = r * (2.0 - d * r)                               # one Newton step
    out_ref[...] = (e * r).reshape(Bt, N, K)


def graph_pooling(A, X, S, params, *, block_graphs=16):
    """A: (B,N,N), X: (B,N,dim_in), S: (K,dim_out).
    params: W1,b1,W2,b2,W3,b3 with W pre-transposed to (in,out), b as (1,out)."""
    B, N, _ = A.shape
    dim_in = X.shape[-1]
    K, dim_out = S.shape

    # Graphs per grid step: target Bt*N >= 128 so the fused projection matmuls
    # run at full MXU tile occupancy (128 rows on v5e, still fine on v6e/v7x).
    Bt = max(1, min(block_graphs, B))
    n_blocks = pl.cdiv(B, Bt)
    B_pad = n_blocks * Bt
    if B_pad != B:
        pad = B_pad - B
        A = jnp.pad(A, ((0, pad), (0, 0), (0, 0)))
        X = jnp.pad(X, ((0, pad), (0, 0), (0, 0)))

    st = S.T.astype(jnp.float32)                        # (dim_out, K), unpadded
    w1, b1 = params["W1"], params["b1"].reshape(1, 1, -1)
    w2, b2 = params["W2"], params["b2"].reshape(1, 1, -1)
    w3, b3 = params["W3"], params["b3"].reshape(1, 1, -1)

    # Constant (grid-invariant) operands: same block every step -> stays VMEM
    # resident, no re-DMA.  (Could add pipeline_mode=pl.Buffered(1) if the
    # hidden dims grow large enough for double-buffering to matter.)
    def const(arr):
        nd = arr.ndim
        return pl.BlockSpec(arr.shape, lambda b, _nd=nd: (0,) * _nd)

    def per_block(feat):
        return pl.BlockSpec((Bt, N, feat), lambda b: (b, 0, 0))

    out = pl.pallas_call(
        graph_pooling_kernel,
        out_shape=jax.ShapeDtypeStruct((B_pad, N, K), jnp.float32),
        grid=(n_blocks,),
        in_specs=[
            per_block(N),                 # A
            per_block(dim_in),            # X
            const(w1), const(b1),
            const(w2), const(b2),
            const(w3), const(b3),
            const(st),                    # S^T
        ],
        out_specs=per_block(K),
        compiler_params=pltpu.CompilerParams(
            dimension_semantics=("parallel",)),
    )(A, X, w1, b1, w2, b2, w3, b3, st)

    return out[:B] if B_pad != B else out


def reference(A, X, S, params):
    def one(Ab, Xb):
        h = _leaky_relu(Ab @ Xb @ params["W1"] + params["b1"])
        h = _leaky_relu(Ab @ h @ params["W2"] + params["b2"])
        z = (Ab @ h @ params["W3"] + params["b3"]) @ S.T
        return jax.nn.softmax(z, axis=1)
    return jax.vmap(one)(A, X)


if __name__ == "__main__":
    # Small shapes consistent with the module's forward, batched over B graphs.
    B = 64         # graphs, processed 16 per grid step (Bt*N = 128 node rows)
    N = 8          # nodes per graph
    dim_in = 32
    hidden1 = 32
    hidden2 = 32
    dim_out = 16
    K = 4          # pooled clusters (rows of S)

    key = jax.random.PRNGKey(0)
    kA, kX, kS, k1, k2, k3, kb1, kb2, kb3 = jax.random.split(key, 9)

    A = jax.random.uniform(kA, (B, N, N), dtype=jnp.float32)
    X = jax.random.normal(kX, (B, N, dim_in), dtype=jnp.float32)
    S = jax.random.normal(kS, (K, dim_out), dtype=jnp.float32)

    # Deterministic parameters (Linear weights stored pre-transposed: (in, out)).
    params = {
        "W1": 0.1 * jax.random.normal(k1, (dim_in, hidden1), dtype=jnp.float32),
        "b1": 0.1 * jax.random.normal(kb1, (1, hidden1), dtype=jnp.float32),
        "W2": 0.1 * jax.random.normal(k2, (hidden1, hidden2), dtype=jnp.float32),
        "b2": 0.1 * jax.random.normal(kb2, (1, hidden2), dtype=jnp.float32),
        "W3": 0.1 * jax.random.normal(k3, (hidden2, dim_out), dtype=jnp.float32),
        "b3": 0.1 * jax.random.normal(kb3, (1, dim_out), dtype=jnp.float32),
    }

    out = jax.block_until_ready(graph_pooling(A, X, S, params, block_graphs=16))
    ref = reference(A, X, S, params)

    assert out.shape == (B, N, K)
    assert jnp.allclose(out, ref, atol=5e-5, rtol=5e-5), "mismatch vs reference"
    assert jnp.allclose(jnp.sum(out, axis=-1), 1.0, atol=1e-5), "rows must sum to 1"

    print("KERNEL_OK")
</pallas_src>

<mosaic_0001>
module attributes {stable_mosaic.version = 11 : i64} {
  func.func @graph_pooling_kernel(%arg0: i32, %arg1: memref<16x8x8xf32, #tpu.memory_space<vmem>>, %arg2: memref<16x8x32xf32, #tpu.memory_space<vmem>>, %arg3: memref<32x32xf32, #tpu.memory_space<vmem>>, %arg4: memref<1x1x32xf32, #tpu.memory_space<vmem>>, %arg5: memref<32x32xf32, #tpu.memory_space<vmem>>, %arg6: memref<1x1x32xf32, #tpu.memory_space<vmem>>, %arg7: memref<32x16xf32, #tpu.memory_space<vmem>>, %arg8: memref<1x1x16xf32, #tpu.memory_space<vmem>>, %arg9: memref<16x4xf32, #tpu.memory_space<vmem>>, %arg10: memref<16x8x4xf32, #tpu.memory_space<vmem>>) attributes {dimension_semantics = [#tpu.dimension_semantics<parallel>], iteration_bounds = array<i64: 4>, scalar_prefetch = 0 : i64, scratch_operands = 0 : i64, tpu.core_type = #tpu.core_type<tc>, window_params = [{transform_indices = @transform_0, window_bounds = array<i64: 16, 8, 8>}, {transform_indices = @transform_1, window_bounds = array<i64: 16, 8, 32>}, {pipeline_mode = #tpu.pipeline_mode<synchronous>, transform_indices = @transform_2, window_bounds = array<i64: 32, 32>}, {pipeline_mode = #tpu.pipeline_mode<synchronous>, transform_indices = @transform_3, window_bounds = array<i64: 1, 1, 32>}, {pipeline_mode = #tpu.pipeline_mode<synchronous>, transform_indices = @transform_4, window_bounds = array<i64: 32, 32>}, {pipeline_mode = #tpu.pipeline_mode<synchronous>, transform_indices = @transform_5, window_bounds = array<i64: 1, 1, 32>}, {pipeline_mode = #tpu.pipeline_mode<synchronous>, transform_indices = @transform_6, window_bounds = array<i64: 32, 16>}, {pipeline_mode = #tpu.pipeline_mode<synchronous>, transform_indices = @transform_7, window_bounds = array<i64: 1, 1, 16>}, {pipeline_mode = #tpu.pipeline_mode<synchronous>, transform_indices = @transform_8, window_bounds = array<i64: 16, 4>}, {transform_indices = @transform_9, window_bounds = array<i64: 16, 8, 4>}]} {
    %c0 = arith.constant 0 : index
    %c0_0 = arith.constant 0 : index
    %c0_1 = arith.constant 0 : index
    %0 = vector.load %arg1[%c0, %c0_0, %c0_1] : memref<16x8x8xf32, #tpu.memory_space<vmem>>, vector<16x8x8xf32>
    %c0_2 = arith.constant 0 : index
    %c0_3 = arith.constant 0 : index
    %c0_4 = arith.constant 0 : index
    %1 = vector.load %arg2[%c0_2, %c0_3, %c0_4] : memref<16x8x32xf32, #tpu.memory_space<vmem>>, vector<16x8x32xf32>
    %2 = vector.shape_cast %1 : vector<16x8x32xf32> to vector<128x32xf32>
    %c0_5 = arith.constant 0 : index
    %c0_6 = arith.constant 0 : index
    %3 = vector.load %arg3[%c0_5, %c0_6] : memref<32x32xf32, #tpu.memory_space<vmem>>, vector<32x32xf32>
    %cst = arith.constant dense<0.000000e+00> : vector<128x32xf32>
    %4 = tpu.matmul %2, %3, %cst {dimension_numbers = #tpu.dot_dimension_numbers<[1], [0], [0], [1], [0, 0, 1, 1], [], []>} : vector<128x32xf32>, vector<32x32xf32>, vector<128x32xf32> -> vector<128x32xf32>
    %5 = vector.shape_cast %4 : vector<128x32xf32> to vector<16x8x32xf32>
    %6 = vector.extract_strided_slice %0 {offsets = [0, 0, 0], sizes = [16, 8, 1], strides = [1, 1, 1]} : vector<16x8x8xf32> to vector<16x8x1xf32>
    %7 = vector.extract_strided_slice %5 {offsets = [0, 0, 0], sizes = [16, 1, 32], strides = [1, 1, 1]} : vector<16x8x32xf32> to vector<16x1x32xf32>
    %8 = vector.broadcast %6 : vector<16x8x1xf32> to vector<16x8x32xf32>
    %9 = vector.broadcast %7 : vector<16x1x32xf32> to vector<16x8x32xf32>
    %10 = arith.mulf %8, %9 : vector<16x8x32xf32>
    %11 = vector.extract_strided_slice %0 {offsets = [0, 0, 1], sizes = [16, 8, 1], strides = [1, 1, 1]} : vector<16x8x8xf32> to vector<16x8x1xf32>
    %12 = vector.extract_strided_slice %5 {offsets = [0, 1, 0], sizes = [16, 1, 32], strides = [1, 1, 1]} : vector<16x8x32xf32> to vector<16x1x32xf32>
    %13 = vector.broadcast %11 : vector<16x8x1xf32> to vector<16x8x32xf32>
    %14 = vector.broadcast %12 : vector<16x1x32xf32> to vector<16x8x32xf32>
    %15 = arith.mulf %13, %14 : vector<16x8x32xf32>
    %16 = arith.addf %10, %15 : vector<16x8x32xf32>
    %17 = vector.extract_strided_slice %0 {offsets = [0, 0, 2], sizes = [16, 8, 1], strides = [1, 1, 1]} : vector<16x8x8xf32> to vector<16x8x1xf32>
    %18 = vector.extract_strided_slice %5 {offsets = [0, 2, 0], sizes = [16, 1, 32], strides = [1, 1, 1]} : vector<16x8x32xf32> to vector<16x1x32xf32>
    %19 = vector.broadcast %17 : vector<16x8x1xf32> to vector<16x8x32xf32>
    %20 = vector.broadcast %18 : vector<16x1x32xf32> to vector<16x8x32xf32>
    %21 = arith.mulf %19, %20 : vector<16x8x32xf32>
    %22 = arith.addf %16, %21 : vector<16x8x32xf32>
    %23 = vector.extract_strided_slice %0 {offsets = [0, 0, 3], sizes = [16, 8, 1], strides = [1, 1, 1]} : vector<16x8x8xf32> to vector<16x8x1xf32>
    %24 = vector.extract_strided_slice %5 {offsets = [0, 3, 0], sizes = [16, 1, 32], strides = [1, 1, 1]} : vector<16x8x32xf32> to vector<16x1x32xf32>
    %25 = vector.broadcast %23 : vector<16x8x1xf32> to vector<16x8x32xf32>
    %26 = vector.broadcast %24 : vector<16x1x32xf32> to vector<16x8x32xf32>
    %27 = arith.mulf %25, %26 : vector<16x8x32xf32>
    %28 = arith.addf %22, %27 : vector<16x8x32xf32>
    %29 = vector.extract_strided_slice %0 {offsets = [0, 0, 4], sizes = [16, 8, 1], strides = [1, 1, 1]} : vector<16x8x8xf32> to vector<16x8x1xf32>
    %30 = vector.extract_strided_slice %5 {offsets = [0, 4, 0], sizes = [16, 1, 32], strides = [1, 1, 1]} : vector<16x8x32xf32> to vector<16x1x32xf32>
    %31 = vector.broadcast %29 : vector<16x8x1xf32> to vector<16x8x32xf32>
    %32 = vector.broadcast %30 : vector<16x1x32xf32> to vector<16x8x32xf32>
    %33 = arith.mulf %31, %32 : vector<16x8x32xf32>
    %34 = arith.addf %28, %33 : vector<16x8x32xf32>
    %35 = vector.extract_strided_slice %0 {offsets = [0, 0, 5], sizes = [16, 8, 1], strides = [1, 1, 1]} : vector<16x8x8xf32> to vector<16x8x1xf32>
    %36 = vector.extract_strided_slice %5 {offsets = [0, 5, 0], sizes = [16, 1, 32], strides = [1, 1, 1]} : vector<16x8x32xf32> to vector<16x1x32xf32>
    %37 = vector.broadcast %35 : vector<16x8x1xf32> to vector<16x8x32xf32>
    %38 = vector.broadcast %36 : vector<16x1x32xf32> to vector<16x8x32xf32>
    %39 = arith.mulf %37, %38 : vector<16x8x32xf32>
    %40 = arith.addf %34, %39 : vector<16x8x32xf32>
    %41 = vector.extract_strided_slice %0 {offsets = [0, 0, 6], sizes = [16, 8, 1], strides = [1, 1, 1]} : vector<16x8x8xf32> to vector<16x8x1xf32>
    %42 = vector.extract_strided_slice %5 {offsets = [0, 6, 0], sizes = [16, 1, 32], strides = [1, 1, 1]} : vector<16x8x32xf32> to vector<16x1x32xf32>
    %43 = vector.broadcast %41 : vector<16x8x1xf32> to vector<16x8x32xf32>
    %44 = vector.broadcast %42 : vector<16x1x32xf32> to vector<16x8x32xf32>
    %45 = arith.mulf %43, %44 : vector<16x8x32xf32>
    %46 = arith.addf %40, %45 : vector<16x8x32xf32>
    %47 = vector.extract_strided_slice %0 {offsets = [0, 0, 7], sizes = [16, 8, 1], strides = [1, 1, 1]} : vector<16x8x8xf32> to vector<16x8x1xf32>
    %48 = vector.extract_strided_slice %5 {offsets = [0, 7, 0], sizes = [16, 1, 32], strides = [1, 1, 1]} : vector<16x8x32xf32> to vector<16x1x32xf32>
    %49 = vector.broadcast %47 : vector<16x8x1xf32> to vector<16x8x32xf32>
    %50 = vector.broadcast %48 : vector<16x1x32xf32> to vector<16x8x32xf32>
    %51 = arith.mulf %49, %50 : vector<16x8x32xf32>
    %52 = arith.addf %46, %51 : vector<16x8x32xf32>
    %c0_7 = arith.constant 0 : index
    %c0_8 = arith.constant 0 : index
    %c0_9 = arith.constant 0 : index
    %53 = vector.load %arg4[%c0_7, %c0_8, %c0_9] : memref<1x1x32xf32, #tpu.memory_space<vmem>>, vector<1x1x32xf32>
    %54 = vector.broadcast %53 : vector<1x1x32xf32> to vector<16x8x32xf32>
    %55 = arith.addf %52, %54 : vector<16x8x32xf32>
    %cst_10 = arith.constant 0.000000e+00 : f32
    %56 = vector.broadcast %cst_10 : f32 to vector<16x8x32xf32>
    %57 = arith.cmpf ogt, %55, %56 : vector<16x8x32xf32>
    %cst_11 = arith.constant 1.000000e-01 : f32
    %58 = vector.broadcast %cst_11 : f32 to vector<16x8x32xf32>
    %59 = arith.mulf %58, %55 : vector<16x8x32xf32>
    %60 = arith.select %57, %55, %59 : vector<16x8x32xi1>, vector<16x8x32xf32>
    %61 = vector.shape_cast %60 : vector<16x8x32xf32> to vector<128x32xf32>
    %c0_12 = arith.constant 0 : index
    %c0_13 = arith.constant 0 : index
    %62 = vector.load %arg5[%c0_12, %c0_13] : memref<32x32xf32, #tpu.memory_space<vmem>>, vector<32x32xf32>
    %cst_14 = arith.constant dense<0.000000e+00> : vector<128x32xf32>
    %63 = tpu.matmul %61, %62, %cst_14 {dimension_numbers = #tpu.dot_dimension_numbers<[1], [0], [0], [1], [0, 0, 1, 1], [], []>} : vector<128x32xf32>, vector<32x32xf32>, vector<128x32xf32> -> vector<128x32xf32>
    %64 = vector.shape_cast %63 : vector<128x32xf32> to vector<16x8x32xf32>
    %65 = vector.extract_strided_slice %0 {offsets = [0, 0, 0], sizes = [16, 8, 1], strides = [1, 1, 1]} : vector<16x8x8xf32> to vector<16x8x1xf32>
    %66 = vector.extract_strided_slice %64 {offsets = [0, 0, 0], sizes = [16, 1, 32], strides = [1, 1, 1]} : vector<16x8x32xf32> to vector<16x1x32xf32>
    %67 = vector.broadcast %65 : vector<16x8x1xf32> to vector<16x8x32xf32>
    %68 = vector.broadcast %66 : vector<16x1x32xf32> to vector<16x8x32xf32>
    %69 = arith.mulf %67, %68 : vector<16x8x32xf32>
    %70 = vector.extract_strided_slice %0 {offsets = [0, 0, 1], sizes = [16, 8, 1], strides = [1, 1, 1]} : vector<16x8x8xf32> to vector<16x8x1xf32>
    %71 = vector.extract_strided_slice %64 {offsets = [0, 1, 0], sizes = [16, 1, 32], strides = [1, 1, 1]} : vector<16x8x32xf32> to vector<16x1x32xf32>
    %72 = vector.broadcast %70 : vector<16x8x1xf32> to vector<16x8x32xf32>
    %73 = vector.broadcast %71 : vector<16x1x32xf32> to vector<16x8x32xf32>
    %74 = arith.mulf %72, %73 : vector<16x8x32xf32>
    %75 = arith.addf %69, %74 : vector<16x8x32xf32>
    %76 = vector.extract_strided_slice %0 {offsets = [0, 0, 2], sizes = [16, 8, 1], strides = [1, 1, 1]} : vector<16x8x8xf32> to vector<16x8x1xf32>
    %77 = vector.extract_strided_slice %64 {offsets = [0, 2, 0], sizes = [16, 1, 32], strides = [1, 1, 1]} : vector<16x8x32xf32> to vector<16x1x32xf32>
    %78 = vector.broadcast %76 : vector<16x8x1xf32> to vector<16x8x32xf32>
    %79 = vector.broadcast %77 : vector<16x1x32xf32> to vector<16x8x32xf32>
    %80 = arith.mulf %78, %79 : vector<16x8x32xf32>
    %81 = arith.addf %75, %80 : vector<16x8x32xf32>
    %82 = vector.extract_strided_slice %0 {offsets = [0, 0, 3], sizes = [16, 8, 1], strides = [1, 1, 1]} : vector<16x8x8xf32> to vector<16x8x1xf32>
    %83 = vector.extract_strided_slice %64 {offsets = [0, 3, 0], sizes = [16, 1, 32], strides = [1, 1, 1]} : vector<16x8x32xf32> to vector<16x1x32xf32>
    %84 = vector.broadcast %82 : vector<16x8x1xf32> to vector<16x8x32xf32>
    %85 = vector.broadcast %83 : vector<16x1x32xf32> to vector<16x8x32xf32>
    %86 = arith.mulf %84, %85 : vector<16x8x32xf32>
    %87 = arith.addf %81, %86 : vector<16x8x32xf32>
    %88 = vector.extract_strided_slice %0 {offsets = [0, 0, 4], sizes = [16, 8, 1], strides = [1, 1, 1]} : vector<16x8x8xf32> to vector<16x8x1xf32>
    %89 = vector.extract_strided_slice %64 {offsets = [0, 4, 0], sizes = [16, 1, 32], strides = [1, 1, 1]} : vector<16x8x32xf32> to vector<16x1x32xf32>
    %90 = vector.broadcast %88 : vector<16x8x1xf32> to vector<16x8x32xf32>
    %91 = vector.broadcast %89 : vector<16x1x32xf32> to vector<16x8x32xf32>
    %92 = arith.mulf %90, %91 : vector<16x8x32xf32>
    %93 = arith.addf %87, %92 : vector<16x8x32xf32>
    %94 = vector.extract_strided_slice %0 {offsets = [0, 0, 5], sizes = [16, 8, 1], strides = [1, 1, 1]} : vector<16x8x8xf32> to vector<16x8x1xf32>
    %95 = vector.extract_strided_slice %64 {offsets = [0, 5, 0], sizes = [16, 1, 32], strides = [1, 1, 1]} : vector<16x8x32xf32> to vector<16x1x32xf32>
    %96 = vector.broadcast %94 : vector<16x8x1xf32> to vector<16x8x32xf32>
    %97 = vector.broadcast %95 : vector<16x1x32xf32> to vector<16x8x32xf32>
    %98 = arith.mulf %96, %97 : vector<16x8x32xf32>
    %99 = arith.addf %93, %98 : vector<16x8x32xf32>
    %100 = vector.extract_strided_slice %0 {offsets = [0, 0, 6], sizes = [16, 8, 1], strides = [1, 1, 1]} : vector<16x8x8xf32> to vector<16x8x1xf32>
    %101 = vector.extract_strided_slice %64 {offsets = [0, 6, 0], sizes = [16, 1, 32], strides = [1, 1, 1]} : vector<16x8x32xf32> to vector<16x1x32xf32>
    %102 = vector.broadcast %100 : vector<16x8x1xf32> to vector<16x8x32xf32>
    %103 = vector.broadcast %101 : vector<16x1x32xf32> to vector<16x8x32xf32>
    %104 = arith.mulf %102, %103 : vector<16x8x32xf32>
    %105 = arith.addf %99, %104 : vector<16x8x32xf32>
    %106 = vector.extract_strided_slice %0 {offsets = [0, 0, 7], sizes = [16, 8, 1], strides = [1, 1, 1]} : vector<16x8x8xf32> to vector<16x8x1xf32>
    %107 = vector.extract_strided_slice %64 {offsets = [0, 7, 0], sizes = [16, 1, 32], strides = [1, 1, 1]} : vector<16x8x32xf32> to vector<16x1x32xf32>
    %108 = vector.broadcast %106 : vector<16x8x1xf32> to vector<16x8x32xf32>
    %109 = vector.broadcast %107 : vector<16x1x32xf32> to vector<16x8x32xf32>
    %110 = arith.mulf %108, %109 : vector<16x8x32xf32>
    %111 = arith.addf %105, %110 : vector<16x8x32xf32>
    %c0_15 = arith.constant 0 : index
    %c0_16 = arith.constant 0 : index
    %c0_17 = arith.constant 0 : index
    %112 = vector.load %arg6[%c0_15, %c0_16, %c0_17] : memref<1x1x32xf32, #tpu.memory_space<vmem>>, vector<1x1x32xf32>
    %113 = vector.broadcast %112 : vector<1x1x32xf32> to vector<16x8x32xf32>
    %114 = arith.addf %111, %113 : vector<16x8x32xf32>
    %cst_18 = arith.constant 0.000000e+00 : f32
    %115 = vector.broadcast %cst_18 : f32 to vector<16x8x32xf32>
    %116 = arith.cmpf ogt, %114, %115 : vector<16x8x32xf32>
    %cst_19 = arith.constant 1.000000e-01 : f32
    %117 = vector.broadcast %cst_19 : f32 to vector<16x8x32xf32>
    %118 = arith.mulf %117, %114 : vector<16x8x32xf32>
    %119 = arith.select %116, %114, %118 : vector<16x8x32xi1>, vector<16x8x32xf32>
    %120 = vector.shape_cast %119 : vector<16x8x32xf32> to vector<128x32xf32>
    %c0_20 = arith.constant 0 : index
    %c0_21 = arith.constant 0 : index
    %121 = vector.load %arg7[%c0_20, %c0_21] : memref<32x16xf32, #tpu.memory_space<vmem>>, vector<32x16xf32>
    %cst_22 = arith.constant dense<0.000000e+00> : vector<128x16xf32>
    %122 = tpu.matmul %120, %121, %cst_22 {dimension_numbers = #tpu.dot_dimension_numbers<[1], [0], [0], [1], [0, 0, 1, 1], [], []>} : vector<128x32xf32>, vector<32x16xf32>, vector<128x16xf32> -> vector<128x16xf32>
    %123 = vector.shape_cast %122 : vector<128x16xf32> to vector<16x8x16xf32>
    %124 = vector.extract_strided_slice %0 {offsets = [0, 0, 0], sizes = [16, 8, 1], strides = [1, 1, 1]} : vector<16x8x8xf32> to vector<16x8x1xf32>
    %125 = vector.extract_strided_slice %123 {offsets = [0, 0, 0], sizes = [16, 1, 16], strides = [1, 1, 1]} : vector<16x8x16xf32> to vector<16x1x16xf32>
    %126 = vector.broadcast %124 : vector<16x8x1xf32> to vector<16x8x16xf32>
    %127 = vector.broadcast %125 : vector<16x1x16xf32> to vector<16x8x16xf32>
    %128 = arith.mulf %126, %127 : vector<16x8x16xf32>
    %129 = vector.extract_strided_slice %0 {offsets = [0, 0, 1], sizes = [16, 8, 1], strides = [1, 1, 1]} : vector<16x8x8xf32> to vector<16x8x1xf32>
    %130 = vector.extract_strided_slice %123 {offsets = [0, 1, 0], sizes = [16, 1, 16], strides = [1, 1, 1]} : vector<16x8x16xf32> to vector<16x1x16xf32>
    %131 = vector.broadcast %129 : vector<16x8x1xf32> to vector<16x8x16xf32>
    %132 = vector.broadcast %130 : vector<16x1x16xf32> to vector<16x8x16xf32>
    %133 = arith.mulf %131, %132 : vector<16x8x16xf32>
    %134 = arith.addf %128, %133 : vector<16x8x16xf32>
    %135 = vector.extract_strided_slice %0 {offsets = [0, 0, 2], sizes = [16, 8, 1], strides = [1, 1, 1]} : vector<16x8x8xf32> to vector<16x8x1xf32>
    %136 = vector.extract_strided_slice %123 {offsets = [0, 2, 0], sizes = [16, 1, 16], strides = [1, 1, 1]} : vector<16x8x16xf32> to vector<16x1x16xf32>
    %137 = vector.broadcast %135 : vector<16x8x1xf32> to vector<16x8x16xf32>
    %138 = vector.broadcast %136 : vector<16x1x16xf32> to vector<16x8x16xf32>
    %139 = arith.mulf %137, %138 : vector<16x8x16xf32>
    %140 = arith.addf %134, %139 : vector<16x8x16xf32>
    %141 = vector.extract_strided_slice %0 {offsets = [0, 0, 3], sizes = [16, 8, 1], strides = [1, 1, 1]} : vector<16x8x8xf32> to vector<16x8x1xf32>
    %142 = vector.extract_strided_slice %123 {offsets = [0, 3, 0], sizes = [16, 1, 16], strides = [1, 1, 1]} : vector<16x8x16xf32> to vector<16x1x16xf32>
    %143 = vector.broadcast %141 : vector<16x8x1xf32> to vector<16x8x16xf32>
    %144 = vector.broadcast %142 : vector<16x1x16xf32> to vector<16x8x16xf32>
    %145 = arith.mulf %143, %144 : vector<16x8x16xf32>
    %146 = arith.addf %140, %145 : vector<16x8x16xf32>
    %147 = vector.extract_strided_slice %0 {offsets = [0, 0, 4], sizes = [16, 8, 1], strides = [1, 1, 1]} : vector<16x8x8xf32> to vector<16x8x1xf32>
    %148 = vector.extract_strided_slice %123 {offsets = [0, 4, 0], sizes = [16, 1, 16], strides = [1, 1, 1]} : vector<16x8x16xf32> to vector<16x1x16xf32>
    %149 = vector.broadcast %147 : vector<16x8x1xf32> to vector<16x8x16xf32>
    %150 = vector.broadcast %148 : vector<16x1x16xf32> to vector<16x8x16xf32>
    %151 = arith.mulf %149, %150 : vector<16x8x16xf32>
    %152 = arith.addf %146, %151 : vector<16x8x16xf32>
    %153 = vector.extract_strided_slice %0 {offsets = [0, 0, 5], sizes = [16, 8, 1], strides = [1, 1, 1]} : vector<16x8x8xf32> to vector<16x8x1xf32>
    %154 = vector.extract_strided_slice %123 {offsets = [0, 5, 0], sizes = [16, 1, 16], strides = [1, 1, 1]} : vector<16x8x16xf32> to vector<16x1x16xf32>
    %155 = vector.broadcast %153 : vector<16x8x1xf32> to vector<16x8x16xf32>
    %156 = vector.broadcast %154 : vector<16x1x16xf32> to vector<16x8x16xf32>
    %157 = arith.mulf %155, %156 : vector<16x8x16xf32>
    %158 = arith.addf %152, %157 : vector<16x8x16xf32>
    %159 = vector.extract_strided_slice %0 {offsets = [0, 0, 6], sizes = [16, 8, 1], strides = [1, 1, 1]} : vector<16x8x8xf32> to vector<16x8x1xf32>
    %160 = vector.extract_strided_slice %123 {offsets = [0, 6, 0], sizes = [16, 1, 16], strides = [1, 1, 1]} : vector<16x8x16xf32> to vector<16x1x16xf32>
    %161 = vector.broadcast %159 : vector<16x8x1xf32> to vector<16x8x16xf32>
    %162 = vector.broadcast %160 : vector<16x1x16xf32> to vector<16x8x16xf32>
    %163 = arith.mulf %161, %162 : vector<16x8x16xf32>
    %164 = arith.addf %158, %163 : vector<16x8x16xf32>
    %165 = vector.extract_strided_slice %0 {offsets = [0, 0, 7], sizes = [16, 8, 1], strides = [1, 1, 1]} : vector<16x8x8xf32> to vector<16x8x1xf32>
    %166 = vector.extract_strided_slice %123 {offsets = [0, 7, 0], sizes = [16, 1, 16], strides = [1, 1, 1]} : vector<16x8x16xf32> to vector<16x1x16xf32>
    %167 = vector.broadcast %165 : vector<16x8x1xf32> to vector<16x8x16xf32>
    %168 = vector.broadcast %166 : vector<16x1x16xf32> to vector<16x8x16xf32>
    %169 = arith.mulf %167, %168 : vector<16x8x16xf32>
    %170 = arith.addf %164, %169 : vector<16x8x16xf32>
    %c0_23 = arith.constant 0 : index
    %c0_24 = arith.constant 0 : index
    %c0_25 = arith.constant 0 : index
    %171 = vector.load %arg8[%c0_23, %c0_24, %c0_25] : memref<1x1x16xf32, #tpu.memory_space<vmem>>, vector<1x1x16xf32>
    %172 = vector.broadcast %171 : vector<1x1x16xf32> to vector<16x8x16xf32>
    %173 = arith.addf %170, %172 : vector<16x8x16xf32>
    %174 = vector.shape_cast %173 : vector<16x8x16xf32> to vector<128x16xf32>
    %c0_26 = arith.constant 0 : index
    %c0_27 = arith.constant 0 : index
    %175 = vector.load %arg9[%c0_26, %c0_27] : memref<16x4xf32, #tpu.memory_space<vmem>>, vector<16x4xf32>
    %cst_28 = arith.constant dense<0.000000e+00> : vector<128x4xf32>
    %176 = tpu.matmul %174, %175, %cst_28 {dimension_numbers = #tpu.dot_dimension_numbers<[1], [0], [0], [1], [0, 0, 1, 1], [], []>} : vector<128x16xf32>, vector<16x4xf32>, vector<128x4xf32> -> vector<128x4xf32>
    %cst_29 = arith.constant dense<0xFF800000> : vector<128xf32>
    %177 = vector.multi_reduction <maximumf>, %176, %cst_29 [1] : vector<128x4xf32> to vector<128xf32>
    %178 = vector.shape_cast %177 : vector<128xf32> to vector<128x1xf32>
    %179 = vector.broadcast %178 : vector<128x1xf32> to vector<128x4xf32>
    %180 = arith.subf %176, %179 : vector<128x4xf32>
    %181 = math.exp %180 : vector<128x4xf32>
    %cst_30 = arith.constant dense<0.000000e+00> : vector<128xf32>
    %182 = vector.multi_reduction <add>, %181, %cst_30 [1] : vector<128x4xf32> to vector<128xf32>
    %183 = vector.shape_cast %182 : vector<128xf32> to vector<128x1xf32>
    %184 = tpu.reciprocal %183 {approx = true} : vector<128x1xf32> -> vector<128x1xf32>
    %185 = arith.mulf %183, %184 : vector<128x1xf32>
    %cst_31 = arith.constant 2.000000e+00 : f32
    %186 = vector.broadcast %cst_31 : f32 to vector<128x1xf32>
    %187 = arith.subf %186, %185 : vector<128x1xf32>
    %188 = arith.mulf %184, %187 : vector<128x1xf32>
    %189 = vector.broadcast %188 : vector<128x1xf32> to vector<128x4xf32>
    %190 = arith.mulf %181, %189 : vector<128x4xf32>
    %191 = vector.shape_cast %190 : vector<128x4xf32> to vector<16x8x4xf32>
    %c0_32 = arith.constant 0 : index
    %c0_33 = arith.constant 0 : index
    %c0_34 = arith.constant 0 : index
    %192 = vector.load %arg10[%c0_32, %c0_33, %c0_34] : memref<16x8x4xf32, #tpu.memory_space<vmem>>, vector<16x8x4xf32>
    tpu.vector_store %arg10[%c0_32, %c0_33, %c0_34], %191 {strides = array<i32>} : memref<16x8x4xf32, #tpu.memory_space<vmem>>, vector<16x8x4xf32>,
    return
  }
  func.func @transform_0(%arg0: i32) -> (i32, i32, i32) {
    %c0_i32 = arith.constant 0 : i32
    %c0_i32_0 = arith.constant 0 : i32
    %c0_i32_1 = arith.constant 0 : i32
    return %arg0, %c0_i32, %c0_i32_0 : i32, i32, i32
  }
  func.func @transform_1(%arg0: i32) -> (i32, i32, i32) {
    %c0_i32 = arith.constant 0 : i32
    %c0_i32_0 = arith.constant 0 : i32
    %c0_i32_1 = arith.constant 0 : i32
    return %arg0, %c0_i32, %c0_i32_0 : i32, i32, i32
  }
  func.func @transform_2(%arg0: i32) -> (i32, i32) {
    %c0_i32 = arith.constant 0 : i32
    %c0_i32_0 = arith.constant 0 : i32
    %c0_i32_1 = arith.constant 0 : i32
    return %c0_i32, %c0_i32_0 : i32, i32
  }
  func.func @transform_3(%arg0: i32) -> (i32, i32, i32) {
    %c0_i32 = arith.constant 0 : i32
    %c0_i32_0 = arith.constant 0 : i32
    %c0_i32_1 = arith.constant 0 : i32
    %c0_i32_2 = arith.constant 0 : i32
    return %c0_i32, %c0_i32_0, %c0_i32_1 : i32, i32, i32
  }
  func.func @transform_4(%arg0: i32) -> (i32, i32) {
    %c0_i32 = arith.constant 0 : i32
    %c0_i32_0 = arith.constant 0 : i32
    %c0_i32_1 = arith.constant 0 : i32
    return %c0_i32, %c0_i32_0 : i32, i32
  }
  func.func @transform_5(%arg0: i32) -> (i32, i32, i32) {
    %c0_i32 = arith.constant 0 : i32
    %c0_i32_0 = arith.constant 0 : i32
    %c0_i32_1 = arith.constant 0 : i32
    %c0_i32_2 = arith.constant 0 : i32
    return %c0_i32, %c0_i32_0, %c0_i32_1 : i32, i32, i32
  }
  func.func @transform_6(%arg0: i32) -> (i32, i32) {
    %c0_i32 = arith.constant 0 : i32
    %c0_i32_0 = arith.constant 0 : i32
    %c0_i32_1 = arith.constant 0 : i32
    return %c0_i32, %c0_i32_0 : i32, i32
  }
  func.func @transform_7(%arg0: i32) -> (i32, i32, i32) {
    %c0_i32 = arith.constant 0 : i32
    %c0_i32_0 = arith.constant 0 : i32
    %c0_i32_1 = arith.constant 0 : i32
    %c0_i32_2 = arith.constant 0 : i32
    return %c0_i32, %c0_i32_0, %c0_i32_1 : i32, i32, i32
  }
  func.func @transform_8(%arg0: i32) -> (i32, i32) {
    %c0_i32 = arith.constant 0 : i32
    %c0_i32_0 = arith.constant 0 : i32
    %c0_i32_1 = arith.constant 0 : i32
    return %c0_i32, %c0_i32_0 : i32, i32
  }
  func.func @transform_9(%arg0: i32) -> (i32, i32, i32) {
    %c0_i32 = arith.constant 0 : i32
    %c0_i32_0 = arith.constant 0 : i32
    %c0_i32_1 = arith.constant 0 : i32
    return %arg0, %c0_i32, %c0_i32_0 : i32, i32, i32
  }
}

</mosaic_0001>

<llo_original>
// kernel: tpu_custom_call.1
$region0: #{tpu_custom_call.1}
  #allocation0 [shape = 'u32[]', space=smem, size = 0x4, offset = 0x4, fixed_abs, tag = 'smem constant byte address 0x4 - core index']
  #allocation1 [shape = 'u32[144,128]{1,0:T(1,128)}', space=vmem, size = 0x12000, scoped, tag = 'internal scratch']
  %s0 = inlined_call_operand.vmem [shape: f32[64,8,8], index: 0, kind: input, shape index: {}]
  %s1 = inlined_call_operand.vmem [shape: f32[64,8,32], index: 1, kind: input, shape index: {}]
  %s2 = inlined_call_operand.vmem [shape: f32[32,32], index: 2, kind: input, shape index: {}]
  %s3 = inlined_call_operand.vmem [shape: f32[1,1,32], index: 3, kind: input, shape index: {}]
  %s4 = inlined_call_operand.vmem [shape: f32[32,32], index: 4, kind: input, shape index: {}]
  %s5 = inlined_call_operand.vmem [shape: f32[1,1,32], index: 5, kind: input, shape index: {}]
  %s6 = inlined_call_operand.vmem [shape: f32[32,16], index: 6, kind: input, shape index: {}]
  %s7 = inlined_call_operand.vmem [shape: f32[1,1,16], index: 7, kind: input, shape index: {}]
  %s8 = inlined_call_operand.vmem [shape: f32[16,4], index: 8, kind: input, shape index: {}]
  %s9 = inlined_call_operand.vmem [shape: f32[64,8,4], index: 9, kind: output, shape index: {}]
  %s10 = sld [smem:[#allocation0]]
  $region69: #{tpu_custom_call.1} parent=0
    _
  %s12 = ssub.s32 1, %s10
  %s13 = scalar_select 0, %s12, %s10
  loop: start=0, step=1, limit=6
  $region2: #{tpu_custom_call.1} parent=0 // loop_pre_header
    _
  $region3: #{tpu_custom_call.1} parent=0 // loop_header
    %s15 = sphi 0, %s19
    %p16 = scmp.ge.s32.totalorder %s15, 6
    %s25 = sphi 0, %s27
    %s28 = sphi 0, %s25
    %s29 = sphi 0, %s28
    %s45 = sphi 0, %s29
    %s51 = sphi 0, %s53
    %s54 = sphi 0, %s51
    %s55 = sphi 0, %s54
    %s71 = sphi 0, %s55
    %s75 = sphi 0, %s75
    %s77 = sphi 0, %s75
    %s78 = sphi 0, %s77
    %s92 = sphi 0, %s78
    %s96 = sphi 0, %s96
    %s98 = sphi 0, %s96
    %s99 = sphi 0, %s98
    %s113 = sphi 0, %s99
    %s117 = sphi 0, %s117
    %s119 = sphi 0, %s117
    %s120 = sphi 0, %s119
    %s134 = sphi 0, %s120
    %s138 = sphi 0, %s138
    %s140 = sphi 0, %s138
    %s141 = sphi 0, %s140
    %s155 = sphi 0, %s141
    %s159 = sphi 0, %s159
    %s161 = sphi 0, %s159
    %s162 = sphi 0, %s161
    %s176 = sphi 0, %s162
    %s180 = sphi 0, %s180
    %s182 = sphi 0, %s180
    %s183 = sphi 0, %s182
    %s197 = sphi 0, %s183
    %s201 = sphi 0, %s201
    %s203 = sphi 0, %s201
    %s204 = sphi 0, %s203
    %s218 = sphi 0, %s204
    %s224 = sphi 0, %s226
    %s227 = sphi 0, %s224
    %s228 = sphi 0, %s227
    %s244 = sphi 0, %s228
  $region4: #{tpu_custom_call.1} parent=0 // loop_header_branch
    %18 = sbr.rel (%p16) target = $region8
  $region5: #{tpu_custom_call.1} parent=0 // loop_body
    %s20 = ssub.s32 %s15, 1
    %s21 = ssub.s32 %s15, 2
    %s22 = sadd.s32 %s15, 1
    %s23 = ssub.s32 %s15, %s22
    %p24 = scmp.eq.s32.totalorder %s23, 0
    %s26 = sadd.s32 %s25, 1
    %s27 = scalar_select %p24, %s25, %s26
    %p30 = pneg %p24
    %p31 = scmp.eq.s32.totalorder %s15, 3
    %p32 = por %p30, %p31
    %p33 = scmp.ne.s32.totalorder %s25, %s28
    %p34 = scmp.eq.s32.totalorder %s15, 0
    %p35 = por %p33, %p34
    %p36 = scmp.ne.s32.totalorder %s25, %s28
    %p37 = scmp.eq.s32.totalorder %s20, 3
    %p38 = por %p36, %p37
    %p39 = scmp.ne.s32.totalorder %s28, %s29
    %p40 = scmp.eq.s32.totalorder %s20, 0
    %p41 = por %p39, %p40
    %p42 = scmp.ne.s32.totalorder %s28, %s29
    %p43 = scmp.eq.s32.totalorder %s21, 3
    %p44 = por %p42, %p43
    %p46 = scmp.ne.s32.totalorder %s29, %s45
    %p47 = scmp.eq.s32.totalorder %s21, 0
    %p48 = por %p46, %p47
    %s49 = ssub.s32 %s15, %s22
    %p50 = scmp.eq.s32.totalorder %s49, 0
    %s52 = sadd.s32 %s51, 1
    %s53 = scalar_select %p50, %s51, %s52
    %p56 = pneg %p50
    %p57 = scmp.eq.s32.totalorder %s15, 3
    %p58 = por %p56, %p57
    %p59 = scmp.ne.s32.totalorder %s51, %s54
    %p60 = scmp.eq.s32.totalorder %s15, 0
    %p61 = por %p59, %p60
    %p62 = scmp.ne.s32.totalorder %s51, %s54
    %p63 = scmp.eq.s32.totalorder %s20, 3
    %p64 = por %p62, %p63
    %p65 = scmp.ne.s32.totalorder %s54, %s55
    %p66 = scmp.eq.s32.totalorder %s20, 0
    %p67 = por %p65, %p66
    %p68 = scmp.ne.s32.totalorder %s54, %s55
    %p69 = scmp.eq.s32.totalorder %s21, 3
    %p70 = por %p68, %p69
    %p72 = scmp.ne.s32.totalorder %s55, %s71
    %p73 = scmp.eq.s32.totalorder %s21, 0
    %p74 = por %p72, %p73
    %s76 = sadd.s32 %s75, 1
    %p79 = scmp.eq.s32.totalorder %s15, 3
    %p80 = scmp.ne.s32.totalorder %s75, %s77
    %p81 = scmp.eq.s32.totalorder %s15, 0
    %p82 = por %p80, %p81
    %p83 = scmp.ne.s32.totalorder %s75, %s77
    %p84 = scmp.eq.s32.totalorder %s20, 3
    %p85 = por %p83, %p84
    %p86 = scmp.ne.s32.totalorder %s77, %s78
    %p87 = scmp.eq.s32.totalorder %s20, 0
    %p88 = por %p86, %p87
    %p89 = scmp.ne.s32.totalorder %s77, %s78
    %p90 = scmp.eq.s32.totalorder %s21, 3
    %p91 = por %p89, %p90
    %p93 = scmp.ne.s32.totalorder %s78, %s92
    %p94 = scmp.eq.s32.totalorder %s21, 0
    %p95 = por %p93, %p94
    %s97 = sadd.s32 %s96, 1
    %p100 = scmp.eq.s32.totalorder %s15, 3
    %p101 = scmp.ne.s32.totalorder %s96, %s98
    %p102 = scmp.eq.s32.totalorder %s15, 0
    %p103 = por %p101, %p102
    %p104 = scmp.ne.s32.totalorder %s96, %s98
    %p105 = scmp.eq.s32.totalorder %s20, 3
    %p106 = por %p104, %p105
    %p107 = scmp.ne.s32.totalorder %s98, %s99
    %p108 = scmp.eq.s32.totalorder %s20, 0
    %p109 = por %p107, %p108
    %p110 = scmp.ne.s32.totalorder %s98, %s99
    %p111 = scmp.eq.s32.totalorder %s21, 3
    %p112 = por %p110, %p111
    %p114 = scmp.ne.s32.totalorder %s99, %s113
    %p115 = scmp.eq.s32.totalorder %s21, 0
    %p116 = por %p114, %p115
    %s118 = sadd.s32 %s117, 1
    %p121 = scmp.eq.s32.totalorder %s15, 3
    %p122 = scmp.ne.s32.totalorder %s117, %s119
    %p123 = scmp.eq.s32.totalorder %s15, 0
    %p124 = por %p122, %p123
    %p125 = scmp.ne.s32.totalorder %s117, %s119
    %p126 = scmp.eq.s32.totalorder %s20, 3
    %p127 = por %p125, %p126
    %p128 = scmp.ne.s32.totalorder %s119, %s120
    %p129 = scmp.eq.s32.totalorder %s20, 0
    %p130 = por %p128, %p129
    %p131 = scmp.ne.s32.totalorder %s119, %s120
    %p132 = scmp.eq.s32.totalorder %s21, 3
    %p133 = por %p131, %p132
    %p135 = scmp.ne.s32.totalorder %s120, %s134
    %p136 = scmp.eq.s32.totalorder %s21, 0
    %p137 = por %p135, %p136
    %s139 = sadd.s32 %s138, 1
    %p142 = scmp.eq.s32.totalorder %s15, 3
    %p143 = scmp.ne.s32.totalorder %s138, %s140
    %p144 = scmp.eq.s32.totalorder %s15, 0
    %p145 = por %p143, %p144
    %p146 = scmp.ne.s32.totalorder %s138, %s140
    %p147 = scmp.eq.s32.totalorder %s20, 3
    %p148 = por %p146, %p147
    %p149 = scmp.ne.s32.totalorder %s140, %s141
    %p150 = scmp.eq.s32.totalorder %s20, 0
    %p151 = por %p149, %p150
    %p152 = scmp.ne.s32.totalorder %s140, %s141
    %p153 = scmp.eq.s32.totalorder %s21, 3
    %p154 = por %p152, %p153
    %p156 = scmp.ne.s32.totalorder %s141, %s155
    %p157 = scmp.eq.s32.totalorder %s21, 0
    %p158 = por %p156, %p157
    %s160 = sadd.s32 %s159, 1
    %p163 = scmp.eq.s32.totalorder %s15, 3
    %p164 = scmp.ne.s32.totalorder %s159, %s161
    %p165 = scmp.eq.s32.totalorder %s15, 0
    %p166 = por %p164, %p165
    %p167 = scmp.ne.s32.totalorder %s159, %s161
    %p168 = scmp.eq.s32.totalorder %s20, 3
    %p169 = por %p167, %p168
    %p170 = scmp.ne.s32.totalorder %s161, %s162
    %p171 = scmp.eq.s32.totalorder %s20, 0
    %p172 = por %p170, %p171
    %p173 = scmp.ne.s32.totalorder %s161, %s162
    %p174 = scmp.eq.s32.totalorder %s21, 3
    %p175 = por %p173, %p174
    %p177 = scmp.ne.s32.totalorder %s162, %s176
    %p178 = scmp.eq.s32.totalorder %s21, 0
    %p179 = por %p177, %p178
    %s181 = sadd.s32 %s180, 1
    %p184 = scmp.eq.s32.totalorder %s15, 3
    %p185 = scmp.ne.s32.totalorder %s180, %s182
    %p186 = scmp.eq.s32.totalorder %s15, 0
    %p187 = por %p185, %p186
    %p188 = scmp.ne.s32.totalorder %s180, %s182
    %p189 = scmp.eq.s32.totalorder %s20, 3
    %p190 = por %p188, %p189
    %p191 = scmp.ne.s32.totalorder %s182, %s183
    %p192 = scmp.eq.s32.totalorder %s20, 0
    %p193 = por %p191, %p192
    %p194 = scmp.ne.s32.totalorder %s182, %s183
    %p195 = scmp.eq.s32.totalorder %s21, 3
    %p196 = por %p194, %p195
    %p198 = scmp.ne.s32.totalorder %s183, %s197
    %p199 = scmp.eq.s32.totalorder %s21, 0
    %p200 = por %p198, %p199
    %s202 = sadd.s32 %s201, 1
    %p205 = scmp.eq.s32.totalorder %s15, 3
    %p206 = scmp.ne.s32.totalorder %s201, %s203
    %p207 = scmp.eq.s32.totalorder %s15, 0
    %p208 = por %p206, %p207
    %p209 = scmp.ne.s32.totalorder %s201, %s203
    %p210 = scmp.eq.s32.totalorder %s20, 3
    %p211 = por %p209, %p210
    %p212 = scmp.ne.s32.totalorder %s203, %s204
    %p213 = scmp.eq.s32.totalorder %s20, 0
    %p214 = por %p212, %p213
    %p215 = scmp.ne.s32.totalorder %s203, %s204
    %p216 = scmp.eq.s32.totalorder %s21, 3
    %p217 = por %p215, %p216
    %p219 = scmp.ne.s32.totalorder %s204, %s218
    %p220 = scmp.eq.s32.totalorder %s21, 0
    %p221 = por %p219, %p220
    %s222 = ssub.s32 %s15, %s22
    %p223 = scmp.eq.s32.totalorder %s222, 0
    %s225 = sadd.s32 %s224, 1
    %s226 = scalar_select %p223, %s224, %s225
    %p229 = pneg %p223
    %p230 = scmp.eq.s32.totalorder %s15, 3
    %p231 = por %p229, %p230
    %p232 = scmp.ne.s32.totalorder %s224, %s227
    %p233 = scmp.eq.s32.totalorder %s15, 0
    %p234 = por %p232, %p233
    %p235 = scmp.ne.s32.totalorder %s224, %s227
    %p236 = scmp.eq.s32.totalorder %s20, 3
    %p237 = por %p235, %p236
    %p238 = scmp.ne.s32.totalorder %s227, %s228
    %p239 = scmp.eq.s32.totalorder %s20, 0
    %p240 = por %p238, %p239
    %p241 = scmp.ne.s32.totalorder %s227, %s228
    %p242 = scmp.eq.s32.totalorder %s21, 3
    %p243 = por %p241, %p242
    %p245 = scmp.ne.s32.totalorder %s228, %s244
    %p246 = scmp.eq.s32.totalorder %s21, 0
    %p247 = por %p245, %p246
    %p248 = scmp.le.s32.totalorder 1, %s15
    %p249 = scmp.lt.s32.totalorder %s15, 5
    %p250 = pnand %p248, %p249
    %p251 = pneg %p250
    // Predicated region
    $region9: #{tpu_custom_call.1} parent=5 // pred_check
      _
    $region10: #{tpu_custom_call.1} parent=5 // pred_check_branch
      %253 = sbr.rel (%p250) target = $region12
    $region11: #{tpu_custom_call.1} parent=5 // pred_region
      %s254 = ssub.s32 %s15, 1
      // Predicated region
      $region13: #{tpu_custom_call.1} parent=11 // pred_check
        %p255 = pneg %p88
      $region14: #{tpu_custom_call.1} parent=11 // pred_check_branch
        %257 = sbr.rel (%p255) target = $region16
      $region15: #{tpu_custom_call.1} parent=11 // pred_region
        _
      $region16: #{tpu_custom_call.1} parent=11 // pred_fallthru
        _
      // Predicated region
      $region17: #{tpu_custom_call.1} parent=11 // pred_check
        %p258 = pneg %p109
      $region18: #{tpu_custom_call.1} parent=11 // pred_check_branch
        %260 = sbr.rel (%p258) target = $region20
      $region19: #{tpu_custom_call.1} parent=11 // pred_region
        _
      $region20: #{tpu_custom_call.1} parent=11 // pred_fallthru
        _
      // Predicated region
      $region21: #{tpu_custom_call.1} parent=11 // pred_check
        %p261 = pneg %p130
      $region22: #{tpu_custom_call.1} parent=11 // pred_check_branch
        %263 = sbr.rel (%p261) target = $region24
      $region23: #{tpu_custom_call.1} parent=11 // pred_region
        _
      $region24: #{tpu_custom_call.1} parent=11 // pred_fallthru
        _
      // Predicated region
      $region25: #{tpu_custom_call.1} parent=11 // pred_check
        %p264 = pneg %p151
      $region26: #{tpu_custom_call.1} parent=11 // pred_check_branch
        %266 = sbr.rel (%p264) target = $region28
      $region27: #{tpu_custom_call.1} parent=11 // pred_region
        _
      $region28: #{tpu_custom_call.1} parent=11 // pred_fallthru
        _
      // Predicated region
      $region29: #{tpu_custom_call.1} parent=11 // pred_check
        %p267 = pneg %p172
      $region30: #{tpu_custom_call.1} parent=11 // pred_check_branch
        %269 = sbr.rel (%p267) target = $region32
      $region31: #{tpu_custom_call.1} parent=11 // pred_region
        _
      $region32: #{tpu_custom_call.1} parent=11 // pred_fallthru
        _
      // Predicated region
      $region33: #{tpu_custom_call.1} parent=11 // pred_check
        %p270 = pneg %p193
      $region34: #{tpu_custom_call.1} parent=11 // pred_check_branch
        %272 = sbr.rel (%p270) target = $region36
      $region35: #{tpu_custom_call.1} parent=11 // pred_region
        _
      $region36: #{tpu_custom_call.1} parent=11 // pred_fallthru
        _
      // Predicated region
      $region37: #{tpu_custom_call.1} parent=11 // pred_check
        %p273 = pneg %p214
      $region38: #{tpu_custom_call.1} parent=11 // pred_check_branch
        %275 = sbr.rel (%p273) target = $region40
      $region39: #{tpu_custom_call.1} parent=11 // pred_region
        _
      $region40: #{tpu_custom_call.1} parent=11 // pred_fallthru
        _
    $region12: #{tpu_custom_call.1} parent=5 // pred_fallthru
      _
    %p276 = scmp.lt.s32.totalorder %s15, 4
    // Predicated region
    $region41: #{tpu_custom_call.1} parent=5 // pred_check
      %p277 = pneg %p276
    $region42: #{tpu_custom_call.1} parent=5 // pred_check_branch
      %279 = sbr.rel (%p277) target = $region44
    $region43: #{tpu_custom_call.1} parent=5 // pred_region
      // Predicated region
      $region45: #{tpu_custom_call.1} parent=43 // pred_check
        %p280 = pneg %p35
      $region46: #{tpu_custom_call.1} parent=43 // pred_check_branch
        %282 = sbr.rel (%p280) target = $region48
      $region47: #{tpu_custom_call.1} parent=43 // pred_region
        %s283 = smul.u32 16, %s15
        %p284 = scmp.lt.s32.totalorder %s283, 63
        %s285 = scalar_select %p284, %s283, 63
        %s286 = smul.addr %s285, 8
        %s287 = scalar_lea.vmem %s0, %s286
        %s288 = smul.u32 16, %s15
      $region48: #{tpu_custom_call.1} parent=43 // pred_fallthru
        _
      // Predicated region
      $region49: #{tpu_custom_call.1} parent=43 // pred_check
        %p289 = pneg %p61
      $region50: #{tpu_custom_call.1} parent=43 // pred_check_branch
        %291 = sbr.rel (%p289) target = $region52
      $region51: #{tpu_custom_call.1} parent=43 // pred_region
        %s292 = smul.u32 16, %s15
        %p293 = scmp.lt.s32.totalorder %s292, 63
        %s294 = scalar_select %p293, %s292, 63
        %s295 = smul.addr %s294, 8
        %s296 = scalar_lea.vmem %s1, %s295
        %s297 = smul.u32 16, %s15
      $region52: #{tpu_custom_call.1} parent=43 // pred_fallthru
        _
    $region44: #{tpu_custom_call.1} parent=5 // pred_fallthru
      _
    %p298 = scmp.le.s32.totalorder 1, %s15
    %p299 = scmp.lt.s32.totalorder %s15, 5
    %p300 = pnand %p298, %p299
    %p301 = pneg %p300
    // Predicated region
    $region53: #{tpu_custom_call.1} parent=5 // pred_check
      _
    $region54: #{tpu_custom_call.1} parent=5 // pred_check_branch
      %303 = sbr.rel (%p300) target = $region56
    $region55: #{tpu_custom_call.1} parent=5 // pred_region
      %s304 = ssub.s32 %s15, 1
      %s305 = smul.u32 16, %s20
      %p306 = scmp.lt.s32.totalorder %s305, 63
      %s307 = scalar_select %p306, %s305, 63
      %s308 = smul.addr %s307, 8
      %s309 = scalar_lea.vmem %s0, %s308
      %p310 = pneg %p41
      %p311 = pneg %p38
      %s312 = smul.u32 16, %s20
      %p313 = scmp.lt.s32.totalorder %s312, 63
      %s314 = scalar_select %p313, %s312, 63
      %s315 = smul.addr %s314, 8
      %s316 = scalar_lea.vmem %s1, %s315
      %p317 = pneg %p67
      %p318 = pneg %p64
      %p319 = pneg %p88
      %p320 = pneg %p85
      %p321 = pneg %p109
      %p322 = pneg %p106
      %p323 = pneg %p130
      %p324 = pneg %p127
      %p325 = pneg %p151
      %p326 = pneg %p148
      %p327 = pneg %p172
      %p328 = pneg %p169
      %p329 = pneg %p193
      %p330 = pneg %p190
      %p331 = pneg %p214
      %p332 = pneg %p211
      %p333 = pneg %p240
      %p334 = pneg %p237
      %s335 = smul.u32 16, %s20
      %p336 = scmp.lt.s32.totalorder %s335, 63
      %s337 = scalar_select %p336, %s335, 63
      %s338 = smul.addr %s337, 8
      %s339 = scalar_lea.vmem %s9, %s338
      %s340 = smul.u32 16, %s20
      %p341 = scmp.lt.s32.totalorder %s340, 63
      %s342 = scalar_select %p341, %s340, 63
      %s343 = smul.addr %s342, 8
      %s344 = scalar_lea.vmem %s0, %s343
      %s345 = smul.u32 16, %s20
      %s346 = smul.u32 16, %s20
      %p347 = scmp.lt.s32.totalorder %s346, 63
      %s348 = scalar_select %p347, %s346, 63
      %s349 = smul.addr %s348, 8
      %s350 = scalar_lea.vmem %s1, %s349
      %s351 = smul.u32 16, %s20
      %s352 = smul.u32 16, %s20
      %p353 = scmp.lt.s32.totalorder %s352, 63
      %s354 = scalar_select %p353, %s352, 63
      %s355 = smul.addr %s354, 8
      %s356 = scalar_lea.vmem %s9, %s355
      %s357 = smul.u32 16, %s20
      %v358 = vld [vmem:[%s344] sm:$0xff]
      %v359 = vld [vmem:[%s344 + $0x8] sm:$0xff]
      %v360 = vld [vmem:[%s344 + $0x10] sm:$0xff]
      %v361 = vld [vmem:[%s344 + $0x18] sm:$0xff]
      %v362 = vld [vmem:[%s344 + $0x20] sm:$0xff]
      %v363 = vld [vmem:[%s344 + $0x28] sm:$0xff]
      %v364 = vld [vmem:[%s344 + $0x30] sm:$0xff]
      %v365 = vld [vmem:[%s344 + $0x38] sm:$0xff]
      %v366 = vld [vmem:[%s344 + $0x40] sm:$0xff]
      %v367 = vld [vmem:[%s344 + $0x48] sm:$0xff]
      %v368 = vld [vmem:[%s344 + $0x50] sm:$0xff]
      %v369 = vld [vmem:[%s344 + $0x58] sm:$0xff]
      %v370 = vld [vmem:[%s344 + $0x60] sm:$0xff]
      %v371 = vld [vmem:[%s344 + $0x68] sm:$0xff]
      %v372 = vld [vmem:[%s344 + $0x70] sm:$0xff]
      %v373 = vld [vmem:[%s344 + $0x78] sm:$0xff]
      %v374 = vld [vmem:[%s350] sm:$0xff]
      %v375 = vld [vmem:[%s350 + $0x8] sm:$0xff]
      %v376 = vld [vmem:[%s350 + $0x10] sm:$0xff]
      %v377 = vld [vmem:[%s350 + $0x18] sm:$0xff]
      %v378 = vld [vmem:[%s350 + $0x20] sm:$0xff]
      %v379 = vld [vmem:[%s350 + $0x28] sm:$0xff]
      %v380 = vld [vmem:[%s350 + $0x30] sm:$0xff]
      %v381 = vld [vmem:[%s350 + $0x38] sm:$0xff]
      %v382 = vld [vmem:[%s350 + $0x40] sm:$0xff]
      %v383 = vld [vmem:[%s350 + $0x48] sm:$0xff]
      %v384 = vld [vmem:[%s350 + $0x50] sm:$0xff]
      %v385 = vld [vmem:[%s350 + $0x58] sm:$0xff]
      %v386 = vld [vmem:[%s350 + $0x60] sm:$0xff]
      %v387 = vld [vmem:[%s350 + $0x68] sm:$0xff]
      %v388 = vld [vmem:[%s350 + $0x70] sm:$0xff]
      %v389 = vld [vmem:[%s350 + $0x78] sm:$0xff]
      %v390 = vld [vmem:[%s2] sm:$0xff]
      %v391 = vld [vmem:[%s2 + $0x8] sm:$0xff]
      %v392 = vld [vmem:[%s2 + $0x10] sm:$0xff]
      %v393 = vld [vmem:[%s2 + $0x18] sm:$0xff]
      %vm394 = vcmask 261120
      %v396 = vsel %vm394, %v374, 0
      %v399 = vsel %vm394, %v375, 0
      %v402 = vsel %vm394, %v376, 0
      %v405 = vsel %vm394, %v377, 0
      %v408 = vsel %vm394, %v378, 0
      %v411 = vsel %vm394, %v379, 0
      %v414 = vsel %vm394, %v380, 0
      %v417 = vsel %vm394, %v381, 0
      %v420 = vsel %vm394, %v382, 0
      %v423 = vsel %vm394, %v383, 0
      %v426 = vsel %vm394, %v384, 0
      %v429 = vsel %vm394, %v385, 0
      %v432 = vsel %vm394, %v386, 0
      %v435 = vsel %vm394, %v387, 0
      %v438 = vsel %vm394, %v388, 0
      %v441 = vsel %vm394, %v389, 0
      %443 = vmatprep.subr.mxu0 0.0
      %444 = vmatpush1.msra.mxu0 %v390
      %445 = vmatprep.subr.mxu0 0.0
      %446 = vmatpush1.msra.mxu0 %v391
      %447 = vmatprep.subr.mxu0 0.0
      %448 = vmatpush1.msra.mxu0 %v392
      %449 = vmatprep.subr.mxu0 0.0
      %450 = vmatpush1.msra.mxu0 %v393
      %451 = vmatprep.subr.mxu0 0.0
      %452 = vmatpush1.msra.mxu0 0.0
      %453 = vmatprep.subr.mxu0 0.0
      %454 = vmatpush1.msra.mxu0 0.0
      %455 = vmatprep.subr.mxu0 0.0
      %456 = vmatpush1.msra.mxu0 0.0
      %457 = vmatprep.subr.mxu0 0.0
      %458 = vmatpush1.msra.mxu0 0.0
      %459 = vmatprep.subr.mxu0 0.0
      %460 = vmatpush1.msra.mxu0 0.0
      %461 = vmatprep.subr.mxu0 0.0
      %462 = vmatpush1.msra.mxu0 0.0
      %463 = vmatprep.subr.mxu0 0.0
      %464 = vmatpush1.msra.mxu0 0.0
      %465 = vmatprep.subr.mxu0 0.0
      %466 = vmatpush1.msra.mxu0 0.0
      %467 = vmatprep.subr.mxu0 0.0
      %468 = vmatpush1.msra.mxu0 0.0
      %469 = vmatprep.subr.mxu0 0.0
      %470 = vmatpush1.msra.mxu0 0.0
      %471 = vmatprep.subr.mxu0 0.0
      %472 = vmatpush1.msra.mxu0 0.0
      %473 = vmatprep.subr.mxu0 0.0
      %474 = vmatpush1.msra.mxu0 0.0
      %475 = vmatprep.subr.mxu0 0.0
      %476 = vmatpush1.msra.mxu0 0.0
      %477 = vmatprep.subr.mxu0 0.0
      %478 = vmatpush1.msra.mxu0 0.0
      %479 = vmatprep.subr.mxu0 0.0
      %480 = vmatpush1.msra.mxu0 0.0
      %481 = vmatprep.subr.mxu0 0.0
      %482 = vmatpush1.msra.mxu0 0.0
      %483 = vmatprep.subr.mxu0 0.0
      %484 = vmatpush1.msra.mxu0 0.0
      %485 = vmatprep.subr.mxu0 0.0
      %486 = vmatpush1.msra.mxu0 0.0
      %487 = vmatprep.subr.mxu0 0.0
      %488 = vmatpush1.msra.mxu0 0.0
      %489 = vmatprep.subr.mxu0 0.0
      %490 = vmatpush1.msra.mxu0 0.0
      %491 = vmatprep.subr.mxu0 0.0
      %492 = vmatpush1.msra.mxu0 0.0
      %493 = vmatprep.subr.mxu0 0.0
      %494 = vmatpush1.msra.mxu0 0.0
      %495 = vmatprep.subr.mxu0 0.0
      %496 = vmatpush1.msra.mxu0 0.0
      %497 = vmatprep.subr.mxu0 0.0
      %498 = vmatpush1.msra.mxu0 0.0
      %499 = vmatprep.subr.mxu0 0.0
      %500 = vmatpush1.msra.mxu0 0.0
      %501 = vmatprep.subr.mxu0 0.0
      %502 = vmatpush1.msra.mxu0 0.0
      %503 = vmatprep.subr.mxu0 0.0
      %504 = vmatpush1.msra.mxu0 0.0
      %505 = vmatprep.subr.mxu0 0.0
      %506 = vmatpush1.msra.mxu0 0.0
      %507 = vmatprep.mubr.f32.mxu0 0.0
      %508 = vmatmul.mubr.f32.gmra.mrb[0].mxu0 %v396
      %v509 = vpop.f32.mrb[0].mxu0
      %v510 = vadd.f32 0.0, %v509
      %v511 = vpop.f32.mrb[0].mxu0
      %512 = vmatprep.mubr.f32.mxu0 0.0
      %513 = vmatmul.mubr.f32.gmra.mrb[0].mxu0 %v399
      %v514 = vpop.f32.mrb[0].mxu0
      %v515 = vadd.f32 0.0, %v514
      %v516 = vpop.f32.mrb[0].mxu0
      %517 = vmatprep.mubr.f32.mxu0 0.0
      %518 = vmatmul.mubr.f32.gmra.mrb[0].mxu0 %v402
      %v519 = vpop.f32.mrb[0].mxu0
      %v520 = vadd.f32 0.0, %v519
      %v521 = vpop.f32.mrb[0].mxu0
      %522 = vmatprep.mubr.f32.mxu0 0.0
      %523 = vmatmul.mubr.f32.gmra.mrb[0].mxu0 %v405
      %v524 = vpop.f32.mrb[0].mxu0
      %v525 = vadd.f32 0.0, %v524
      %v526 = vpop.f32.mrb[0].mxu0
      %527 = vmatprep.mubr.f32.mxu0 0.0
      %528 = vmatmul.mubr.f32.gmra.mrb[0].mxu0 %v408
      %v529 = vpop.f32.mrb[0].mxu0
      %v530 = vadd.f32 0.0, %v529
      %v531 = vpop.f32.mrb[0].mxu0
      %532 = vmatprep.mubr.f32.mxu0 0.0
      %533 = vmatmul.mubr.f32.gmra.mrb[0].mxu0 %v411
      %v534 = vpop.f32.mrb[0].mxu0
      %v535 = vadd.f32 0.0, %v534
      %v536 = vpop.f32.mrb[0].mxu0
      %537 = vmatprep.mubr.f32.mxu0 0.0
      %538 = vmatmul.mubr.f32.gmra.mrb[0].mxu0 %v414
      %v539 = vpop.f32.mrb[0].mxu0
      %v540 = vadd.f32 0.0, %v539
      %v541 = vpop.f32.mrb[0].mxu0
      %542 = vmatprep.mubr.f32.mxu0 0.0
      %543 = vmatmul.mubr.f32.gmra.mrb[0].mxu0 %v417
      %v544 = vpop.f32.mrb[0].mxu0
      %v545 = vadd.f32 0.0, %v544
      %v546 = vpop.f32.mrb[0].mxu0
      %547 = vmatprep.mubr.f32.mxu0 0.0
      %548 = vmatmul.mubr.f32.gmra.mrb[0].mxu0 %v420
      %v549 = vpop.f32.mrb[0].mxu0
      %v550 = vadd.f32 0.0, %v549
      %v551 = vpop.f32.mrb[0].mxu0
      %552 = vmatprep.mubr.f32.mxu0 0.0
      %553 = vmatmul.mubr.f32.gmra.mrb[0].mxu0 %v423
      %v554 = vpop.f32.mrb[0].mxu0
      %v555 = vadd.f32 0.0, %v554
      %v556 = vpop.f32.mrb[0].mxu0
      %557 = vmatprep.mubr.f32.mxu0 0.0
      %558 = vmatmul.mubr.f32.gmra.mrb[0].mxu0 %v426
      %v559 = vpop.f32.mrb[0].mxu0
      %v560 = vadd.f32 0.0, %v559
      %v561 = vpop.f32.mrb[0].mxu0
      %562 = vmatprep.mubr.f32.mxu0 0.0
      %563 = vmatmul.mubr.f32.gmra.mrb[0].mxu0 %v429
      %v564 = vpop.f32.mrb[0].mxu0
      %v565 = vadd.f32 0.0, %v564
      %v566 = vpop.f32.mrb[0].mxu0
      %567 = vmatprep.mubr.f32.mxu0 0.0
      %568 = vmatmul.mubr.f32.gmra.mrb[0].mxu0 %v432
      %v569 = vpop.f32.mrb[0].mxu0
      %v570 = vadd.f32 0.0, %v569
      %v571 = vpop.f32.mrb[0].mxu0
      %572 = vmatprep.mubr.f32.mxu0 0.0
      %573 = vmatmul.mubr.f32.gmra.mrb[0].mxu0 %v435
      %v574 = vpop.f32.mrb[0].mxu0
      %v575 = vadd.f32 0.0, %v574
      %v576 = vpop.f32.mrb[0].mxu0
      %577 = vmatprep.mubr.f32.mxu0 0.0
      %578 = vmatmul.mubr.f32.gmra.mrb[0].mxu0 %v438
      %v579 = vpop.f32.mrb[0].mxu0
      %v580 = vadd.f32 0.0, %v579
      %v581 = vpop.f32.mrb[0].mxu0
      %582 = vmatprep.mubr.f32.mxu0 0.0
      %583 = vmatmul.mubr.f32.gmra.mrb[0].mxu0 %v441
      %v584 = vpop.f32.mrb[0].mxu0
      %v585 = vadd.f32 0.0, %v584
      %v586 = vpop.f32.mrb[0].mxu0
      %587 = vdwg.mxu0
      %589 = vset.pattern.permute.xlu0 0
      %590 = vperm.xlu0 %589, %v358
      %v591 = vpop.permute.xlu0 %590
      %594 = vset.pattern.permute.xlu0 0
      %595 = vperm.xlu0 %594, %v359
      %v596 = vpop.permute.xlu0 %595
      %599 = vset.pattern.permute.xlu0 0
      %600 = vperm.xlu0 %599, %v360
      %v601 = vpop.permute.xlu0 %600
      %604 = vset.pattern.permute.xlu0 0
      %605 = vperm.xlu0 %604, %v361
      %v606 = vpop.permute.xlu0 %605
      %609 = vset.pattern.permute.xlu0 0
      %610 = vperm.xlu0 %609, %v362
      %v611 = vpop.permute.xlu0 %610
      %614 = vset.pattern.permute.xlu0 0
      %615 = vperm.xlu0 %614, %v363
      %v616 = vpop.permute.xlu0 %615
      %619 = vset.pattern.permute.xlu0 0
      %620 = vperm.xlu0 %619, %v364
      %v621 = vpop.permute.xlu0 %620
      %624 = vset.pattern.permute.xlu0 0
      %625 = vperm.xlu0 %624, %v365
      %v626 = vpop.permute.xlu0 %625
      %629 = vset.pattern.permute.xlu0 0
      %630 = vperm.xlu0 %629, %v366
      %v631 = vpop.permute.xlu0 %630
      %634 = vset.pattern.permute.xlu0 0
      %635 = vperm.xlu0 %634, %v367
      %v636 = vpop.permute.xlu0 %635
      %639 = vset.pattern.permute.xlu0 0
      %640 = vperm.xlu0 %639, %v368
      %v641 = vpop.permute.xlu0 %640
      %644 = vset.pattern.permute.xlu0 0
      %645 = vperm.xlu0 %644, %v369
      %v646 = vpop.permute.xlu0 %645
      %649 = vset.pattern.permute.xlu0 0
      %650 = vperm.xlu0 %649, %v370
      %v651 = vpop.permute.xlu0 %650
      %654 = vset.pattern.permute.xlu0 0
      %655 = vperm.xlu0 %654, %v371
      %v656 = vpop.permute.xlu0 %655
      %659 = vset.pattern.permute.xlu0 0
      %660 = vperm.xlu0 %659, %v372
      %v661 = vpop.permute.xlu0 %660
      %664 = vset.pattern.permute.xlu0 0
      %665 = vperm.xlu0 %664, %v373
      %v666 = vpop.permute.xlu0 %665
      %v668 = vlaneseq
      %v669 = vshrl.u32 %v668, 7
      %v670 = vsub.s32 0, %v669
      %v671 = vrot.slane %v510, %v670
      %v672 = vlaneseq
      %v673 = vshrl.u32 %v672, 7
      %v674 = vsub.s32 0, %v673
      %v675 = vrot.slane %v515, %v674
      %v676 = vlaneseq
      %v677 = vshrl.u32 %v676, 7
      %v678 = vsub.s32 0, %v677
      %v679 = vrot.slane %v520, %v678
      %v680 = vlaneseq
      %v681 = vshrl.u32 %v680, 7
      %v682 = vsub.s32 0, %v681
      %v683 = vrot.slane %v525, %v682
      %v684 = vlaneseq
      %v685 = vshrl.u32 %v684, 7
      %v686 = vsub.s32 0, %v685
      %v687 = vrot.slane %v530, %v686
      %v688 = vlaneseq
      %v689 = vshrl.u32 %v688, 7
      %v690 = vsub.s32 0, %v689
      %v691 = vrot.slane %v535, %v690
      %v692 = vlaneseq
      %v693 = vshrl.u32 %v692, 7
      %v694 = vsub.s32 0, %v693
      %v695 = vrot.slane %v540, %v694
      %v696 = vlaneseq
      %v697 = vshrl.u32 %v696, 7
      %v698 = vsub.s32 0, %v697
      %v699 = vrot.slane %v545, %v698
      %v700 = vlaneseq
      %v701 = vshrl.u32 %v700, 7
      %v702 = vsub.s32 0, %v701
      %v703 = vrot.slane %v550, %v702
      %v704 = vlaneseq
      %v705 = vshrl.u32 %v704, 7
      %v706 = vsub.s32 0, %v705
      %v707 = vrot.slane %v555, %v706
      %v708 = vlaneseq
      %v709 = vshrl.u32 %v708, 7
      %v710 = vsub.s32 0, %v709
      %v711 = vrot.slane %v560, %v710
      %v712 = vlaneseq
      %v713 = vshrl.u32 %v712, 7
      %v714 = vsub.s32 0, %v713
      %v715 = vrot.slane %v565, %v714
      %v716 = vlaneseq
      %v717 = vshrl.u32 %v716, 7
      %v718 = vsub.s32 0, %v717
      %v719 = vrot.slane %v570, %v718
      %v720 = vlaneseq
      %v721 = vshrl.u32 %v720, 7
      %v722 = vsub.s32 0, %v721
      %v723 = vrot.slane %v575, %v722
      %v724 = vlaneseq
      %v725 = vshrl.u32 %v724, 7
      %v726 = vsub.s32 0, %v725
      %v727 = vrot.slane %v580, %v726
      %v728 = vlaneseq
      %v729 = vshrl.u32 %v728, 7
      %v730 = vsub.s32 0, %v729
      %v731 = vrot.slane %v585, %v730
      %v732 = vmul.f32 %v591, %v671
      %v733 = vmul.f32 %v596, %v675
      %v734 = vmul.f32 %v601, %v679
      %v735 = vmul.f32 %v606, %v683
      %v736 = vmul.f32 %v611, %v687
      %v737 = vmul.f32 %v616, %v691
      %v738 = vmul.f32 %v621, %v695
      %v739 = vmul.f32 %v626, %v699
      %v740 = vmul.f32 %v631, %v703
      %v741 = vmul.f32 %v636, %v707
      %v742 = vmul.f32 %v641, %v711
      %v743 = vmul.f32 %v646, %v715
      %v744 = vmul.f32 %v651, %v719
      %v745 = vmul.f32 %v656, %v723
      %v746 = vmul.f32 %v661, %v727
      %v747 = vmul.f32 %v666, %v731
      %748 = vset.pattern.permute.xlu0 1
      %749 = vperm.xlu0 %748, %v358
      %v750 = vpop.permute.xlu0 %749
      %752 = vset.pattern.permute.xlu0 1
      %753 = vperm.xlu0 %752, %v359
      %v754 = vpop.permute.xlu0 %753
      %756 = vset.pattern.permute.xlu0 1
      %757 = vperm.xlu0 %756, %v360
      %v758 = vpop.permute.xlu0 %757
      %760 = vset.pattern.permute.xlu0 1
      %761 = vperm.xlu0 %760, %v361
      %v762 = vpop.permute.xlu0 %761
      %764 = vset.pattern.permute.xlu0 1
      %765 = vperm.xlu0 %764, %v362
      %v766 = vpop.permute.xlu0 %765
      %768 = vset.pattern.permute.xlu0 1
      %769 = vperm.xlu0 %768, %v363
      %v770 = vpop.permute.xlu0 %769
      %772 = vset.pattern.permute.xlu0 1
      %773 = vperm.xlu0 %772, %v364
      %v774 = vpop.permute.xlu0 %773
      %776 = vset.pattern.permute.xlu0 1
      %777 = vperm.xlu0 %776, %v365
      %v778 = vpop.permute.xlu0 %777
      %780 = vset.pattern.permute.xlu0 1
      %781 = vperm.xlu0 %780, %v366
      %v782 = vpop.permute.xlu0 %781
      %784 = vset.pattern.permute.xlu0 1
      %785 = vperm.xlu0 %784, %v367
      %v786 = vpop.permute.xlu0 %785
      %788 = vset.pattern.permute.xlu0 1
      %789 = vperm.xlu0 %788, %v368
      %v790 = vpop.permute.xlu0 %789
      %792 = vset.pattern.permute.xlu0 1
      %793 = vperm.xlu0 %792, %v369
      %v794 = vpop.permute.xlu0 %793
      %796 = vset.pattern.permute.xlu0 1
      %797 = vperm.xlu0 %796, %v370
      %v798 = vpop.permute.xlu0 %797
      %800 = vset.pattern.permute.xlu0 1
      %801 = vperm.xlu0 %800, %v371
      %v802 = vpop.permute.xlu0 %801
      %804 = vset.pattern.permute.xlu0 1
      %805 = vperm.xlu0 %804, %v372
      %v806 = vpop.permute.xlu0 %805
      %808 = vset.pattern.permute.xlu0 1
      %809 = vperm.xlu0 %808, %v373
      %v810 = vpop.permute.xlu0 %809
      %v812 = vlaneseq
      %v813 = vshrl.u32 %v812, 7
      %v814 = vsub.s32 1, %v813
      %v815 = vrot.slane %v510, %v814
      %v816 = vlaneseq
      %v817 = vshrl.u32 %v816, 7
      %v818 = vsub.s32 1, %v817
      %v819 = vrot.slane %v515, %v818
      %v820 = vlaneseq
      %v821 = vshrl.u32 %v820, 7
      %v822 = vsub.s32 1, %v821
      %v823 = vrot.slane %v520, %v822
      %v824 = vlaneseq
      %v825 = vshrl.u32 %v824, 7
      %v826 = vsub.s32 1, %v825
      %v827 = vrot.slane %v525, %v826
      %v828 = vlaneseq
      %v829 = vshrl.u32 %v828, 7
      %v830 = vsub.s32 1, %v829
      %v831 = vrot.slane %v530, %v830
      %v832 = vlaneseq
      %v833 = vshrl.u32 %v832, 7
      %v834 = vsub.s32 1, %v833
      %v835 = vrot.slane %v535, %v834
      %v836 = vlaneseq
      %v837 = vshrl.u32 %v836, 7
      %v838 = vsub.s32 1, %v837
      %v839 = vrot.slane %v540, %v838
      %v840 = vlaneseq
      %v841 = vshrl.u32 %v840, 7
      %v842 = vsub.s32 1, %v841
      %v843 = vrot.slane %v545, %v842
      %v844 = vlaneseq
      %v845 = vshrl.u32 %v844, 7
      %v846 = vsub.s32 1, %v845
      %v847 = vrot.slane %v550, %v846
      %v848 = vlaneseq
      %v849 = vshrl.u32 %v848, 7
      %v850 = vsub.s32 1, %v849
      %v851 = vrot.slane %v555, %v850
      %v852 = vlaneseq
      %v853 = vshrl.u32 %v852, 7
      %v854 = vsub.s32 1, %v853
      %v855 = vrot.slane %v560, %v854
      %v856 = vlaneseq
      %v857 = vshrl.u32 %v856, 7
      %v858 = vsub.s32 1, %v857
      %v859 = vrot.slane %v565, %v858
      %v860 = vlaneseq
      %v861 = vshrl.u32 %v860, 7
      %v862 = vsub.s32 1, %v861
      %v863 = vrot.slane %v570, %v862
      %v864 = vlaneseq
      %v865 = vshrl.u32 %v864, 7
      %v866 = vsub.s32 1, %v865
      %v867 = vrot.slane %v575, %v866
      %v868 = vlaneseq
      %v869 = vshrl.u32 %v868, 7
      %v870 = vsub.s32 1, %v869
      %v871 = vrot.slane %v580, %v870
      %v872 = vlaneseq
      %v873 = vshrl.u32 %v872, 7
      %v874 = vsub.s32 1, %v873
      %v875 = vrot.slane %v585, %v874
      %v876 = vmul.f32 %v750, %v815
      %v877 = vmul.f32 %v754, %v819
      %v878 = vmul.f32 %v758, %v823
      %v879 = vmul.f32 %v762, %v827
      %v880 = vmul.f32 %v766, %v831
      %v881 = vmul.f32 %v770, %v835
      %v882 = vmul.f32 %v774, %v839
      %v883 = vmul.f32 %v778, %v843
      %v884 = vmul.f32 %v782, %v847
      %v885 = vmul.f32 %v786, %v851
      %v886 = vmul.f32 %v790, %v855
      %v887 = vmul.f32 %v794, %v859
      %v888 = vmul.f32 %v798, %v863
      %v889 = vmul.f32 %v802, %v867
      %v890 = vmul.f32 %v806, %v871
      %v891 = vmul.f32 %v810, %v875
      %v892 = vadd.f32 %v732, %v876
      %v893 = vadd.f32 %v733, %v877
      %v894 = vadd.f32 %v734, %v878
      %v895 = vadd.f32 %v735, %v879
      %v896 = vadd.f32 %v736, %v880
      %v897 = vadd.f32 %v737, %v881
      %v898 = vadd.f32 %v738, %v882
      %v899 = vadd.f32 %v739, %v883
      %v900 = vadd.f32 %v740, %v884
      %v901 = vadd.f32 %v741, %v885
      %v902 = vadd.f32 %v742, %v886
      %v903 = vadd.f32 %v743, %v887
      %v904 = vadd.f32 %v744, %v888
      %v905 = vadd.f32 %v745, %v889
      %v906 = vadd.f32 %v746, %v890
      %v907 = vadd.f32 %v747, %v891
      %908 = vset.pattern.permute.xlu0 2
      %909 = vperm.xlu0 %908, %v358
      %v910 = vpop.permute.xlu0 %909
      %912 = vset.pattern.permute.xlu0 2
      %913 = vperm.xlu0 %912, %v359
      %v914 = vpop.permute.xlu0 %913
      %916 = vset.pattern.permute.xlu0 2
      %917 = vperm.xlu0 %916, %v360
      %v918 = vpop.permute.xlu0 %917
      %920 = vset.pattern.permute.xlu0 2
      %921 = vperm.xlu0 %920, %v361
      %v922 = vpop.permute.xlu0 %921
      %924 = vset.pattern.permute.xlu0 2
      %925 = vperm.xlu0 %924, %v362
      %v926 = vpop.permute.xlu0 %925
      %928 = vset.pattern.permute.xlu0 2
      %929 = vperm.xlu0 %928, %v363
      %v930 = vpop.permute.xlu0 %929
      %932 = vset.pattern.permute.xlu0 2
      %933 = vperm.xlu0 %932, %v364
      %v934 = vpop.permute.xlu0 %933
      %936 = vset.pattern.permute.xlu0 2
      %937 = vperm.xlu0 %936, %v365
      %v938 = vpop.permute.xlu0 %937
      %940 = vset.pattern.permute.xlu0 2
      %941 = vperm.xlu0 %940, %v366
      %v942 = vpop.permute.xlu0 %941
      %944 = vset.pattern.permute.xlu0 2
      %945 = vperm.xlu0 %944, %v367
      %v946 = vpop.permute.xlu0 %945
      %948 = vset.pattern.permute.xlu0 2
      %949 = vperm.xlu0 %948, %v368
      %v950 = vpop.permute.xlu0 %949
      %952 = vset.pattern.permute.xlu0 2
      %953 = vperm.xlu0 %952, %v369
      %v954 = vpop.permute.xlu0 %953
      %956 = vset.pattern.permute.xlu0 2
      %957 = vperm.xlu0 %956, %v370
      %v958 = vpop.permute.xlu0 %957
      %960 = vset.pattern.permute.xlu0 2
      %961 = vperm.xlu0 %960, %v371
      %v962 = vpop.permute.xlu0 %961
      %964 = vset.pattern.permute.xlu0 2
      %965 = vperm.xlu0 %964, %v372
      %v966 = vpop.permute.xlu0 %965
      %968 = vset.pattern.permute.xlu0 2
      %969 = vperm.xlu0 %968, %v373
      %v970 = vpop.permute.xlu0 %969
      %v972 = vlaneseq
      %v973 = vshrl.u32 %v972, 7
      %v974 = vsub.s32 2, %v973
      %v975 = vrot.slane %v510, %v974
      %v976 = vlaneseq
      %v977 = vshrl.u32 %v976, 7
      %v978 = vsub.s32 2, %v977
      %v979 = vrot.slane %v515, %v978
      %v980 = vlaneseq
      %v981 = vshrl.u32 %v980, 7
      %v982 = vsub.s32 2, %v981
      %v983 = vrot.slane %v520, %v982
      %v984 = vlaneseq
      %v985 = vshrl.u32 %v984, 7
      %v986 = vsub.s32 2, %v985
      %v987 = vrot.slane %v525, %v986
      %v988 = vlaneseq
      %v989 = vshrl.u32 %v988, 7
      %v990 = vsub.s32 2, %v989
      %v991 = vrot.slane %v530, %v990
      %v992 = vlaneseq
      %v993 = vshrl.u32 %v992, 7
      %v994 = vsub.s32 2, %v993
      %v995 = vrot.slane %v535, %v994
      %v996 = vlaneseq
      %v997 = vshrl.u32 %v996, 7
      %v998 = vsub.s32 2, %v997
      %v999 = vrot.slane %v540, %v998
      %v1000 = vlaneseq
      %v1001 = vshrl.u32 %v1000, 7
      %v1002 = vsub.s32 2, %v1001
      %v1003 = vrot.slane %v545, %v1002
      %v1004 = vlaneseq
      %v1005 = vshrl.u32 %v1004, 7
      %v1006 = vsub.s32 2, %v1005
      %v1007 = vrot.slane %v550, %v1006
      %v1008 = vlaneseq
      %v1009 = vshrl.u32 %v1008, 7
      %v1010 = vsub.s32 2, %v1009
      %v1011 = vrot.slane %v555, %v1010
      %v1012 = vlaneseq
      %v1013 = vshrl.u32 %v1012, 7
      %v1014 = vsub.s32 2, %v1013
      %v1015 = vrot.slane %v560, %v1014
      %v1016 = vlaneseq
      %v1017 = vshrl.u32 %v1016, 7
      %v1018 = vsub.s32 2, %v1017
      %v1019 = vrot.slane %v565, %v1018
      %v1020 = vlaneseq
      %v1021 = vshrl.u32 %v1020, 7
      %v1022 = vsub.s32 2, %v1021
      %v1023 = vrot.slane %v570, %v1022
      %v1024 = vlaneseq
      %v1025 = vshrl.u32 %v1024, 7
      %v1026 = vsub.s32 2, %v1025
      %v1027 = vrot.slane %v575, %v1026
      %v1028 = vlaneseq
      %v1029 = vshrl.u32 %v1028, 7
      %v1030 = vsub.s32 2, %v1029
      %v1031 = vrot.slane %v580, %v1030
      %v1032 = vlaneseq
      %v1033 = vshrl.u32 %v1032, 7
      %v1034 = vsub.s32 2, %v1033
      %v1035 = vrot.slane %v585, %v1034
      %v1036 = vmul.f32 %v910, %v975
      %v1037 = vmul.f32 %v914, %v979
      %v1038 = vmul.f32 %v918, %v983
      %v1039 = vmul.f32 %v922, %v987
      %v1040 = vmul.f32 %v926, %v991
      %v1041 = vmul.f32 %v930, %v995
      %v1042 = vmul.f32 %v934, %v999
      %v1043 = vmul.f32 %v938, %v1003
      %v1044 = vmul.f32 %v942, %v1007
      %v1045 = vmul.f32 %v946, %v1011
      %v1046 = vmul.f32 %v950, %v1015
      %v1047 = vmul.f32 %v954, %v1019
      %v1048 = vmul.f32 %v958, %v1023
      %v1049 = vmul.f32 %v962, %v1027
      %v1050 = vmul.f32 %v966, %v1031
      %v1051 = vmul.f32 %v970, %v1035
      %v1052 = vadd.f32 %v892, %v1036
      %v1053 = vadd.f32 %v893, %v1037
      %v1054 = vadd.f32 %v894, %v1038
      %v1055 = vadd.f32 %v895, %v1039
      %v1056 = vadd.f32 %v896, %v1040
      %v1057 = vadd.f32 %v897, %v1041
      %v1058 = vadd.f32 %v898, %v1042
      %v1059 = vadd.f32 %v899, %v1043
      %v1060 = vadd.f32 %v900, %v1044
      %v1061 = vadd.f32 %v901, %v1045
      %v1062 = vadd.f32 %v902, %v1046
      %v1063 = vadd.f32 %v903, %v1047
      %v1064 = vadd.f32 %v904, %v1048
      %v1065 = vadd.f32 %v905, %v1049
      %v1066 = vadd.f32 %v906, %v1050
      %v1067 = vadd.f32 %v907, %v1051
      %1068 = vset.pattern.permute.xlu0 3
      %1069 = vperm.xlu0 %1068, %v358
      %v1070 = vpop.permute.xlu0 %1069
      %1072 = vset.pattern.permute.xlu0 3
      %1073 = vperm.xlu0 %1072, %v359
      %v1074 = vpop.permute.xlu0 %1073
      %1076 = vset.pattern.permute.xlu0 3
      %1077 = vperm.xlu0 %1076, %v360
      %v1078 = vpop.permute.xlu0 %1077
      %1080 = vset.pattern.permute.xlu0 3
      %1081 = vperm.xlu0 %1080, %v361
      %v1082 = vpop.permute.xlu0 %1081
      %1084 = vset.pattern.permute.xlu0 3
      %1085 = vperm.xlu0 %1084, %v362
      %v1086 = vpop.permute.xlu0 %1085
      %1088 = vset.pattern.permute.xlu0 3
      %1089 = vperm.xlu0 %1088, %v363
      %v1090 = vpop.permute.xlu0 %1089
      %1092 = vset.pattern.permute.xlu0 3
      %1093 = vperm.xlu0 %1092, %v364
      %v1094 = vpop.permute.xlu0 %1093
      %1096 = vset.pattern.permute.xlu0 3
      %1097 = vperm.xlu0 %1096, %v365
      %v1098 = vpop.permute.xlu0 %1097
      %1100 = vset.pattern.permute.xlu0 3
      %1101 = vperm.xlu0 %1100, %v366
      %v1102 = vpop.permute.xlu0 %1101
      %1104 = vset.pattern.permute.xlu0 3
      %1105 = vperm.xlu0 %1104, %v367
      %v1106 = vpop.permute.xlu0 %1105
      %1108 = vset.pattern.permute.xlu0 3
      %1109 = vperm.xlu0 %1108, %v368
      %v1110 = vpop.permute.xlu0 %1109
      %1112 = vset.pattern.permute.xlu0 3
      %1113 = vperm.xlu0 %1112, %v369
      %v1114 = vpop.permute.xlu0 %1113
      %1116 = vset.pattern.permute.xlu0 3
      %1117 = vperm.xlu0 %1116, %v370
      %v1118 = vpop.permute.xlu0 %1117
      %1120 = vset.pattern.permute.xlu0 3
      %1121 = vperm.xlu0 %1120, %v371
      %v1122 = vpop.permute.xlu0 %1121
      %1124 = vset.pattern.permute.xlu0 3
      %1125 = vperm.xlu0 %1124, %v372
      %v1126 = vpop.permute.xlu0 %1125
      %1128 = vset.pattern.permute.xlu0 3
      %1129 = vperm.xlu0 %1128, %v373
      %v1130 = vpop.permute.xlu0 %1129
      %v1132 = vlaneseq
      %v1133 = vshrl.u32 %v1132, 7
      %v1134 = vsub.s32 3, %v1133
      %v1135 = vrot.slane %v510, %v1134
      %v1136 = vlaneseq
      %v1137 = vshrl.u32 %v1136, 7
      %v1138 = vsub.s32 3, %v1137
      %v1139 = vrot.slane %v515, %v1138
      %v1140 = vlaneseq
      %v1141 = vshrl.u32 %v1140, 7
      %v1142 = vsub.s32 3, %v1141
      %v1143 = vrot.slane %v520, %v1142
      %v1144 = vlaneseq
      %v1145 = vshrl.u32 %v1144, 7
      %v1146 = vsub.s32 3, %v1145
      %v1147 = vrot.slane %v525, %v1146
      %v1148 = vlaneseq
      %v1149 = vshrl.u32 %v1148, 7
      %v1150 = vsub.s32 3, %v1149
      %v1151 = vrot.slane %v530, %v1150
      %v1152 = vlaneseq
      %v1153 = vshrl.u32 %v1152, 7
      %v1154 = vsub.s32 3, %v1153
      %v1155 = vrot.slane %v535, %v1154
      %v1156 = vlaneseq
      %v1157 = vshrl.u32 %v1156, 7
      %v1158 = vsub.s32 3, %v1157
      %v1159 = vrot.slane %v540, %v1158
      %v1160 = vlaneseq
      %v1161 = vshrl.u32 %v1160, 7
      %v1162 = vsub.s32 3, %v1161
      %v1163 = vrot.slane %v545, %v1162
      %v1164 = vlaneseq
      %v1165 = vshrl.u32 %v1164, 7
      %v1166 = vsub.s32 3, %v1165
      %v1167 = vrot.slane %v550, %v1166
      %v1168 = vlaneseq
      %v1169 = vshrl.u32 %v1168, 7
      %v1170 = vsub.s32 3, %v1169
      %v1171 = vrot.slane %v555, %v1170
      %v1172 = vlaneseq
      %v1173 = vshrl.u32 %v1172, 7
      %v1174 = vsub.s32 3, %v1173
      %v1175 = vrot.slane %v560, %v1174
      %v1176 = vlaneseq
      %v1177 = vshrl.u32 %v1176, 7
      %v1178 = vsub.s32 3, %v1177
      %v1179 = vrot.slane %v565, %v1178
      %v1180 = vlaneseq
      %v1181 = vshrl.u32 %v1180, 7
      %v1182 = vsub.s32 3, %v1181
      %v1183 = vrot.slane %v570, %v1182
      %v1184 = vlaneseq
      %v1185 = vshrl.u32 %v1184, 7
      %v1186 = vsub.s32 3, %v1185
      %v1187 = vrot.slane %v575, %v1186
      %v1188 = vlaneseq
      %v1189 = vshrl.u32 %v1188, 7
      %v1190 = vsub.s32 3, %v1189
      %v1191 = vrot.slane %v580, %v1190
      %v1192 = vlaneseq
      %v1193 = vshrl.u32 %v1192, 7
      %v1194 = vsub.s32 3, %v1193
      %v1195 = vrot.slane %v585, %v1194
      %v1196 = vmul.f32 %v1070, %v1135
      %v1197 = vmul.f32 %v1074, %v1139
      %v1198 = vmul.f32 %v1078, %v1143
      %v1199 = vmul.f32 %v1082, %v1147
      %v1200 = vmul.f32 %v1086, %v1151
      %v1201 = vmul.f32 %v1090, %v1155
      %v1202 = vmul.f32 %v1094, %v1159
      %v1203 = vmul.f32 %v1098, %v1163
      %v1204 = vmul.f32 %v1102, %v1167
      %v1205 = vmul.f32 %v1106, %v1171
      %v1206 = vmul.f32 %v1110, %v1175
      %v1207 = vmul.f32 %v1114, %v1179
      %v1208 = vmul.f32 %v1118, %v1183
      %v1209 = vmul.f32 %v1122, %v1187
      %v1210 = vmul.f32 %v1126, %v1191
      %v1211 = vmul.f32 %v1130, %v1195
      %v1212 = vadd.f32 %v1052, %v1196
      %v1213 = vadd.f32 %v1053, %v1197
      %v1214 = vadd.f32 %v1054, %v1198
      %v1215 = vadd.f32 %v1055, %v1199
      %v1216 = vadd.f32 %v1056, %v1200
      %v1217 = vadd.f32 %v1057, %v1201
      %v1218 = vadd.f32 %v1058, %v1202
      %v1219 = vadd.f32 %v1059, %v1203
      %v1220 = vadd.f32 %v1060, %v1204
      %v1221 = vadd.f32 %v1061, %v1205
      %v1222 = vadd.f32 %v1062, %v1206
      %v1223 = vadd.f32 %v1063, %v1207
      %v1224 = vadd.f32 %v1064, %v1208
      %v1225 = vadd.f32 %v1065, %v1209
      %v1226 = vadd.f32 %v1066, %v1210
      %v1227 = vadd.f32 %v1067, %v1211
      %1228 = vset.pattern.permute.xlu0 4
      %1229 = vperm.xlu0 %1228, %v358
      %v1230 = vpop.permute.xlu0 %1229
      %1232 = vset.pattern.permute.xlu0 4
      %1233 = vperm.xlu0 %1232, %v359
      %v1234 = vpop.permute.xlu0 %1233
      %1236 = vset.pattern.permute.xlu0 4
      %1237 = vperm.xlu0 %1236, %v360
      %v1238 = vpop.permute.xlu0 %1237
      %1240 = vset.pattern.permute.xlu0 4
      %1241 = vperm.xlu0 %1240, %v361
      %v1242 = vpop.permute.xlu0 %1241
      %1244 = vset.pattern.permute.xlu0 4
      %1245 = vperm.xlu0 %1244, %v362
      %v1246 = vpop.permute.xlu0 %1245
      %1248 = vset.pattern.permute.xlu0 4
      %1249 = vperm.xlu0 %1248, %v363
      %v1250 = vpop.permute.xlu0 %1249
      %1252 = vset.pattern.permute.xlu0 4
      %1253 = vperm.xlu0 %1252, %v364
      %v1254 = vpop.permute.xlu0 %1253
      %1256 = vset.pattern.permute.xlu0 4
      %1257 = vperm.xlu0 %1256, %v365
      %v1258 = vpop.permute.xlu0 %1257
      %1260 = vset.pattern.permute.xlu0 4
      %1261 = vperm.xlu0 %1260, %v366
      %v1262 = vpop.permute.xlu0 %1261
      %1264 = vset.pattern.permute.xlu0 4
      %1265 = vperm.xlu0 %1264, %v367
      %v1266 = vpop.permute.xlu0 %1265
      %1268 = vset.pattern.permute.xlu0 4
      %1269 = vperm.xlu0 %1268, %v368
      %v1270 = vpop.permute.xlu0 %1269
      %1272 = vset.pattern.permute.xlu0 4
      %1273 = vperm.xlu0 %1272, %v369
      %v1274 = vpop.permute.xlu0 %1273
      %1276 = vset.pattern.permute.xlu0 4
      %1277 = vperm.xlu0 %1276, %v370
      %v1278 = vpop.permute.xlu0 %1277
      %1280 = vset.pattern.permute.xlu0 4
      %1281 = vperm.xlu0 %1280, %v371
      %v1282 = vpop.permute.xlu0 %1281
      %1284 = vset.pattern.permute.xlu0 4
      %1285 = vperm.xlu0 %1284, %v372
      %v1286 = vpop.permute.xlu0 %1285
      %1288 = vset.pattern.permute.xlu0 4
      %1289 = vperm.xlu0 %1288, %v373
      %v1290 = vpop.permute.xlu0 %1289
      %v1292 = vlaneseq
      %v1293 = vshrl.u32 %v1292, 7
      %v1294 = vsub.s32 4, %v1293
      %v1295 = vrot.slane %v510, %v1294
      %v1296 = vlaneseq
      %v1297 = vshrl.u32 %v1296, 7
      %v1298 = vsub.s32 4, %v1297
      %v1299 = vrot.slane %v515, %v1298
      %v1300 = vlaneseq
      %v1301 = vshrl.u32 %v1300, 7
      %v1302 = vsub.s32 4, %v1301
      %v1303 = vrot.slane %v520, %v1302
      %v1304 = vlaneseq
      %v1305 = vshrl.u32 %v1304, 7
      %v1306 = vsub.s32 4, %v1305
      %v1307 = vrot.slane %v525, %v1306
      %v1308 = vlaneseq
      %v1309 = vshrl.u32 %v1308, 7
      %v1310 = vsub.s32 4, %v1309
      %v1311 = vrot.slane %v530, %v1310
      %v1312 = vlaneseq
      %v1313 = vshrl.u32 %v1312, 7
      %v1314 = vsub.s32 4, %v1313
      %v1315 = vrot.slane %v535, %v1314
      %v1316 = vlaneseq
      %v1317 = vshrl.u32 %v1316, 7
      %v1318 = vsub.s32 4, %v1317
      %v1319 = vrot.slane %v540, %v1318
      %v1320 = vlaneseq
      %v1321 = vshrl.u32 %v1320, 7
      %v1322 = vsub.s32 4, %v1321
      %v1323 = vrot.slane %v545, %v1322
      %v1324 = vlaneseq
      %v1325 = vshrl.u32 %v1324, 7
      %v1326 = vsub.s32 4, %v1325
      %v1327 = vrot.slane %v550, %v1326
      %v1328 = vlaneseq
      %v1329 = vshrl.u32 %v1328, 7
      %v1330 = vsub.s32 4, %v1329
      %v1331 = vrot.slane %v555, %v1330
      %v1332 = vlaneseq
      %v1333 = vshrl.u32 %v1332, 7
      %v1334 = vsub.s32 4, %v1333
      %v1335 = vrot.slane %v560, %v1334
      %v1336 = vlaneseq
      %v1337 = vshrl.u32 %v1336, 7
      %v1338 = vsub.s32 4, %v1337
      %v1339 = vrot.slane %v565, %v1338
      %v1340 = vlaneseq
      %v1341 = vshrl.u32 %v1340, 7
      %v1342 = vsub.s32 4, %v1341
      %v1343 = vrot.slane %v570, %v1342
      %v1344 = vlaneseq
      %v1345 = vshrl.u32 %v1344, 7
      %v1346 = vsub.s32 4, %v1345
      %v1347 = vrot.slane %v575, %v1346
      %v1348 = vlaneseq
      %v1349 = vshrl.u32 %v1348, 7
      %v1350 = vsub.s32 4, %v1349
      %v1351 = vrot.slane %v580, %v1350
      %v1352 = vlaneseq
      %v1353 = vshrl.u32 %v1352, 7
      %v1354 = vsub.s32 4, %v1353
      %v1355 = vrot.slane %v585, %v1354
      %v1356 = vmul.f32 %v1230, %v1295
      %v1357 = vmul.f32 %v1234, %v1299
      %v1358 = vmul.f32 %v1238, %v1303
      %v1359 = vmul.f32 %v1242, %v1307
      %v1360 = vmul.f32 %v1246, %v1311
      %v1361 = vmul.f32 %v1250, %v1315
      %v1362 = vmul.f32 %v1254, %v1319
      %v1363 = vmul.f32 %v1258, %v1323
      %v1364 = vmul.f32 %v1262, %v1327
      %v1365 = vmul.f32 %v1266, %v1331
      %v1366 = vmul.f32 %v1270, %v1335
      %v1367 = vmul.f32 %v1274, %v1339
      %v1368 = vmul.f32 %v1278, %v1343
      %v1369 = vmul.f32 %v1282, %v1347
      %v1370 = vmul.f32 %v1286, %v1351
      %v1371 = vmul.f32 %v1290, %v1355
      %v1372 = vadd.f32 %v1212, %v1356
      %v1373 = vadd.f32 %v1213, %v1357
      %v1374 = vadd.f32 %v1214, %v1358
      %v1375 = vadd.f32 %v1215, %v1359
      %v1376 = vadd.f32 %v1216, %v1360
      %v1377 = vadd.f32 %v1217, %v1361
      %v1378 = vadd.f32 %v1218, %v1362
      %v1379 = vadd.f32 %v1219, %v1363
      %v1380 = vadd.f32 %v1220, %v1364
      %v1381 = vadd.f32 %v1221, %v1365
      %v1382 = vadd.f32 %v1222, %v1366
      %v1383 = vadd.f32 %v1223, %v1367
      %v1384 = vadd.f32 %v1224, %v1368
      %v1385 = vadd.f32 %v1225, %v1369
      %v1386 = vadd.f32 %v1226, %v1370
      %v1387 = vadd.f32 %v1227, %v1371
      %1388 = vset.pattern.permute.xlu0 5
      %1389 = vperm.xlu0 %1388, %v358
      %v1390 = vpop.permute.xlu0 %1389
      %1392 = vset.pattern.permute.xlu0 5
      %1393 = vperm.xlu0 %1392, %v359
      %v1394 = vpop.permute.xlu0 %1393
      %1396 = vset.pattern.permute.xlu0 5
      %1397 = vperm.xlu0 %1396, %v360
      %v1398 = vpop.permute.xlu0 %1397
      %1400 = vset.pattern.permute.xlu0 5
      %1401 = vperm.xlu0 %1400, %v361
      %v1402 = vpop.permute.xlu0 %1401
      %1404 = vset.pattern.permute.xlu0 5
      %1405 = vperm.xlu0 %1404, %v362
      %v1406 = vpop.permute.xlu0 %1405
      %1408 = vset.pattern.permute.xlu0 5
      %1409 = vperm.xlu0 %1408, %v363
      %v1410 = vpop.permute.xlu0 %1409
      %1412 = vset.pattern.permute.xlu0 5
      %1413 = vperm.xlu0 %1412, %v364
      %v1414 = vpop.permute.xlu0 %1413
      %1416 = vset.pattern.permute.xlu0 5
      %1417 = vperm.xlu0 %1416, %v365
      %v1418 = vpop.permute.xlu0 %1417
      %1420 = vset.pattern.permute.xlu0 5
      %1421 = vperm.xlu0 %1420, %v366
      %v1422 = vpop.permute.xlu0 %1421
      %1424 = vset.pattern.permute.xlu0 5
      %1425 = vperm.xlu0 %1424, %v367
      %v1426 = vpop.permute.xlu0 %1425
      %1428 = vset.pattern.permute.xlu0 5
      %1429 = vperm.xlu0 %1428, %v368
      %v1430 = vpop.permute.xlu0 %1429
      %1432 = vset.pattern.permute.xlu0 5
      %1433 = vperm.xlu0 %1432, %v369
      %v1434 = vpop.permute.xlu0 %1433
      %1436 = vset.pattern.permute.xlu0 5
      %1437 = vperm.xlu0 %1436, %v370
      %v1438 = vpop.permute.xlu0 %1437
      %1440 = vset.pattern.permute.xlu0 5
      %1441 = vperm.xlu0 %1440, %v371
      %v1442 = vpop.permute.xlu0 %1441
      %1444 = vset.pattern.permute.xlu0 5
      %1445 = vperm.xlu0 %1444, %v372
      %v1446 = vpop.permute.xlu0 %1445
      %1448 = vset.pattern.permute.xlu0 5
      %1449 = vperm.xlu0 %1448, %v373
      %v1450 = vpop.permute.xlu0 %1449
      %v1452 = vlaneseq
      %v1453 = vshrl.u32 %v1452, 7
      %v1454 = vsub.s32 5, %v1453
      %v1455 = vrot.slane %v510, %v1454
      %v1456 = vlaneseq
      %v1457 = vshrl.u32 %v1456, 7
      %v1458 = vsub.s32 5, %v1457
      %v1459 = vrot.slane %v515, %v1458
      %v1460 = vlaneseq
      %v1461 = vshrl.u32 %v1460, 7
      %v1462 = vsub.s32 5, %v1461
      %v1463 = vrot.slane %v520, %v1462
      %v1464 = vlaneseq
      %v1465 = vshrl.u32 %v1464, 7
      %v1466 = vsub.s32 5, %v1465
      %v1467 = vrot.slane %v525, %v1466
      %v1468 = vlaneseq
      %v1469 = vshrl.u32 %v1468, 7
      %v1470 = vsub.s32 5, %v1469
      %v1471 = vrot.slane %v530, %v1470
      %v1472 = vlaneseq
      %v1473 = vshrl.u32 %v1472, 7
      %v1474 = vsub.s32 5, %v1473
      %v1475 = vrot.slane %v535, %v1474
      %v1476 = vlaneseq
      %v1477 = vshrl.u32 %v1476, 7
      %v1478 = vsub.s32 5, %v1477
      %v1479 = vrot.slane %v540, %v1478
      %v1480 = vlaneseq
      %v1481 = vshrl.u32 %v1480, 7
      %v1482 = vsub.s32 5, %v1481
      %v1483 = vrot.slane %v545, %v1482
      %v1484 = vlaneseq
      %v1485 = vshrl.u32 %v1484, 7
      %v1486 = vsub.s32 5, %v1485
      %v1487 = vrot.slane %v550, %v1486
      %v1488 = vlaneseq
      %v1489 = vshrl.u32 %v1488, 7
      %v1490 = vsub.s32 5, %v1489
      %v1491 = vrot.slane %v555, %v1490
      %v1492 = vlaneseq
      %v1493 = vshrl.u32 %v1492, 7
      %v1494 = vsub.s32 5, %v1493
      %v1495 = vrot.slane %v560, %v1494
      %v1496 = vlaneseq
      %v1497 = vshrl.u32 %v1496, 7
      %v1498 = vsub.s32 5, %v1497
      %v1499 = vrot.slane %v565, %v1498
      %v1500 = vlaneseq
      %v1501 = vshrl.u32 %v1500, 7
      %v1502 = vsub.s32 5, %v1501
      %v1503 = vrot.slane %v570, %v1502
      %v1504 = vlaneseq
      %v1505 = vshrl.u32 %v1504, 7
      %v1506 = vsub.s32 5, %v1505
      %v1507 = vrot.slane %v575, %v1506
      %v1508 = vlaneseq
      %v1509 = vshrl.u32 %v1508, 7
      %v1510 = vsub.s32 5, %v1509
      %v1511 = vrot.slane %v580, %v1510
      %v1512 = vlaneseq
      %v1513 = vshrl.u32 %v1512, 7
      %v1514 = vsub.s32 5, %v1513
      %v1515 = vrot.slane %v585, %v1514
      %v1516 = vmul.f32 %v1390, %v1455
      %v1517 = vmul.f32 %v1394, %v1459
      %v1518 = vmul.f32 %v1398, %v1463
      %v1519 = vmul.f32 %v1402, %v1467
      %v1520 = vmul.f32 %v1406, %v1471
      %v1521 = vmul.f32 %v1410, %v1475
      %v1522 = vmul.f32 %v1414, %v1479
      %v1523 = vmul.f32 %v1418, %v1483
      %v1524 = vmul.f32 %v1422, %v1487
      %v1525 = vmul.f32 %v1426, %v1491
      %v1526 = vmul.f32 %v1430, %v1495
      %v1527 = vmul.f32 %v1434, %v1499
      %v1528 = vmul.f32 %v1438, %v1503
      %v1529 = vmul.f32 %v1442, %v1507
      %v1530 = vmul.f32 %v1446, %v1511
      %v1531 = vmul.f32 %v1450, %v1515
      %v1532 = vadd.f32 %v1372, %v1516
      %v1533 = vadd.f32 %v1373, %v1517
      %v1534 = vadd.f32 %v1374, %v1518
      %v1535 = vadd.f32 %v1375, %v1519
      %v1536 = vadd.f32 %v1376, %v1520
      %v1537 = vadd.f32 %v1377, %v1521
      %v1538 = vadd.f32 %v1378, %v1522
      %v1539 = vadd.f32 %v1379, %v1523
      %v1540 = vadd.f32 %v1380, %v1524
      %v1541 = vadd.f32 %v1381, %v1525
      %v1542 = vadd.f32 %v1382, %v1526
      %v1543 = vadd.f32 %v1383, %v1527
      %v1544 = vadd.f32 %v1384, %v1528
      %v1545 = vadd.f32 %v1385, %v1529
      %v1546 = vadd.f32 %v1386, %v1530
      %v1547 = vadd.f32 %v1387, %v1531
      %1548 = vset.pattern.permute.xlu0 6
      %1549 = vperm.xlu0 %1548, %v358
      %v1550 = vpop.permute.xlu0 %1549
      %1552 = vset.pattern.permute.xlu0 6
      %1553 = vperm.xlu0 %1552, %v359
      %v1554 = vpop.permute.xlu0 %1553
      %1556 = vset.pattern.permute.xlu0 6
      %1557 = vperm.xlu0 %1556, %v360
      %v1558 = vpop.permute.xlu0 %1557
      %1560 = vset.pattern.permute.xlu0 6
      %1561 = vperm.xlu0 %1560, %v361
      %v1562 = vpop.permute.xlu0 %1561
      %1564 = vset.pattern.permute.xlu0 6
      %1565 = vperm.xlu0 %1564, %v362
      %v1566 = vpop.permute.xlu0 %1565
      %1568 = vset.pattern.permute.xlu0 6
      %1569 = vperm.xlu0 %1568, %v363
      %v1570 = vpop.permute.xlu0 %1569
      %1572 = vset.pattern.permute.xlu0 6
      %1573 = vperm.xlu0 %1572, %v364
      %v1574 = vpop.permute.xlu0 %1573
      %1576 = vset.pattern.permute.xlu0 6
      %1577 = vperm.xlu0 %1576, %v365
      %v1578 = vpop.permute.xlu0 %1577
      %1580 = vset.pattern.permute.xlu0 6
      %1581 = vperm.xlu0 %1580, %v366
      %v1582 = vpop.permute.xlu0 %1581
      %1584 = vset.pattern.permute.xlu0 6
      %1585 = vperm.xlu0 %1584, %v367
      %v1586 = vpop.permute.xlu0 %1585
      %1588 = vset.pattern.permute.xlu0 6
      %1589 = vperm.xlu0 %1588, %v368
      %v1590 = vpop.permute.xlu0 %1589
      %1592 = vset.pattern.permute.xlu0 6
      %1593 = vperm.xlu0 %1592, %v369
      %v1594 = vpop.permute.xlu0 %1593
      %1596 = vset.pattern.permute.xlu0 6
      %1597 = vperm.xlu0 %1596, %v370
      %v1598 = vpop.permute.xlu0 %1597
      %1600 = vset.pattern.permute.xlu0 6
      %1601 = vperm.xlu0 %1600, %v371
      %v1602 = vpop.permute.xlu0 %1601
      %1604 = vset.pattern.permute.xlu0 6
      %1605 = vperm.xlu0 %1604, %v372
      %v1606 = vpop.permute.xlu0 %1605
      %1608 = vset.pattern.permute.xlu0 6
      %1609 = vperm.xlu0 %1608, %v373
      %v1610 = vpop.permute.xlu0 %1609
      %v1612 = vlaneseq
      %v1613 = vshrl.u32 %v1612, 7
      %v1614 = vsub.s32 6, %v1613
      %v1615 = vrot.slane %v510, %v1614
      %v1616 = vlaneseq
      %v1617 = vshrl.u32 %v1616, 7
      %v1618 = vsub.s32 6, %v1617
      %v1619 = vrot.slane %v515, %v1618
      %v1620 = vlaneseq
      %v1621 = vshrl.u32 %v1620, 7
      %v1622 = vsub.s32 6, %v1621
      %v1623 = vrot.slane %v520, %v1622
      %v1624 = vlaneseq
      %v1625 = vshrl.u32 %v1624, 7
      %v1626 = vsub.s32 6, %v1625
      %v1627 = vrot.slane %v525, %v1626
      %v1628 = vlaneseq
      %v1629 = vshrl.u32 %v1628, 7
      %v1630 = vsub.s32 6, %v1629
      %v1631 = vrot.slane %v530, %v1630
      %v1632 = vlaneseq
      %v1633 = vshrl.u32 %v1632, 7
      %v1634 = vsub.s32 6, %v1633
      %v1635 = vrot.slane %v535, %v1634
      %v1636 = vlaneseq
      %v1637 = vshrl.u32 %v1636, 7
      %v1638 = vsub.s32 6, %v1637
      %v1639 = vrot.slane %v540, %v1638
      %v1640 = vlaneseq
      %v1641 = vshrl.u32 %v1640, 7
      %v1642 = vsub.s32 6, %v1641
      %v1643 = vrot.slane %v545, %v1642
      %v1644 = vlaneseq
      %v1645 = vshrl.u32 %v1644, 7
      %v1646 = vsub.s32 6, %v1645
      %v1647 = vrot.slane %v550, %v1646
      %v1648 = vlaneseq
      %v1649 = vshrl.u32 %v1648, 7
      %v1650 = vsub.s32 6, %v1649
      %v1651 = vrot.slane %v555, %v1650
      %v1652 = vlaneseq
      %v1653 = vshrl.u32 %v1652, 7
      %v1654 = vsub.s32 6, %v1653
      %v1655 = vrot.slane %v560, %v1654
      %v1656 = vlaneseq
      %v1657 = vshrl.u32 %v1656, 7
      %v1658 = vsub.s32 6, %v1657
      %v1659 = vrot.slane %v565, %v1658
      %v1660 = vlaneseq
      %v1661 = vshrl.u32 %v1660, 7
      %v1662 = vsub.s32 6, %v1661
      %v1663 = vrot.slane %v570, %v1662
      %v1664 = vlaneseq
      %v1665 = vshrl.u32 %v1664, 7
      %v1666 = vsub.s32 6, %v1665
      %v1667 = vrot.slane %v575, %v1666
      %v1668 = vlaneseq
      %v1669 = vshrl.u32 %v1668, 7
      %v1670 = vsub.s32 6, %v1669
      %v1671 = vrot.slane %v580, %v1670
      %v1672 = vlaneseq
      %v1673 = vshrl.u32 %v1672, 7
      %v1674 = vsub.s32 6, %v1673
      %v1675 = vrot.slane %v585, %v1674
      %v1676 = vmul.f32 %v1550, %v1615
      %v1677 = vmul.f32 %v1554, %v1619
      %v1678 = vmul.f32 %v1558, %v1623
      %v1679 = vmul.f32 %v1562, %v1627
      %v1680 = vmul.f32 %v1566, %v1631
      %v1681 = vmul.f32 %v1570, %v1635
      %v1682 = vmul.f32 %v1574, %v1639
      %v1683 = vmul.f32 %v1578, %v1643
      %v1684 = vmul.f32 %v1582, %v1647
      %v1685 = vmul.f32 %v1586, %v1651
      %v1686 = vmul.f32 %v1590, %v1655
      %v1687 = vmul.f32 %v1594, %v1659
      %v1688 = vmul.f32 %v1598, %v1663
      %v1689 = vmul.f32 %v1602, %v1667
      %v1690 = vmul.f32 %v1606, %v1671
      %v1691 = vmul.f32 %v1610, %v1675
      %v1692 = vadd.f32 %v1532, %v1676
      %v1693 = vadd.f32 %v1533, %v1677
      %v1694 = vadd.f32 %v1534, %v1678
      %v1695 = vadd.f32 %v1535, %v1679
      %v1696 = vadd.f32 %v1536, %v1680
      %v1697 = vadd.f32 %v1537, %v1681
      %v1698 = vadd.f32 %v1538, %v1682
      %v1699 = vadd.f32 %v1539, %v1683
      %v1700 = vadd.f32 %v1540, %v1684
      %v1701 = vadd.f32 %v1541, %v1685
      %v1702 = vadd.f32 %v1542, %v1686
      %v1703 = vadd.f32 %v1543, %v1687
      %v1704 = vadd.f32 %v1544, %v1688
      %v1705 = vadd.f32 %v1545, %v1689
      %v1706 = vadd.f32 %v1546, %v1690
      %v1707 = vadd.f32 %v1547, %v1691
      %1708 = vset.pattern.permute.xlu0 7
      %1709 = vperm.xlu0 %1708, %v358
      %v1710 = vpop.permute.xlu0 %1709
      %1712 = vset.pattern.permute.xlu0 7
      %1713 = vperm.xlu0 %1712, %v359
      %v1714 = vpop.permute.xlu0 %1713
      %1716 = vset.pattern.permute.xlu0 7
      %1717 = vperm.xlu0 %1716, %v360
      %v1718 = vpop.permute.xlu0 %1717
      %1720 = vset.pattern.permute.xlu0 7
      %1721 = vperm.xlu0 %1720, %v361
      %v1722 = vpop.permute.xlu0 %1721
      %1724 = vset.pattern.permute.xlu0 7
      %1725 = vperm.xlu0 %1724, %v362
      %v1726 = vpop.permute.xlu0 %1725
      %1728 = vset.pattern.permute.xlu0 7
      %1729 = vperm.xlu0 %1728, %v363
      %v1730 = vpop.permute.xlu0 %1729
      %1732 = vset.pattern.permute.xlu0 7
      %1733 = vperm.xlu0 %1732, %v364
      %v1734 = vpop.permute.xlu0 %1733
      %1736 = vset.pattern.permute.xlu0 7
      %1737 = vperm.xlu0 %1736, %v365
      %v1738 = vpop.permute.xlu0 %1737
      %1740 = vset.pattern.permute.xlu0 7
      %1741 = vperm.xlu0 %1740, %v366
      %v1742 = vpop.permute.xlu0 %1741
      %1744 = vset.pattern.permute.xlu0 7
      %1745 = vperm.xlu0 %1744, %v367
      %v1746 = vpop.permute.xlu0 %1745
      %1748 = vset.pattern.permute.xlu0 7
      %1749 = vperm.xlu0 %1748, %v368
      %v1750 = vpop.permute.xlu0 %1749
      %1752 = vset.pattern.permute.xlu0 7
      %1753 = vperm.xlu0 %1752, %v369
      %v1754 = vpop.permute.xlu0 %1753
      %1756 = vset.pattern.permute.xlu0 7
      %1757 = vperm.xlu0 %1756, %v370
      %v1758 = vpop.permute.xlu0 %1757
      %1760 = vset.pattern.permute.xlu0 7
      %1761 = vperm.xlu0 %1760, %v371
      %v1762 = vpop.permute.xlu0 %1761
      %1764 = vset.pattern.permute.xlu0 7
      %1765 = vperm.xlu0 %1764, %v372
      %v1766 = vpop.permute.xlu0 %1765
      %1768 = vset.pattern.permute.xlu0 7
      %1769 = vperm.xlu0 %1768, %v373
      %v1770 = vpop.permute.xlu0 %1769
      %v1772 = vlaneseq
      %v1773 = vshrl.u32 %v1772, 7
      %v1774 = vsub.s32 7, %v1773
      %v1775 = vrot.slane %v510, %v1774
      %v1776 = vlaneseq
      %v1777 = vshrl.u32 %v1776, 7
      %v1778 = vsub.s32 7, %v1777
      %v1779 = vrot.slane %v515, %v1778
      %v1780 = vlaneseq
      %v1781 = vshrl.u32 %v1780, 7
      %v1782 = vsub.s32 7, %v1781
      %v1783 = vrot.slane %v520, %v1782
      %v1784 = vlaneseq
      %v1785 = vshrl.u32 %v1784, 7
      %v1786 = vsub.s32 7, %v1785
      %v1787 = vrot.slane %v525, %v1786
      %v1788 = vlaneseq
      %v1789 = vshrl.u32 %v1788, 7
      %v1790 = vsub.s32 7, %v1789
      %v1791 = vrot.slane %v530, %v1790
      %v1792 = vlaneseq
      %v1793 = vshrl.u32 %v1792, 7
      %v1794 = vsub.s32 7, %v1793
      %v1795 = vrot.slane %v535, %v1794
      %v1796 = vlaneseq
      %v1797 = vshrl.u32 %v1796, 7
      %v1798 = vsub.s32 7, %v1797
      %v1799 = vrot.slane %v540, %v1798
      %v1800 = vlaneseq
      %v1801 = vshrl.u32 %v1800, 7
      %v1802 = vsub.s32 7, %v1801
      %v1803 = vrot.slane %v545, %v1802
      %v1804 = vlaneseq
      %v1805 = vshrl.u32 %v1804, 7
      %v1806 = vsub.s32 7, %v1805
      %v1807 = vrot.slane %v550, %v1806
      %v1808 = vlaneseq
      %v1809 = vshrl.u32 %v1808, 7
      %v1810 = vsub.s32 7, %v1809
      %v1811 = vrot.slane %v555, %v1810
      %v1812 = vlaneseq
      %v1813 = vshrl.u32 %v1812, 7
      %v1814 = vsub.s32 7, %v1813
      %v1815 = vrot.slane %v560, %v1814
      %v1816 = vlaneseq
      %v1817 = vshrl.u32 %v1816, 7
      %v1818 = vsub.s32 7, %v1817
      %v1819 = vrot.slane %v565, %v1818
      %v1820 = vlaneseq
      %v1821 = vshrl.u32 %v1820, 7
      %v1822 = vsub.s32 7, %v1821
      %v1823 = vrot.slane %v570, %v1822
      %v1824 = vlaneseq
      %v1825 = vshrl.u32 %v1824, 7
      %v1826 = vsub.s32 7, %v1825
      %v1827 = vrot.slane %v575, %v1826
      %v1828 = vlaneseq
      %v1829 = vshrl.u32 %v1828, 7
      %v1830 = vsub.s32 7, %v1829
      %v1831 = vrot.slane %v580, %v1830
      %v1832 = vlaneseq
      %v1833 = vshrl.u32 %v1832, 7
      %v1834 = vsub.s32 7, %v1833
      %v1835 = vrot.slane %v585, %v1834
      %v1836 = vmul.f32 %v1710, %v1775
      %v1837 = vmul.f32 %v1714, %v1779
      %v1838 = vmul.f32 %v1718, %v1783
      %v1839 = vmul.f32 %v1722, %v1787
      %v1840 = vmul.f32 %v1726, %v1791
      %v1841 = vmul.f32 %v1730, %v1795
      %v1842 = vmul.f32 %v1734, %v1799
      %v1843 = vmul.f32 %v1738, %v1803
      %v1844 = vmul.f32 %v1742, %v1807
      %v1845 = vmul.f32 %v1746, %v1811
      %v1846 = vmul.f32 %v1750, %v1815
      %v1847 = vmul.f32 %v1754, %v1819
      %v1848 = vmul.f32 %v1758, %v1823
      %v1849 = vmul.f32 %v1762, %v1827
      %v1850 = vmul.f32 %v1766, %v1831
      %v1851 = vmul.f32 %v1770, %v1835
      %v1852 = vadd.f32 %v1692, %v1836
      %v1853 = vadd.f32 %v1693, %v1837
      %v1854 = vadd.f32 %v1694, %v1838
      %v1855 = vadd.f32 %v1695, %v1839
      %v1856 = vadd.f32 %v1696, %v1840
      %v1857 = vadd.f32 %v1697, %v1841
      %v1858 = vadd.f32 %v1698, %v1842
      %v1859 = vadd.f32 %v1699, %v1843
      %v1860 = vadd.f32 %v1700, %v1844
      %v1861 = vadd.f32 %v1701, %v1845
      %v1862 = vadd.f32 %v1702, %v1846
      %v1863 = vadd.f32 %v1703, %v1847
      %v1864 = vadd.f32 %v1704, %v1848
      %v1865 = vadd.f32 %v1705, %v1849
      %v1866 = vadd.f32 %v1706, %v1850
      %v1867 = vadd.f32 %v1707, %v1851
      %v1868 = vld [vmem:[%s3] sm:$0x1]
      %v1870 = vlaneseq
      %v1871 = vshrl.u32 %v1870, 7
      %v1872 = vsub.s32 0, %v1871
      %v1873 = vrot.slane %v1868, %v1872
      %v1875 = vadd.f32 %v1852, %v1873
      %v1876 = vadd.f32 %v1853, %v1873
      %v1877 = vadd.f32 %v1854, %v1873
      %v1878 = vadd.f32 %v1855, %v1873
      %v1879 = vadd.f32 %v1856, %v1873
      %v1880 = vadd.f32 %v1857, %v1873
      %v1881 = vadd.f32 %v1858, %v1873
      %v1882 = vadd.f32 %v1859, %v1873
      %v1883 = vadd.f32 %v1860, %v1873
      %v1884 = vadd.f32 %v1861, %v1873
      %v1885 = vadd.f32 %v1862, %v1873
      %v1886 = vadd.f32 %v1863, %v1873
      %v1887 = vadd.f32 %v1864, %v1873
      %v1888 = vadd.f32 %v1865, %v1873
      %v1889 = vadd.f32 %v1866, %v1873
      %v1890 = vadd.f32 %v1867, %v1873
      %vm1891 = vcmp.gt.f32.partialorder %v1875, 0.0
      %vm1892 = vcmp.gt.f32.partialorder %v1876, 0.0
      %vm1893 = vcmp.gt.f32.partialorder %v1877, 0.0
      %vm1894 = vcmp.gt.f32.partialorder %v1878, 0.0
      %vm1895 = vcmp.gt.f32.partialorder %v1879, 0.0
      %vm1896 = vcmp.gt.f32.partialorder %v1880, 0.0
      %vm1897 = vcmp.gt.f32.partialorder %v1881, 0.0
      %vm1898 = vcmp.gt.f32.partialorder %v1882, 0.0
      %vm1899 = vcmp.gt.f32.partialorder %v1883, 0.0
      %vm1900 = vcmp.gt.f32.partialorder %v1884, 0.0
      %vm1901 = vcmp.gt.f32.partialorder %v1885, 0.0
      %vm1902 = vcmp.gt.f32.partialorder %v1886, 0.0
      %vm1903 = vcmp.gt.f32.partialorder %v1887, 0.0
      %vm1904 = vcmp.gt.f32.partialorder %v1888, 0.0
      %vm1905 = vcmp.gt.f32.partialorder %v1889, 0.0
      %vm1906 = vcmp.gt.f32.partialorder %v1890, 0.0
      %v1907 = vmul.f32 %v1875, 0.1
      %v1908 = vmul.f32 %v1876, 0.1
      %v1909 = vmul.f32 %v1877, 0.1
      %v1910 = vmul.f32 %v1878, 0.1
      %v1911 = vmul.f32 %v1879, 0.1
      %v1912 = vmul.f32 %v1880, 0.1
      %v1913 = vmul.f32 %v1881, 0.1
      %v1914 = vmul.f32 %v1882, 0.1
      %v1915 = vmul.f32 %v1883, 0.1
      %v1916 = vmul.f32 %v1884, 0.1
      %v1917 = vmul.f32 %v1885, 0.1
      %v1918 = vmul.f32 %v1886, 0.1
      %v1919 = vmul.f32 %v1887, 0.1
      %v1920 = vmul.f32 %v1888, 0.1
      %v1921 = vmul.f32 %v1889, 0.1
      %v1922 = vmul.f32 %v1890, 0.1
      %v1923 = vsel %vm1891, %v1875, %v1907
      %v1924 = vsel %vm1892, %v1876, %v1908
      %v1925 = vsel %vm1893, %v1877, %v1909
      %v1926 = vsel %vm1894, %v1878, %v1910
      %v1927 = vsel %vm1895, %v1879, %v1911
      %v1928 = vsel %vm1896, %v1880, %v1912
      %v1929 = vsel %vm1897, %v1881, %v1913
      %v1930 = vsel %vm1898, %v1882, %v1914
      %v1931 = vsel %vm1899, %v1883, %v1915
      %v1932 = vsel %vm1900, %v1884, %v1916
      %v1933 = vsel %vm1901, %v1885, %v1917
      %v1934 = vsel %vm1902, %v1886, %v1918
      %v1935 = vsel %vm1903, %v1887, %v1919
      %v1936 = vsel %vm1904, %v1888, %v1920
      %v1937 = vsel %vm1905, %v1889, %v1921
      %v1938 = vsel %vm1906, %v1890, %v1922
      %v1939 = vld [vmem:[%s4] sm:$0xff]
      %v1940 = vld [vmem:[%s4 + $0x8] sm:$0xff]
      %v1941 = vld [vmem:[%s4 + $0x10] sm:$0xff]
      %v1942 = vld [vmem:[%s4 + $0x18] sm:$0xff]
      %v1944 = vsel %vm394, %v1923, 0
      %v1947 = vsel %vm394, %v1924, 0
      %v1950 = vsel %vm394, %v1925, 0
      %v1953 = vsel %vm394, %v1926, 0
      %v1956 = vsel %vm394, %v1927, 0
      %v1959 = vsel %vm394, %v1928, 0
      %v1962 = vsel %vm394, %v1929, 0
      %v1965 = vsel %vm394, %v1930, 0
      %v1968 = vsel %vm394, %v1931, 0
      %v1971 = vsel %vm394, %v1932, 0
      %v1974 = vsel %vm394, %v1933, 0
      %v1977 = vsel %vm394, %v1934, 0
      %v1980 = vsel %vm394, %v1935, 0
      %v1983 = vsel %vm394, %v1936, 0
      %v1986 = vsel %vm394, %v1937, 0
      %v1989 = vsel %vm394, %v1938, 0
      %1991 = vmatprep.subr.mxu0 0.0
      %1992 = vmatpush1.msra.mxu0 %v1939
      %1993 = vmatprep.subr.mxu0 0.0
      %1994 = vmatpush1.msra.mxu0 %v1940
      %1995 = vmatprep.subr.mxu0 0.0
      %1996 = vmatpush1.msra.mxu0 %v1941
      %1997 = vmatprep.subr.mxu0 0.0
      %1998 = vmatpush1.msra.mxu0 %v1942
      %1999 = vmatprep.subr.mxu0 0.0
      %2000 = vmatpush1.msra.mxu0 0.0
      %2001 = vmatprep.subr.mxu0 0.0
      %2002 = vmatpush1.msra.mxu0 0.0
      %2003 = vmatprep.subr.mxu0 0.0
      %2004 = vmatpush1.msra.mxu0 0.0
      %2005 = vmatprep.subr.mxu0 0.0
      %2006 = vmatpush1.msra.mxu0 0.0
      %2007 = vmatprep.subr.mxu0 0.0
      %2008 = vmatpush1.msra.mxu0 0.0
      %2009 = vmatprep.subr.mxu0 0.0
      %2010 = vmatpush1.msra.mxu0 0.0
      %2011 = vmatprep.subr.mxu0 0.0
      %2012 = vmatpush1.msra.mxu0 0.0
      %2013 = vmatprep.subr.mxu0 0.0
      %2014 = vmatpush1.msra.mxu0 0.0
      %2015 = vmatprep.subr.mxu0 0.0
      %2016 = vmatpush1.msra.mxu0 0.0
      %2017 = vmatprep.subr.mxu0 0.0
      %2018 = vmatpush1.msra.mxu0 0.0
      %2019 = vmatprep.subr.mxu0 0.0
      %2020 = vmatpush1.msra.mxu0 0.0
      %2021 = vmatprep.subr.mxu0 0.0
      %2022 = vmatpush1.msra.mxu0 0.0
      %2023 = vmatprep.subr.mxu0 0.0
      %2024 = vmatpush1.msra.mxu0 0.0
      %2025 = vmatprep.subr.mxu0 0.0
      %2026 = vmatpush1.msra.mxu0 0.0
      %2027 = vmatprep.subr.mxu0 0.0
      %2028 = vmatpush1.msra.mxu0 0.0
      %2029 = vmatprep.subr.mxu0 0.0
      %2030 = vmatpush1.msra.mxu0 0.0
      %2031 = vmatprep.subr.mxu0 0.0
      %2032 = vmatpush1.msra.mxu0 0.0
      %2033 = vmatprep.subr.mxu0 0.0
      %2034 = vmatpush1.msra.mxu0 0.0
      %2035 = vmatprep.subr.mxu0 0.0
      %2036 = vmatpush1.msra.mxu0 0.0
      %2037 = vmatprep.subr.mxu0 0.0
      %2038 = vmatpush1.msra.mxu0 0.0
      %2039 = vmatprep.subr.mxu0 0.0
      %2040 = vmatpush1.msra.mxu0 0.0
      %2041 = vmatprep.subr.mxu0 0.0
      %2042 = vmatpush1.msra.mxu0 0.0
      %2043 = vmatprep.subr.mxu0 0.0
      %2044 = vmatpush1.msra.mxu0 0.0
      %2045 = vmatprep.subr.mxu0 0.0
      %2046 = vmatpush1.msra.mxu0 0.0
      %2047 = vmatprep.subr.mxu0 0.0
      %2048 = vmatpush1.msra.mxu0 0.0
      %2049 = vmatprep.subr.mxu0 0.0
      %2050 = vmatpush1.msra.mxu0 0.0
      %2051 = vmatprep.subr.mxu0 0.0
      %2052 = vmatpush1.msra.mxu0 0.0
      %2053 = vmatprep.subr.mxu0 0.0
      %2054 = vmatpush1.msra.mxu0 0.0
      %2055 = vmatprep.mubr.f32.mxu0 0.0
      %2056 = vmatmul.mubr.f32.gmra.mrb[0].mxu0 %v1944
      %v2057 = vpop.f32.mrb[0].mxu0
      %v2058 = vadd.f32 0.0, %v2057
      %v2059 = vpop.f32.mrb[0].mxu0
      %2060 = vmatprep.mubr.f32.mxu0 0.0
      %2061 = vmatmul.mubr.f32.gmra.mrb[0].mxu0 %v1947
      %v2062 = vpop.f32.mrb[0].mxu0
      %v2063 = vadd.f32 0.0, %v2062
      %v2064 = vpop.f32.mrb[0].mxu0
      %2065 = vmatprep.mubr.f32.mxu0 0.0
      %2066 = vmatmul.mubr.f32.gmra.mrb[0].mxu0 %v1950
      %v2067 = vpop.f32.mrb[0].mxu0
      %v2068 = vadd.f32 0.0, %v2067
      %v2069 = vpop.f32.mrb[0].mxu0
      %2070 = vmatprep.mubr.f32.mxu0 0.0
      %2071 = vmatmul.mubr.f32.gmra.mrb[0].mxu0 %v1953
      %v2072 = vpop.f32.mrb[0].mxu0
      %v2073 = vadd.f32 0.0, %v2072
      %v2074 = vpop.f32.mrb[0].mxu0
      %2075 = vmatprep.mubr.f32.mxu0 0.0
      %2076 = vmatmul.mubr.f32.gmra.mrb[0].mxu0 %v1956
      %v2077 = vpop.f32.mrb[0].mxu0
      %v2078 = vadd.f32 0.0, %v2077
      %v2079 = vpop.f32.mrb[0].mxu0
      %2080 = vmatprep.mubr.f32.mxu0 0.0
      %2081 = vmatmul.mubr.f32.gmra.mrb[0].mxu0 %v1959
      %v2082 = vpop.f32.mrb[0].mxu0
      %v2083 = vadd.f32 0.0, %v2082
      %v2084 = vpop.f32.mrb[0].mxu0
      %2085 = vmatprep.mubr.f32.mxu0 0.0
      %2086 = vmatmul.mubr.f32.gmra.mrb[0].mxu0 %v1962
      %v2087 = vpop.f32.mrb[0].mxu0
      %v2088 = vadd.f32 0.0, %v2087
      %v2089 = vpop.f32.mrb[0].mxu0
      %2090 = vmatprep.mubr.f32.mxu0 0.0
      %2091 = vmatmul.mubr.f32.gmra.mrb[0].mxu0 %v1965
      %v2092 = vpop.f32.mrb[0].mxu0
      %v2093 = vadd.f32 0.0, %v2092
      %v2094 = vpop.f32.mrb[0].mxu0
      %2095 = vmatprep.mubr.f32.mxu0 0.0
      %2096 = vmatmul.mubr.f32.gmra.mrb[0].mxu0 %v1968
      %v2097 = vpop.f32.mrb[0].mxu0
      %v2098 = vadd.f32 0.0, %v2097
      %v2099 = vpop.f32.mrb[0].mxu0
      %2100 = vmatprep.mubr.f32.mxu0 0.0
      %2101 = vmatmul.mubr.f32.gmra.mrb[0].mxu0 %v1971
      %v2102 = vpop.f32.mrb[0].mxu0
      %v2103 = vadd.f32 0.0, %v2102
      %v2104 = vpop.f32.mrb[0].mxu0
      %2105 = vmatprep.mubr.f32.mxu0 0.0
      %2106 = vmatmul.mubr.f32.gmra.mrb[0].mxu0 %v1974
      %v2107 = vpop.f32.mrb[0].mxu0
      %v2108 = vadd.f32 0.0, %v2107
      %v2109 = vpop.f32.mrb[0].mxu0
      %2110 = vmatprep.mubr.f32.mxu0 0.0
      %2111 = vmatmul.mubr.f32.gmra.mrb[0].mxu0 %v1977
      %v2112 = vpop.f32.mrb[0].mxu0
      %v2113 = vadd.f32 0.0, %v2112
      %v2114 = vpop.f32.mrb[0].mxu0
      %2115 = vmatprep.mubr.f32.mxu0 0.0
      %2116 = vmatmul.mubr.f32.gmra.mrb[0].mxu0 %v1980
      %v2117 = vpop.f32.mrb[0].mxu0
      %v2118 = vadd.f32 0.0, %v2117
      %v2119 = vpop.f32.mrb[0].mxu0
      %2120 = vmatprep.mubr.f32.mxu0 0.0
      %2121 = vmatmul.mubr.f32.gmra.mrb[0].mxu0 %v1983
      %v2122 = vpop.f32.mrb[0].mxu0
      %v2123 = vadd.f32 0.0, %v2122
      %v2124 = vpop.f32.mrb[0].mxu0
      %2125 = vmatprep.mubr.f32.mxu0 0.0
      %2126 = vmatmul.mubr.f32.gmra.mrb[0].mxu0 %v1986
      %v2127 = vpop.f32.mrb[0].mxu0
      %v2128 = vadd.f32 0.0, %v2127
      %v2129 = vpop.f32.mrb[0].mxu0
      %2130 = vmatprep.mubr.f32.mxu0 0.0
      %2131 = vmatmul.mubr.f32.gmra.mrb[0].mxu0 %v1989
      %v2132 = vpop.f32.mrb[0].mxu0
      %v2133 = vadd.f32 0.0, %v2132
      %v2134 = vpop.f32.mrb[0].mxu0
      %2135 = vdwg.mxu0
      %v2136 = vlaneseq
      %v2137 = vshrl.u32 %v2136, 7
      %v2138 = vsub.s32 0, %v2137
      %v2139 = vrot.slane %v2058, %v2138
      %v2140 = vlaneseq
      %v2141 = vshrl.u32 %v2140, 7
      %v2142 = vsub.s32 0, %v2141
      %v2143 = vrot.slane %v2063, %v2142
      %v2144 = vlaneseq
      %v2145 = vshrl.u32 %v2144, 7
      %v2146 = vsub.s32 0, %v2145
      %v2147 = vrot.slane %v2068, %v2146
      %v2148 = vlaneseq
      %v2149 = vshrl.u32 %v2148, 7
      %v2150 = vsub.s32 0, %v2149
      %v2151 = vrot.slane %v2073, %v2150
      %v2152 = vlaneseq
      %v2153 = vshrl.u32 %v2152, 7
      %v2154 = vsub.s32 0, %v2153
      %v2155 = vrot.slane %v2078, %v2154
      %v2156 = vlaneseq
      %v2157 = vshrl.u32 %v2156, 7
      %v2158 = vsub.s32 0, %v2157
      %v2159 = vrot.slane %v2083, %v2158
      %v2160 = vlaneseq
      %v2161 = vshrl.u32 %v2160, 7
      %v2162 = vsub.s32 0, %v2161
      %v2163 = vrot.slane %v2088, %v2162
      %v2164 = vlaneseq
      %v2165 = vshrl.u32 %v2164, 7
      %v2166 = vsub.s32 0, %v2165
      %v2167 = vrot.slane %v2093, %v2166
      %v2168 = vlaneseq
      %v2169 = vshrl.u32 %v2168, 7
      %v2170 = vsub.s32 0, %v2169
      %v2171 = vrot.slane %v2098, %v2170
      %v2172 = vlaneseq
      %v2173 = vshrl.u32 %v2172, 7
      %v2174 = vsub.s32 0, %v2173
      %v2175 = vrot.slane %v2103, %v2174
      %v2176 = vlaneseq
      %v2177 = vshrl.u32 %v2176, 7
      %v2178 = vsub.s32 0, %v2177
      %v2179 = vrot.slane %v2108, %v2178
      %v2180 = vlaneseq
      %v2181 = vshrl.u32 %v2180, 7
      %v2182 = vsub.s32 0, %v2181
      %v2183 = vrot.slane %v2113, %v2182
      %v2184 = vlaneseq
      %v2185 = vshrl.u32 %v2184, 7
      %v2186 = vsub.s32 0, %v2185
      %v2187 = vrot.slane %v2118, %v2186
      %v2188 = vlaneseq
      %v2189 = vshrl.u32 %v2188, 7
      %v2190 = vsub.s32 0, %v2189
      %v2191 = vrot.slane %v2123, %v2190
      %v2192 = vlaneseq
      %v2193 = vshrl.u32 %v2192, 7
      %v2194 = vsub.s32 0, %v2193
      %v2195 = vrot.slane %v2128, %v2194
      %v2196 = vlaneseq
      %v2197 = vshrl.u32 %v2196, 7
      %v2198 = vsub.s32 0, %v2197
      %v2199 = vrot.slane %v2133, %v2198
      %v2200 = vmul.f32 %v591, %v2139
      %v2201 = vmul.f32 %v596, %v2143
      %v2202 = vmul.f32 %v601, %v2147
      %v2203 = vmul.f32 %v606, %v2151
      %v2204 = vmul.f32 %v611, %v2155
      %v2205 = vmul.f32 %v616, %v2159
      %v2206 = vmul.f32 %v621, %v2163
      %v2207 = vmul.f32 %v626, %v2167
      %v2208 = vmul.f32 %v631, %v2171
      %v2209 = vmul.f32 %v636, %v2175
      %v2210 = vmul.f32 %v641, %v2179
      %v2211 = vmul.f32 %v646, %v2183
      %v2212 = vmul.f32 %v651, %v2187
      %v2213 = vmul.f32 %v656, %v2191
      %v2214 = vmul.f32 %v661, %v2195
      %v2215 = vmul.f32 %v666, %v2199
      %v2216 = vlaneseq
      %v2217 = vshrl.u32 %v2216, 7
      %v2218 = vsub.s32 1, %v2217
      %v2219 = vrot.slane %v2058, %v2218
      %v2220 = vlaneseq
      %v2221 = vshrl.u32 %v2220, 7
      %v2222 = vsub.s32 1, %v2221
      %v2223 = vrot.slane %v2063, %v2222
      %v2224 = vlaneseq
      %v2225 = vshrl.u32 %v2224, 7
      %v2226 = vsub.s32 1, %v2225
      %v2227 = vrot.slane %v2068, %v2226
      %v2228 = vlaneseq
      %v2229 = vshrl.u32 %v2228, 7
      %v2230 = vsub.s32 1, %v2229
      %v2231 = vrot.slane %v2073, %v2230
      %v2232 = vlaneseq
      %v2233 = vshrl.u32 %v2232, 7
      %v2234 = vsub.s32 1, %v2233
      %v2235 = vrot.slane %v2078, %v2234
      %v2236 = vlaneseq
      %v2237 = vshrl.u32 %v2236, 7
      %v2238 = vsub.s32 1, %v2237
      %v2239 = vrot.slane %v2083, %v2238
      %v2240 = vlaneseq
      %v2241 = vshrl.u32 %v2240, 7
      %v2242 = vsub.s32 1, %v2241
      %v2243 = vrot.slane %v2088, %v2242
      %v2244 = vlaneseq
      %v2245 = vshrl.u32 %v2244, 7
      %v2246 = vsub.s32 1, %v2245
      %v2247 = vrot.slane %v2093, %v2246
      %v2248 = vlaneseq
      %v2249 = vshrl.u32 %v2248, 7
      %v2250 = vsub.s32 1, %v2249
      %v2251 = vrot.slane %v2098, %v2250
      %v2252 = vlaneseq
      %v2253 = vshrl.u32 %v2252, 7
      %v2254 = vsub.s32 1, %v2253
      %v2255 = vrot.slane %v2103, %v2254
      %v2256 = vlaneseq
      %v2257 = vshrl.u32 %v2256, 7
      %v2258 = vsub.s32 1, %v2257
      %v2259 = vrot.slane %v2108, %v2258
      %v2260 = vlaneseq
      %v2261 = vshrl.u32 %v2260, 7
      %v2262 = vsub.s32 1, %v2261
      %v2263 = vrot.slane %v2113, %v2262
      %v2264 = vlaneseq
      %v2265 = vshrl.u32 %v2264, 7
      %v2266 = vsub.s32 1, %v2265
      %v2267 = vrot.slane %v2118, %v2266
      %v2268 = vlaneseq
      %v2269 = vshrl.u32 %v2268, 7
      %v2270 = vsub.s32 1, %v2269
      %v2271 = vrot.slane %v2123, %v2270
      %v2272 = vlaneseq
      %v2273 = vshrl.u32 %v2272, 7
      %v2274 = vsub.s32 1, %v2273
      %v2275 = vrot.slane %v2128, %v2274
      %v2276 = vlaneseq
      %v2277 = vshrl.u32 %v2276, 7
      %v2278 = vsub.s32 1, %v2277
      %v2279 = vrot.slane %v2133, %v2278
      %v2280 = vmul.f32 %v750, %v2219
      %v2281 = vmul.f32 %v754, %v2223
      %v2282 = vmul.f32 %v758, %v2227
      %v2283 = vmul.f32 %v762, %v2231
      %v2284 = vmul.f32 %v766, %v2235
      %v2285 = vmul.f32 %v770, %v2239
      %v2286 = vmul.f32 %v774, %v2243
      %v2287 = vmul.f32 %v778, %v2247
      %v2288 = vmul.f32 %v782, %v2251
      %v2289 = vmul.f32 %v786, %v2255
      %v2290 = vmul.f32 %v790, %v2259
      %v2291 = vmul.f32 %v794, %v2263
      %v2292 = vmul.f32 %v798, %v2267
      %v2293 = vmul.f32 %v802, %v2271
      %v2294 = vmul.f32 %v806, %v2275
      %v2295 = vmul.f32 %v810, %v2279
      %v2296 = vadd.f32 %v2200, %v2280
      %v2297 = vadd.f32 %v2201, %v2281
      %v2298 = vadd.f32 %v2202, %v2282
      %v2299 = vadd.f32 %v2203, %v2283
      %v2300 = vadd.f32 %v2204, %v2284
      %v2301 = vadd.f32 %v2205, %v2285
      %v2302 = vadd.f32 %v2206, %v2286
      %v2303 = vadd.f32 %v2207, %v2287
      %v2304 = vadd.f32 %v2208, %v2288
      %v2305 = vadd.f32 %v2209, %v2289
      %v2306 = vadd.f32 %v2210, %v2290
      %v2307 = vadd.f32 %v2211, %v2291
      %v2308 = vadd.f32 %v2212, %v2292
      %v2309 = vadd.f32 %v2213, %v2293
      %v2310 = vadd.f32 %v2214, %v2294
      %v2311 = vadd.f32 %v2215, %v2295
      %v2312 = vlaneseq
      %v2313 = vshrl.u32 %v2312, 7
      %v2314 = vsub.s32 2, %v2313
      %v2315 = vrot.slane %v2058, %v2314
      %v2316 = vlaneseq
      %v2317 = vshrl.u32 %v2316, 7
      %v2318 = vsub.s32 2, %v2317
      %v2319 = vrot.slane %v2063, %v2318
      %v2320 = vlaneseq
      %v2321 = vshrl.u32 %v2320, 7
      %v2322 = vsub.s32 2, %v2321
      %v2323 = vrot.slane %v2068, %v2322
      %v2324 = vlaneseq
      %v2325 = vshrl.u32 %v2324, 7
      %v2326 = vsub.s32 2, %v2325
      %v2327 = vrot.slane %v2073, %v2326
      %v2328 = vlaneseq
      %v2329 = vshrl.u32 %v2328, 7
      %v2330 = vsub.s32 2, %v2329
      %v2331 = vrot.slane %v2078, %v2330
      %v2332 = vlaneseq
      %v2333 = vshrl.u32 %v2332, 7
      %v2334 = vsub.s32 2, %v2333
      %v2335 = vrot.slane %v2083, %v2334
      %v2336 = vlaneseq
      %v2337 = vshrl.u32 %v2336, 7
      %v2338 = vsub.s32 2, %v2337
      %v2339 = vrot.slane %v2088, %v2338
      %v2340 = vlaneseq
      %v2341 = vshrl.u32 %v2340, 7
      %v2342 = vsub.s32 2, %v2341
      %v2343 = vrot.slane %v2093, %v2342
      %v2344 = vlaneseq
      %v2345 = vshrl.u32 %v2344, 7
      %v2346 = vsub.s32 2, %v2345
      %v2347 = vrot.slane %v2098, %v2346
      %v2348 = vlaneseq
      %v2349 = vshrl.u32 %v2348, 7
      %v2350 = vsub.s32 2, %v2349
      %v2351 = vrot.slane %v2103, %v2350
      %v2352 = vlaneseq
      %v2353 = vshrl.u32 %v2352, 7
      %v2354 = vsub.s32 2, %v2353
      %v2355 = vrot.slane %v2108, %v2354
      %v2356 = vlaneseq
      %v2357 = vshrl.u32 %v2356, 7
      %v2358 = vsub.s32 2, %v2357
      %v2359 = vrot.slane %v2113, %v2358
      %v2360 = vlaneseq
      %v2361 = vshrl.u32 %v2360, 7
      %v2362 = vsub.s32 2, %v2361
      %v2363 = vrot.slane %v2118, %v2362
      %v2364 = vlaneseq
      %v2365 = vshrl.u32 %v2364, 7
      %v2366 = vsub.s32 2, %v2365
      %v2367 = vrot.slane %v2123, %v2366
      %v2368 = vlaneseq
      %v2369 = vshrl.u32 %v2368, 7
      %v2370 = vsub.s32 2, %v2369
      %v2371 = vrot.slane %v2128, %v2370
      %v2372 = vlaneseq
      %v2373 = vshrl.u32 %v2372, 7
      %v2374 = vsub.s32 2, %v2373
      %v2375 = vrot.slane %v2133, %v2374
      %v2376 = vmul.f32 %v910, %v2315
      %v2377 = vmul.f32 %v914, %v2319
      %v2378 = vmul.f32 %v918, %v2323
      %v2379 = vmul.f32 %v922, %v2327
      %v2380 = vmul.f32 %v926, %v2331
      %v2381 = vmul.f32 %v930, %v2335
      %v2382 = vmul.f32 %v934, %v2339
      %v2383 = vmul.f32 %v938, %v2343
      %v2384 = vmul.f32 %v942, %v2347
      %v2385 = vmul.f32 %v946, %v2351
      %v2386 = vmul.f32 %v950, %v2355
      %v2387 = vmul.f32 %v954, %v2359
      %v2388 = vmul.f32 %v958, %v2363
      %v2389 = vmul.f32 %v962, %v2367
      %v2390 = vmul.f32 %v966, %v2371
      %v2391 = vmul.f32 %v970, %v2375
      %v2392 = vadd.f32 %v2296, %v2376
      %v2393 = vadd.f32 %v2297, %v2377
      %v2394 = vadd.f32 %v2298, %v2378
      %v2395 = vadd.f32 %v2299, %v2379
      %v2396 = vadd.f32 %v2300, %v2380
      %v2397 = vadd.f32 %v2301, %v2381
      %v2398 = vadd.f32 %v2302, %v2382
      %v2399 = vadd.f32 %v2303, %v2383
      %v2400 = vadd.f32 %v2304, %v2384
      %v2401 = vadd.f32 %v2305, %v2385
      %v2402 = vadd.f32 %v2306, %v2386
      %v2403 = vadd.f32 %v2307, %v2387
      %v2404 = vadd.f32 %v2308, %v2388
      %v2405 = vadd.f32 %v2309, %v2389
      %v2406 = vadd.f32 %v2310, %v2390
      %v2407 = vadd.f32 %v2311, %v2391
      %v2408 = vlaneseq
      %v2409 = vshrl.u32 %v2408, 7
      %v2410 = vsub.s32 3, %v2409
      %v2411 = vrot.slane %v2058, %v2410
      %v2412 = vlaneseq
      %v2413 = vshrl.u32 %v2412, 7
      %v2414 = vsub.s32 3, %v2413
      %v2415 = vrot.slane %v2063, %v2414
      %v2416 = vlaneseq
      %v2417 = vshrl.u32 %v2416, 7
      %v2418 = vsub.s32 3, %v2417
      %v2419 = vrot.slane %v2068, %v2418
      %v2420 = vlaneseq
      %v2421 = vshrl.u32 %v2420, 7
      %v2422 = vsub.s32 3, %v2421
      %v2423 = vrot.slane %v2073, %v2422
      %v2424 = vlaneseq
      %v2425 = vshrl.u32 %v2424, 7
      %v2426 = vsub.s32 3, %v2425
      %v2427 = vrot.slane %v2078, %v2426
      %v2428 = vlaneseq
      %v2429 = vshrl.u32 %v2428, 7
      %v2430 = vsub.s32 3, %v2429
      %v2431 = vrot.slane %v2083, %v2430
      %v2432 = vlaneseq
      %v2433 = vshrl.u32 %v2432, 7
      %v2434 = vsub.s32 3, %v2433
      %v2435 = vrot.slane %v2088, %v2434
      %v2436 = vlaneseq
      %v2437 = vshrl.u32 %v2436, 7
      %v2438 = vsub.s32 3, %v2437
      %v2439 = vrot.slane %v2093, %v2438
      %v2440 = vlaneseq
      %v2441 = vshrl.u32 %v2440, 7
      %v2442 = vsub.s32 3, %v2441
      %v2443 = vrot.slane %v2098, %v2442
      %v2444 = vlaneseq
      %v2445 = vshrl.u32 %v2444, 7
      %v2446 = vsub.s32 3, %v2445
      %v2447 = vrot.slane %v2103, %v2446
      %v2448 = vlaneseq
      %v2449 = vshrl.u32 %v2448, 7
      %v2450 = vsub.s32 3, %v2449
      %v2451 = vrot.slane %v2108, %v2450
      %v2452 = vlaneseq
      %v2453 = vshrl.u32 %v2452, 7
      %v2454 = vsub.s32 3, %v2453
      %v2455 = vrot.slane %v2113, %v2454
      %v2456 = vlaneseq
      %v2457 = vshrl.u32 %v2456, 7
      %v2458 = vsub.s32 3, %v2457
      %v2459 = vrot.slane %v2118, %v2458
      %v2460 = vlaneseq
      %v2461 = vshrl.u32 %v2460, 7
      %v2462 = vsub.s32 3, %v2461
      %v2463 = vrot.slane %v2123, %v2462
      %v2464 = vlaneseq
      %v2465 = vshrl.u32 %v2464, 7
      %v2466 = vsub.s32 3, %v2465
      %v2467 = vrot.slane %v2128, %v2466
      %v2468 = vlaneseq
      %v2469 = vshrl.u32 %v2468, 7
      %v2470 = vsub.s32 3, %v2469
      %v2471 = vrot.slane %v2133, %v2470
      %v2472 = vmul.f32 %v1070, %v2411
      %v2473 = vmul.f32 %v1074, %v2415
      %v2474 = vmul.f32 %v1078, %v2419
      %v2475 = vmul.f32 %v1082, %v2423
      %v2476 = vmul.f32 %v1086, %v2427
      %v2477 = vmul.f32 %v1090, %v2431
      %v2478 = vmul.f32 %v1094, %v2435
      %v2479 = vmul.f32 %v1098, %v2439
      %v2480 = vmul.f32 %v1102, %v2443
      %v2481 = vmul.f32 %v1106, %v2447
      %v2482 = vmul.f32 %v1110, %v2451
      %v2483 = vmul.f32 %v1114, %v2455
      %v2484 = vmul.f32 %v1118, %v2459
      %v2485 = vmul.f32 %v1122, %v2463
      %v2486 = vmul.f32 %v1126, %v2467
      %v2487 = vmul.f32 %v1130, %v2471
      %v2488 = vadd.f32 %v2392, %v2472
      %v2489 = vadd.f32 %v2393, %v2473
      %v2490 = vadd.f32 %v2394, %v2474
      %v2491 = vadd.f32 %v2395, %v2475
      %v2492 = vadd.f32 %v2396, %v2476
      %v2493 = vadd.f32 %v2397, %v2477
      %v2494 = vadd.f32 %v2398, %v2478
      %v2495 = vadd.f32 %v2399, %v2479
      %v2496 = vadd.f32 %v2400, %v2480
      %v2497 = vadd.f32 %v2401, %v2481
      %v2498 = vadd.f32 %v2402, %v2482
      %v2499 = vadd.f32 %v2403, %v2483
      %v2500 = vadd.f32 %v2404, %v2484
      %v2501 = vadd.f32 %v2405, %v2485
      %v2502 = vadd.f32 %v2406, %v2486
      %v2503 = vadd.f32 %v2407, %v2487
      %v2504 = vlaneseq
      %v2505 = vshrl.u32 %v2504, 7
      %v2506 = vsub.s32 4, %v2505
      %v2507 = vrot.slane %v2058, %v2506
      %v2508 = vlaneseq
      %v2509 = vshrl.u32 %v2508, 7
      %v2510 = vsub.s32 4, %v2509
      %v2511 = vrot.slane %v2063, %v2510
      %v2512 = vlaneseq
      %v2513 = vshrl.u32 %v2512, 7
      %v2514 = vsub.s32 4, %v2513
      %v2515 = vrot.slane %v2068, %v2514
      %v2516 = vlaneseq
      %v2517 = vshrl.u32 %v2516, 7
      %v2518 = vsub.s32 4, %v2517
      %v2519 = vrot.slane %v2073, %v2518
      %v2520 = vlaneseq
      %v2521 = vshrl.u32 %v2520, 7
      %v2522 = vsub.s32 4, %v2521
      %v2523 = vrot.slane %v2078, %v2522
      %v2524 = vlaneseq
      %v2525 = vshrl.u32 %v2524, 7
      %v2526 = vsub.s32 4, %v2525
      %v2527 = vrot.slane %v2083, %v2526
      %v2528 = vlaneseq
      %v2529 = vshrl.u32 %v2528, 7
      %v2530 = vsub.s32 4, %v2529
      %v2531 = vrot.slane %v2088, %v2530
      %v2532 = vlaneseq
      %v2533 = vshrl.u32 %v2532, 7
      %v2534 = vsub.s32 4, %v2533
      %v2535 = vrot.slane %v2093, %v2534
      %v2536 = vlaneseq
      %v2537 = vshrl.u32 %v2536, 7
      %v2538 = vsub.s32 4, %v2537
      %v2539 = vrot.slane %v2098, %v2538
      %v2540 = vlaneseq
      %v2541 = vshrl.u32 %v2540, 7
      %v2542 = vsub.s32 4, %v2541
      %v2543 = vrot.slane %v2103, %v2542
      %v2544 = vlaneseq
      %v2545 = vshrl.u32 %v2544, 7
      %v2546 = vsub.s32 4, %v2545
      %v2547 = vrot.slane %v2108, %v2546
      %v2548 = vlaneseq
      %v2549 = vshrl.u32 %v2548, 7
      %v2550 = vsub.s32 4, %v2549
      %v2551 = vrot.slane %v2113, %v2550
      %v2552 = vlaneseq
      %v2553 = vshrl.u32 %v2552, 7
      %v2554 = vsub.s32 4, %v2553
      %v2555 = vrot.slane %v2118, %v2554
      %v2556 = vlaneseq
      %v2557 = vshrl.u32 %v2556, 7
      %v2558 = vsub.s32 4, %v2557
      %v2559 = vrot.slane %v2123, %v2558
      %v2560 = vlaneseq
      %v2561 = vshrl.u32 %v2560, 7
      %v2562 = vsub.s32 4, %v2561
      %v2563 = vrot.slane %v2128, %v2562
      %v2564 = vlaneseq
      %v2565 = vshrl.u32 %v2564, 7
      %v2566 = vsub.s32 4, %v2565
      %v2567 = vrot.slane %v2133, %v2566
      %v2568 = vmul.f32 %v1230, %v2507
      %v2569 = vmul.f32 %v1234, %v2511
      %v2570 = vmul.f32 %v1238, %v2515
      %v2571 = vmul.f32 %v1242, %v2519
      %v2572 = vmul.f32 %v1246, %v2523
      %v2573 = vmul.f32 %v1250, %v2527
      %v2574 = vmul.f32 %v1254, %v2531
      %v2575 = vmul.f32 %v1258, %v2535
      %v2576 = vmul.f32 %v1262, %v2539
      %v2577 = vmul.f32 %v1266, %v2543
      %v2578 = vmul.f32 %v1270, %v2547
      %v2579 = vmul.f32 %v1274, %v2551
      %v2580 = vmul.f32 %v1278, %v2555
      %v2581 = vmul.f32 %v1282, %v2559
      %v2582 = vmul.f32 %v1286, %v2563
      %v2583 = vmul.f32 %v1290, %v2567
      %v2584 = vadd.f32 %v2488, %v2568
      %v2585 = vadd.f32 %v2489, %v2569
      %v2586 = vadd.f32 %v2490, %v2570
      %v2587 = vadd.f32 %v2491, %v2571
      %v2588 = vadd.f32 %v2492, %v2572
      %v2589 = vadd.f32 %v2493, %v2573
      %v2590 = vadd.f32 %v2494, %v2574
      %v2591 = vadd.f32 %v2495, %v2575
      %v2592 = vadd.f32 %v2496, %v2576
      %v2593 = vadd.f32 %v2497, %v2577
      %v2594 = vadd.f32 %v2498, %v2578
      %v2595 = vadd.f32 %v2499, %v2579
      %v2596 = vadd.f32 %v2500, %v2580
      %v2597 = vadd.f32 %v2501, %v2581
      %v2598 = vadd.f32 %v2502, %v2582
      %v2599 = vadd.f32 %v2503, %v2583
      %v2600 = vlaneseq
      %v2601 = vshrl.u32 %v2600, 7
      %v2602 = vsub.s32 5, %v2601
      %v2603 = vrot.slane %v2058, %v2602
      %v2604 = vlaneseq
      %v2605 = vshrl.u32 %v2604, 7
      %v2606 = vsub.s32 5, %v2605
      %v2607 = vrot.slane %v2063, %v2606
      %v2608 = vlaneseq
      %v2609 = vshrl.u32 %v2608, 7
      %v2610 = vsub.s32 5, %v2609
      %v2611 = vrot.slane %v2068, %v2610
      %v2612 = vlaneseq
      %v2613 = vshrl.u32 %v2612, 7
      %v2614 = vsub.s32 5, %v2613
      %v2615 = vrot.slane %v2073, %v2614
      %v2616 = vlaneseq
      %v2617 = vshrl.u32 %v2616, 7
      %v2618 = vsub.s32 5, %v2617
      %v2619 = vrot.slane %v2078, %v2618
      %v2620 = vlaneseq
      %v2621 = vshrl.u32 %v2620, 7
      %v2622 = vsub.s32 5, %v2621
      %v2623 = vrot.slane %v2083, %v2622
      %v2624 = vlaneseq
      %v2625 = vshrl.u32 %v2624, 7
      %v2626 = vsub.s32 5, %v2625
      %v2627 = vrot.slane %v2088, %v2626
      %v2628 = vlaneseq
      %v2629 = vshrl.u32 %v2628, 7
      %v2630 = vsub.s32 5, %v2629
      %v2631 = vrot.slane %v2093, %v2630
      %v2632 = vlaneseq
      %v2633 = vshrl.u32 %v2632, 7
      %v2634 = vsub.s32 5, %v2633
      %v2635 = vrot.slane %v2098, %v2634
      %v2636 = vlaneseq
      %v2637 = vshrl.u32 %v2636, 7
      %v2638 = vsub.s32 5, %v2637
      %v2639 = vrot.slane %v2103, %v2638
      %v2640 = vlaneseq
      %v2641 = vshrl.u32 %v2640, 7
      %v2642 = vsub.s32 5, %v2641
      %v2643 = vrot.slane %v2108, %v2642
      %v2644 = vlaneseq
      %v2645 = vshrl.u32 %v2644, 7
      %v2646 = vsub.s32 5, %v2645
      %v2647 = vrot.slane %v2113, %v2646
      %v2648 = vlaneseq
      %v2649 = vshrl.u32 %v2648, 7
      %v2650 = vsub.s32 5, %v2649
      %v2651 = vrot.slane %v2118, %v2650
      %v2652 = vlaneseq
      %v2653 = vshrl.u32 %v2652, 7
      %v2654 = vsub.s32 5, %v2653
      %v2655 = vrot.slane %v2123, %v2654
      %v2656 = vlaneseq
      %v2657 = vshrl.u32 %v2656, 7
      %v2658 = vsub.s32 5, %v2657
      %v2659 = vrot.slane %v2128, %v2658
      %v2660 = vlaneseq
      %v2661 = vshrl.u32 %v2660, 7
      %v2662 = vsub.s32 5, %v2661
      %v2663 = vrot.slane %v2133, %v2662
      %v2664 = vmul.f32 %v1390, %v2603
      %v2665 = vmul.f32 %v1394, %v2607
      %v2666 = vmul.f32 %v1398, %v2611
      %v2667 = vmul.f32 %v1402, %v2615
      %v2668 = vmul.f32 %v1406, %v2619
      %v2669 = vmul.f32 %v1410, %v2623
      %v2670 = vmul.f32 %v1414, %v2627
      %v2671 = vmul.f32 %v1418, %v2631
      %v2672 = vmul.f32 %v1422, %v2635
      %v2673 = vmul.f32 %v1426, %v2639
      %v2674 = vmul.f32 %v1430, %v2643
      %v2675 = vmul.f32 %v1434, %v2647
      %v2676 = vmul.f32 %v1438, %v2651
      %v2677 = vmul.f32 %v1442, %v2655
      %v2678 = vmul.f32 %v1446, %v2659
      %v2679 = vmul.f32 %v1450, %v2663
      %v2680 = vadd.f32 %v2584, %v2664
      %v2681 = vadd.f32 %v2585, %v2665
      %v2682 = vadd.f32 %v2586, %v2666
      %v2683 = vadd.f32 %v2587, %v2667
      %v2684 = vadd.f32 %v2588, %v2668
      %v2685 = vadd.f32 %v2589, %v2669
      %v2686 = vadd.f32 %v2590, %v2670
      %v2687 = vadd.f32 %v2591, %v2671
      %v2688 = vadd.f32 %v2592, %v2672
      %v2689 = vadd.f32 %v2593, %v2673
      %v2690 = vadd.f32 %v2594, %v2674
      %v2691 = vadd.f32 %v2595, %v2675
      %v2692 = vadd.f32 %v2596, %v2676
      %v2693 = vadd.f32 %v2597, %v2677
      %v2694 = vadd.f32 %v2598, %v2678
      %v2695 = vadd.f32 %v2599, %v2679
      %v2696 = vlaneseq
      %v2697 = vshrl.u32 %v2696, 7
      %v2698 = vsub.s32 6, %v2697
      %v2699 = vrot.slane %v2058, %v2698
      %v2700 = vlaneseq
      %v2701 = vshrl.u32 %v2700, 7
      %v2702 = vsub.s32 6, %v2701
      %v2703 = vrot.slane %v2063, %v2702
      %v2704 = vlaneseq
      %v2705 = vshrl.u32 %v2704, 7
      %v2706 = vsub.s32 6, %v2705
      %v2707 = vrot.slane %v2068, %v2706
      %v2708 = vlaneseq
      %v2709 = vshrl.u32 %v2708, 7
      %v2710 = vsub.s32 6, %v2709
      %v2711 = vrot.slane %v2073, %v2710
      %v2712 = vlaneseq
      %v2713 = vshrl.u32 %v2712, 7
      %v2714 = vsub.s32 6, %v2713
      %v2715 = vrot.slane %v2078, %v2714
      %v2716 = vlaneseq
      %v2717 = vshrl.u32 %v2716, 7
      %v2718 = vsub.s32 6, %v2717
      %v2719 = vrot.slane %v2083, %v2718
      %v2720 = vlaneseq
      %v2721 = vshrl.u32 %v2720, 7
      %v2722 = vsub.s32 6, %v2721
      %v2723 = vrot.slane %v2088, %v2722
      %v2724 = vlaneseq
      %v2725 = vshrl.u32 %v2724, 7
      %v2726 = vsub.s32 6, %v2725
      %v2727 = vrot.slane %v2093, %v2726
      %v2728 = vlaneseq
      %v2729 = vshrl.u32 %v2728, 7
      %v2730 = vsub.s32 6, %v2729
      %v2731 = vrot.slane %v2098, %v2730
      %v2732 = vlaneseq
      %v2733 = vshrl.u32 %v2732, 7
      %v2734 = vsub.s32 6, %v2733
      %v2735 = vrot.slane %v2103, %v2734
      %v2736 = vlaneseq
      %v2737 = vshrl.u32 %v2736, 7
      %v2738 = vsub.s32 6, %v2737
      %v2739 = vrot.slane %v2108, %v2738
      %v2740 = vlaneseq
      %v2741 = vshrl.u32 %v2740, 7
      %v2742 = vsub.s32 6, %v2741
      %v2743 = vrot.slane %v2113, %v2742
      %v2744 = vlaneseq
      %v2745 = vshrl.u32 %v2744, 7
      %v2746 = vsub.s32 6, %v2745
      %v2747 = vrot.slane %v2118, %v2746
      %v2748 = vlaneseq
      %v2749 = vshrl.u32 %v2748, 7
      %v2750 = vsub.s32 6, %v2749
      %v2751 = vrot.slane %v2123, %v2750
      %v2752 = vlaneseq
      %v2753 = vshrl.u32 %v2752, 7
      %v2754 = vsub.s32 6, %v2753
      %v2755 = vrot.slane %v2128, %v2754
      %v2756 = vlaneseq
      %v2757 = vshrl.u32 %v2756, 7
      %v2758 = vsub.s32 6, %v2757
      %v2759 = vrot.slane %v2133, %v2758
      %v2760 = vmul.f32 %v1550, %v2699
      %v2761 = vmul.f32 %v1554, %v2703
      %v2762 = vmul.f32 %v1558, %v2707
      %v2763 = vmul.f32 %v1562, %v2711
      %v2764 = vmul.f32 %v1566, %v2715
      %v2765 = vmul.f32 %v1570, %v2719
      %v2766 = vmul.f32 %v1574, %v2723
      %v2767 = vmul.f32 %v1578, %v2727
      %v2768 = vmul.f32 %v1582, %v2731
      %v2769 = vmul.f32 %v1586, %v2735
      %v2770 = vmul.f32 %v1590, %v2739
      %v2771 = vmul.f32 %v1594, %v2743
      %v2772 = vmul.f32 %v1598, %v2747
      %v2773 = vmul.f32 %v1602, %v2751
      %v2774 = vmul.f32 %v1606, %v2755
      %v2775 = vmul.f32 %v1610, %v2759
      %v2776 = vadd.f32 %v2680, %v2760
      %v2777 = vadd.f32 %v2681, %v2761
      %v2778 = vadd.f32 %v2682, %v2762
      %v2779 = vadd.f32 %v2683, %v2763
      %v2780 = vadd.f32 %v2684, %v2764
      %v2781 = vadd.f32 %v2685, %v2765
      %v2782 = vadd.f32 %v2686, %v2766
      %v2783 = vadd.f32 %v2687, %v2767
      %v2784 = vadd.f32 %v2688, %v2768
      %v2785 = vadd.f32 %v2689, %v2769
      %v2786 = vadd.f32 %v2690, %v2770
      %v2787 = vadd.f32 %v2691, %v2771
      %v2788 = vadd.f32 %v2692, %v2772
      %v2789 = vadd.f32 %v2693, %v2773
      %v2790 = vadd.f32 %v2694, %v2774
      %v2791 = vadd.f32 %v2695, %v2775
      %v2792 = vlaneseq
      %v2793 = vshrl.u32 %v2792, 7
      %v2794 = vsub.s32 7, %v2793
      %v2795 = vrot.slane %v2058, %v2794
      %v2796 = vlaneseq
      %v2797 = vshrl.u32 %v2796, 7
      %v2798 = vsub.s32 7, %v2797
      %v2799 = vrot.slane %v2063, %v2798
      %v2800 = vlaneseq
      %v2801 = vshrl.u32 %v2800, 7
      %v2802 = vsub.s32 7, %v2801
      %v2803 = vrot.slane %v2068, %v2802
      %v2804 = vlaneseq
      %v2805 = vshrl.u32 %v2804, 7
      %v2806 = vsub.s32 7, %v2805
      %v2807 = vrot.slane %v2073, %v2806
      %v2808 = vlaneseq
      %v2809 = vshrl.u32 %v2808, 7
      %v2810 = vsub.s32 7, %v2809
      %v2811 = vrot.slane %v2078, %v2810
      %v2812 = vlaneseq
      %v2813 = vshrl.u32 %v2812, 7
      %v2814 = vsub.s32 7, %v2813
      %v2815 = vrot.slane %v2083, %v2814
      %v2816 = vlaneseq
      %v2817 = vshrl.u32 %v2816, 7
      %v2818 = vsub.s32 7, %v2817
      %v2819 = vrot.slane %v2088, %v2818
      %v2820 = vlaneseq
      %v2821 = vshrl.u32 %v2820, 7
      %v2822 = vsub.s32 7, %v2821
      %v2823 = vrot.slane %v2093, %v2822
      %v2824 = vlaneseq
      %v2825 = vshrl.u32 %v2824, 7
      %v2826 = vsub.s32 7, %v2825
      %v2827 = vrot.slane %v2098, %v2826
      %v2828 = vlaneseq
      %v2829 = vshrl.u32 %v2828, 7
      %v2830 = vsub.s32 7, %v2829
      %v2831 = vrot.slane %v2103, %v2830
      %v2832 = vlaneseq
      %v2833 = vshrl.u32 %v2832, 7
      %v2834 = vsub.s32 7, %v2833
      %v2835 = vrot.slane %v2108, %v2834
      %v2836 = vlaneseq
      %v2837 = vshrl.u32 %v2836, 7
      %v2838 = vsub.s32 7, %v2837
      %v2839 = vrot.slane %v2113, %v2838
      %v2840 = vlaneseq
      %v2841 = vshrl.u32 %v2840, 7
      %v2842 = vsub.s32 7, %v2841
      %v2843 = vrot.slane %v2118, %v2842
      %v2844 = vlaneseq
      %v2845 = vshrl.u32 %v2844, 7
      %v2846 = vsub.s32 7, %v2845
      %v2847 = vrot.slane %v2123, %v2846
      %v2848 = vlaneseq
      %v2849 = vshrl.u32 %v2848, 7
      %v2850 = vsub.s32 7, %v2849
      %v2851 = vrot.slane %v2128, %v2850
      %v2852 = vlaneseq
      %v2853 = vshrl.u32 %v2852, 7
      %v2854 = vsub.s32 7, %v2853
      %v2855 = vrot.slane %v2133, %v2854
      %v2856 = vmul.f32 %v1710, %v2795
      %v2857 = vmul.f32 %v1714, %v2799
      %v2858 = vmul.f32 %v1718, %v2803
      %v2859 = vmul.f32 %v1722, %v2807
      %v2860 = vmul.f32 %v1726, %v2811
      %v2861 = vmul.f32 %v1730, %v2815
      %v2862 = vmul.f32 %v1734, %v2819
      %v2863 = vmul.f32 %v1738, %v2823
      %v2864 = vmul.f32 %v1742, %v2827
      %v2865 = vmul.f32 %v1746, %v2831
      %v2866 = vmul.f32 %v1750, %v2835
      %v2867 = vmul.f32 %v1754, %v2839
      %v2868 = vmul.f32 %v1758, %v2843
      %v2869 = vmul.f32 %v1762, %v2847
      %v2870 = vmul.f32 %v1766, %v2851
      %v2871 = vmul.f32 %v1770, %v2855
      %v2872 = vadd.f32 %v2776, %v2856
      %v2873 = vadd.f32 %v2777, %v2857
      %v2874 = vadd.f32 %v2778, %v2858
      %v2875 = vadd.f32 %v2779, %v2859
      %v2876 = vadd.f32 %v2780, %v2860
      %v2877 = vadd.f32 %v2781, %v2861
      %v2878 = vadd.f32 %v2782, %v2862
      %v2879 = vadd.f32 %v2783, %v2863
      %v2880 = vadd.f32 %v2784, %v2864
      %v2881 = vadd.f32 %v2785, %v2865
      %v2882 = vadd.f32 %v2786, %v2866
      %v2883 = vadd.f32 %v2787, %v2867
      %v2884 = vadd.f32 %v2788, %v2868
      %v2885 = vadd.f32 %v2789, %v2869
      %v2886 = vadd.f32 %v2790, %v2870
      %v2887 = vadd.f32 %v2791, %v2871
      %v2888 = vld [vmem:[%s5] sm:$0x1]
      %v2890 = vlaneseq
      %v2891 = vshrl.u32 %v2890, 7
      %v2892 = vsub.s32 0, %v2891
      %v2893 = vrot.slane %v2888, %v2892
      %v2895 = vadd.f32 %v2872, %v2893
      %v2896 = vadd.f32 %v2873, %v2893
      %v2897 = vadd.f32 %v2874, %v2893
      %v2898 = vadd.f32 %v2875, %v2893
      %v2899 = vadd.f32 %v2876, %v2893
      %v2900 = vadd.f32 %v2877, %v2893
      %v2901 = vadd.f32 %v2878, %v2893
      %v2902 = vadd.f32 %v2879, %v2893
      %v2903 = vadd.f32 %v2880, %v2893
      %v2904 = vadd.f32 %v2881, %v2893
      %v2905 = vadd.f32 %v2882, %v2893
      %v2906 = vadd.f32 %v2883, %v2893
      %v2907 = vadd.f32 %v2884, %v2893
      %v2908 = vadd.f32 %v2885, %v2893
      %v2909 = vadd.f32 %v2886, %v2893
      %v2910 = vadd.f32 %v2887, %v2893
      %vm2911 = vcmp.gt.f32.partialorder %v2895, 0.0
      %vm2912 = vcmp.gt.f32.partialorder %v2896, 0.0
      %vm2913 = vcmp.gt.f32.partialorder %v2897, 0.0
      %vm2914 = vcmp.gt.f32.partialorder %v2898, 0.0
      %vm2915 = vcmp.gt.f32.partialorder %v2899, 0.0
      %vm2916 = vcmp.gt.f32.partialorder %v2900, 0.0
      %vm2917 = vcmp.gt.f32.partialorder %v2901, 0.0
      %vm2918 = vcmp.gt.f32.partialorder %v2902, 0.0
      %vm2919 = vcmp.gt.f32.partialorder %v2903, 0.0
      %vm2920 = vcmp.gt.f32.partialorder %v2904, 0.0
      %vm2921 = vcmp.gt.f32.partialorder %v2905, 0.0
      %vm2922 = vcmp.gt.f32.partialorder %v2906, 0.0
      %vm2923 = vcmp.gt.f32.partialorder %v2907, 0.0
      %vm2924 = vcmp.gt.f32.partialorder %v2908, 0.0
      %vm2925 = vcmp.gt.f32.partialorder %v2909, 0.0
      %vm2926 = vcmp.gt.f32.partialorder %v2910, 0.0
      %v2927 = vmul.f32 %v2895, 0.1
      %v2928 = vmul.f32 %v2896, 0.1
      %v2929 = vmul.f32 %v2897, 0.1
      %v2930 = vmul.f32 %v2898, 0.1
      %v2931 = vmul.f32 %v2899, 0.1
      %v2932 = vmul.f32 %v2900, 0.1
      %v2933 = vmul.f32 %v2901, 0.1
      %v2934 = vmul.f32 %v2902, 0.1
      %v2935 = vmul.f32 %v2903, 0.1
      %v2936 = vmul.f32 %v2904, 0.1
      %v2937 = vmul.f32 %v2905, 0.1
      %v2938 = vmul.f32 %v2906, 0.1
      %v2939 = vmul.f32 %v2907, 0.1
      %v2940 = vmul.f32 %v2908, 0.1
      %v2941 = vmul.f32 %v2909, 0.1
      %v2942 = vmul.f32 %v2910, 0.1
      %v2943 = vsel %vm2911, %v2895, %v2927
      %v2944 = vsel %vm2912, %v2896, %v2928
      %v2945 = vsel %vm2913, %v2897, %v2929
      %v2946 = vsel %vm2914, %v2898, %v2930
      %v2947 = vsel %vm2915, %v2899, %v2931
      %v2948 = vsel %vm2916, %v2900, %v2932
      %v2949 = vsel %vm2917, %v2901, %v2933
      %v2950 = vsel %vm2918, %v2902, %v2934
      %v2951 = vsel %vm2919, %v2903, %v2935
      %v2952 = vsel %vm2920, %v2904, %v2936
      %v2953 = vsel %vm2921, %v2905, %v2937
      %v2954 = vsel %vm2922, %v2906, %v2938
      %v2955 = vsel %vm2923, %v2907, %v2939
      %v2956 = vsel %vm2924, %v2908, %v2940
      %v2957 = vsel %vm2925, %v2909, %v2941
      %v2958 = vsel %vm2926, %v2910, %v2942
      %v2959 = vld [vmem:[%s6] sm:$0xff]
      %v2960 = vld [vmem:[%s6 + $0x8] sm:$0xff]
      %v2961 = vld [vmem:[%s6 + $0x10] sm:$0xff]
      %v2962 = vld [vmem:[%s6 + $0x18] sm:$0xff]
      %v2964 = vsel %vm394, %v2943, 0
      %v2967 = vsel %vm394, %v2944, 0
      %v2970 = vsel %vm394, %v2945, 0
      %v2973 = vsel %vm394, %v2946, 0
      %v2976 = vsel %vm394, %v2947, 0
      %v2979 = vsel %vm394, %v2948, 0
      %v2982 = vsel %vm394, %v2949, 0
      %v2985 = vsel %vm394, %v2950, 0
      %v2988 = vsel %vm394, %v2951, 0
      %v2991 = vsel %vm394, %v2952, 0
      %v2994 = vsel %vm394, %v2953, 0
      %v2997 = vsel %vm394, %v2954, 0
      %v3000 = vsel %vm394, %v2955, 0
      %v3003 = vsel %vm394, %v2956, 0
      %v3006 = vsel %vm394, %v2957, 0
      %v3009 = vsel %vm394, %v2958, 0
      %3011 = vmatprep.subr.mxu0 0.0
      %3012 = vmatpush1.msra.mxu0 %v2959
      %3013 = vmatprep.subr.mxu0 0.0
      %3014 = vmatpush1.msra.mxu0 %v2960
      %3015 = vmatprep.subr.mxu0 0.0
      %3016 = vmatpush1.msra.mxu0 %v2961
      %3017 = vmatprep.subr.mxu0 0.0
      %3018 = vmatpush1.msra.mxu0 %v2962
      %3019 = vmatprep.subr.mxu0 0.0
      %3020 = vmatpush1.msra.mxu0 0.0
      %3021 = vmatprep.subr.mxu0 0.0
      %3022 = vmatpush1.msra.mxu0 0.0
      %3023 = vmatprep.subr.mxu0 0.0
      %3024 = vmatpush1.msra.mxu0 0.0
      %3025 = vmatprep.subr.mxu0 0.0
      %3026 = vmatpush1.msra.mxu0 0.0
      %3027 = vmatprep.subr.mxu0 0.0
      %3028 = vmatpush1.msra.mxu0 0.0
      %3029 = vmatprep.subr.mxu0 0.0
      %3030 = vmatpush1.msra.mxu0 0.0
      %3031 = vmatprep.subr.mxu0 0.0
      %3032 = vmatpush1.msra.mxu0 0.0
      %3033 = vmatprep.subr.mxu0 0.0
      %3034 = vmatpush1.msra.mxu0 0.0
      %3035 = vmatprep.subr.mxu0 0.0
      %3036 = vmatpush1.msra.mxu0 0.0
      %3037 = vmatprep.subr.mxu0 0.0
      %3038 = vmatpush1.msra.mxu0 0.0
      %3039 = vmatprep.subr.mxu0 0.0
      %3040 = vmatpush1.msra.mxu0 0.0
      %3041 = vmatprep.subr.mxu0 0.0
      %3042 = vmatpush1.msra.mxu0 0.0
      %3043 = vmatprep.subr.mxu0 0.0
      %3044 = vmatpush1.msra.mxu0 0.0
      %3045 = vmatprep.subr.mxu0 0.0
      %3046 = vmatpush1.msra.mxu0 0.0
      %3047 = vmatprep.subr.mxu0 0.0
      %3048 = vmatpush1.msra.mxu0 0.0
      %3049 = vmatprep.subr.mxu0 0.0
      %3050 = vmatpush1.msra.mxu0 0.0
      %3051 = vmatprep.subr.mxu0 0.0
      %3052 = vmatpush1.msra.mxu0 0.0
      %3053 = vmatprep.subr.mxu0 0.0
      %3054 = vmatpush1.msra.mxu0 0.0
      %3055 = vmatprep.subr.mxu0 0.0
      %3056 = vmatpush1.msra.mxu0 0.0
      %3057 = vmatprep.subr.mxu0 0.0
      %3058 = vmatpush1.msra.mxu0 0.0
      %3059 = vmatprep.subr.mxu0 0.0
      %3060 = vmatpush1.msra.mxu0 0.0
      %3061 = vmatprep.subr.mxu0 0.0
      %3062 = vmatpush1.msra.mxu0 0.0
      %3063 = vmatprep.subr.mxu0 0.0
      %3064 = vmatpush1.msra.mxu0 0.0
      %3065 = vmatprep.subr.mxu0 0.0
      %3066 = vmatpush1.msra.mxu0 0.0
      %3067 = vmatprep.subr.mxu0 0.0
      %3068 = vmatpush1.msra.mxu0 0.0
      %3069 = vmatprep.subr.mxu0 0.0
      %3070 = vmatpush1.msra.mxu0 0.0
      %3071 = vmatprep.subr.mxu0 0.0
      %3072 = vmatpush1.msra.mxu0 0.0
      %3073 = vmatprep.subr.mxu0 0.0
      %3074 = vmatpush1.msra.mxu0 0.0
      %3075 = vmatprep.mubr.f32.mxu0 0.0
      %3076 = vmatmul.mubr.f32.gmra.mrb[0].mxu0 %v2964
      %v3077 = vpop.f32.mrb[0].mxu0
      %v3078 = vadd.f32 0.0, %v3077
      %v3079 = vpop.f32.mrb[0].mxu0
      %3080 = vmatprep.mubr.f32.mxu0 0.0
      %3081 = vmatmul.mubr.f32.gmra.mrb[0].mxu0 %v2967
      %v3082 = vpop.f32.mrb[0].mxu0
      %v3083 = vadd.f32 0.0, %v3082
      %v3084 = vpop.f32.mrb[0].mxu0
      %3085 = vmatprep.mubr.f32.mxu0 0.0
      %3086 = vmatmul.mubr.f32.gmra.mrb[0].mxu0 %v2970
      %v3087 = vpop.f32.mrb[0].mxu0
      %v3088 = vadd.f32 0.0, %v3087
      %v3089 = vpop.f32.mrb[0].mxu0
      %3090 = vmatprep.mubr.f32.mxu0 0.0
      %3091 = vmatmul.mubr.f32.gmra.mrb[0].mxu0 %v2973
      %v3092 = vpop.f32.mrb[0].mxu0
      %v3093 = vadd.f32 0.0, %v3092
      %v3094 = vpop.f32.mrb[0].mxu0
      %3095 = vmatprep.mubr.f32.mxu0 0.0
      %3096 = vmatmul.mubr.f32.gmra.mrb[0].mxu0 %v2976
      %v3097 = vpop.f32.mrb[0].mxu0
      %v3098 = vadd.f32 0.0, %v3097
      %v3099 = vpop.f32.mrb[0].mxu0
      %3100 = vmatprep.mubr.f32.mxu0 0.0
      %3101 = vmatmul.mubr.f32.gmra.mrb[0].mxu0 %v2979
      %v3102 = vpop.f32.mrb[0].mxu0
      %v3103 = vadd.f32 0.0, %v3102
      %v3104 = vpop.f32.mrb[0].mxu0
      %3105 = vmatprep.mubr.f32.mxu0 0.0
      %3106 = vmatmul.mubr.f32.gmra.mrb[0].mxu0 %v2982
      %v3107 = vpop.f32.mrb[0].mxu0
      %v3108 = vadd.f32 0.0, %v3107
      %v3109 = vpop.f32.mrb[0].mxu0
      %3110 = vmatprep.mubr.f32.mxu0 0.0
      %3111 = vmatmul.mubr.f32.gmra.mrb[0].mxu0 %v2985
      %v3112 = vpop.f32.mrb[0].mxu0
      %v3113 = vadd.f32 0.0, %v3112
      %v3114 = vpop.f32.mrb[0].mxu0
      %3115 = vmatprep.mubr.f32.mxu0 0.0
      %3116 = vmatmul.mubr.f32.gmra.mrb[0].mxu0 %v2988
      %v3117 = vpop.f32.mrb[0].mxu0
      %v3118 = vadd.f32 0.0, %v3117
      %v3119 = vpop.f32.mrb[0].mxu0
      %3120 = vmatprep.mubr.f32.mxu0 0.0
      %3121 = vmatmul.mubr.f32.gmra.mrb[0].mxu0 %v2991
      %v3122 = vpop.f32.mrb[0].mxu0
      %v3123 = vadd.f32 0.0, %v3122
      %v3124 = vpop.f32.mrb[0].mxu0
      %3125 = vmatprep.mubr.f32.mxu0 0.0
      %3126 = vmatmul.mubr.f32.gmra.mrb[0].mxu0 %v2994
      %v3127 = vpop.f32.mrb[0].mxu0
      %v3128 = vadd.f32 0.0, %v3127
      %v3129 = vpop.f32.mrb[0].mxu0
      %3130 = vmatprep.mubr.f32.mxu0 0.0
      %3131 = vmatmul.mubr.f32.gmra.mrb[0].mxu0 %v2997
      %v3132 = vpop.f32.mrb[0].mxu0
      %v3133 = vadd.f32 0.0, %v3132
      %v3134 = vpop.f32.mrb[0].mxu0
      %3135 = vmatprep.mubr.f32.mxu0 0.0
      %3136 = vmatmul.mubr.f32.gmra.mrb[0].mxu0 %v3000
      %v3137 = vpop.f32.mrb[0].mxu0
      %v3138 = vadd.f32 0.0, %v3137
      %v3139 = vpop.f32.mrb[0].mxu0
      %3140 = vmatprep.mubr.f32.mxu0 0.0
      %3141 = vmatmul.mubr.f32.gmra.mrb[0].mxu0 %v3003
      %v3142 = vpop.f32.mrb[0].mxu0
      %v3143 = vadd.f32 0.0, %v3142
      %v3144 = vpop.f32.mrb[0].mxu0
      %3145 = vmatprep.mubr.f32.mxu0 0.0
      %3146 = vmatmul.mubr.f32.gmra.mrb[0].mxu0 %v3006
      %v3147 = vpop.f32.mrb[0].mxu0
      %v3148 = vadd.f32 0.0, %v3147
      %v3149 = vpop.f32.mrb[0].mxu0
      %3150 = vmatprep.mubr.f32.mxu0 0.0
      %3151 = vmatmul.mubr.f32.gmra.mrb[0].mxu0 %v3009
      %v3152 = vpop.f32.mrb[0].mxu0
      %v3153 = vadd.f32 0.0, %v3152
      %v3154 = vpop.f32.mrb[0].mxu0
      %3155 = vdwg.mxu0
      %v3156 = vlaneseq
      %v3157 = vshrl.u32 %v3156, 7
      %v3158 = vsub.s32 0, %v3157
      %v3159 = vrot.slane %v3078, %v3158
      %v3160 = vlaneseq
      %v3161 = vshrl.u32 %v3160, 7
      %v3162 = vsub.s32 0, %v3161
      %v3163 = vrot.slane %v3083, %v3162
      %v3164 = vlaneseq
      %v3165 = vshrl.u32 %v3164, 7
      %v3166 = vsub.s32 0, %v3165
      %v3167 = vrot.slane %v3088, %v3166
      %v3168 = vlaneseq
      %v3169 = vshrl.u32 %v3168, 7
      %v3170 = vsub.s32 0, %v3169
      %v3171 = vrot.slane %v3093, %v3170
      %v3172 = vlaneseq
      %v3173 = vshrl.u32 %v3172, 7
      %v3174 = vsub.s32 0, %v3173
      %v3175 = vrot.slane %v3098, %v3174
      %v3176 = vlaneseq
      %v3177 = vshrl.u32 %v3176, 7
      %v3178 = vsub.s32 0, %v3177
      %v3179 = vrot.slane %v3103, %v3178
      %v3180 = vlaneseq
      %v3181 = vshrl.u32 %v3180, 7
      %v3182 = vsub.s32 0, %v3181
      %v3183 = vrot.slane %v3108, %v3182
      %v3184 = vlaneseq
      %v3185 = vshrl.u32 %v3184, 7
      %v3186 = vsub.s32 0, %v3185
      %v3187 = vrot.slane %v3113, %v3186
      %v3188 = vlaneseq
      %v3189 = vshrl.u32 %v3188, 7
      %v3190 = vsub.s32 0, %v3189
      %v3191 = vrot.slane %v3118, %v3190
      %v3192 = vlaneseq
      %v3193 = vshrl.u32 %v3192, 7
      %v3194 = vsub.s32 0, %v3193
      %v3195 = vrot.slane %v3123, %v3194
      %v3196 = vlaneseq
      %v3197 = vshrl.u32 %v3196, 7
      %v3198 = vsub.s32 0, %v3197
      %v3199 = vrot.slane %v3128, %v3198
      %v3200 = vlaneseq
      %v3201 = vshrl.u32 %v3200, 7
      %v3202 = vsub.s32 0, %v3201
      %v3203 = vrot.slane %v3133, %v3202
      %v3204 = vlaneseq
      %v3205 = vshrl.u32 %v3204, 7
      %v3206 = vsub.s32 0, %v3205
      %v3207 = vrot.slane %v3138, %v3206
      %v3208 = vlaneseq
      %v3209 = vshrl.u32 %v3208, 7
      %v3210 = vsub.s32 0, %v3209
      %v3211 = vrot.slane %v3143, %v3210
      %v3212 = vlaneseq
      %v3213 = vshrl.u32 %v3212, 7
      %v3214 = vsub.s32 0, %v3213
      %v3215 = vrot.slane %v3148, %v3214
      %v3216 = vlaneseq
      %v3217 = vshrl.u32 %v3216, 7
      %v3218 = vsub.s32 0, %v3217
      %v3219 = vrot.slane %v3153, %v3218
      %v3220 = vmul.f32 %v591, %v3159
      %v3221 = vmul.f32 %v596, %v3163
      %v3222 = vmul.f32 %v601, %v3167
      %v3223 = vmul.f32 %v606, %v3171
      %v3224 = vmul.f32 %v611, %v3175
      %v3225 = vmul.f32 %v616, %v3179
      %v3226 = vmul.f32 %v621, %v3183
      %v3227 = vmul.f32 %v626, %v3187
      %v3228 = vmul.f32 %v631, %v3191
      %v3229 = vmul.f32 %v636, %v3195
      %v3230 = vmul.f32 %v641, %v3199
      %v3231 = vmul.f32 %v646, %v3203
      %v3232 = vmul.f32 %v651, %v3207
      %v3233 = vmul.f32 %v656, %v3211
      %v3234 = vmul.f32 %v661, %v3215
      %v3235 = vmul.f32 %v666, %v3219
      %v3236 = vlaneseq
      %v3237 = vshrl.u32 %v3236, 7
      %v3238 = vsub.s32 1, %v3237
      %v3239 = vrot.slane %v3078, %v3238
      %v3240 = vlaneseq
      %v3241 = vshrl.u32 %v3240, 7
      %v3242 = vsub.s32 1, %v3241
      %v3243 = vrot.slane %v3083, %v3242
      %v3244 = vlaneseq
      %v3245 = vshrl.u32 %v3244, 7
      %v3246 = vsub.s32 1, %v3245
      %v3247 = vrot.slane %v3088, %v3246
      %v3248 = vlaneseq
      %v3249 = vshrl.u32 %v3248, 7
      %v3250 = vsub.s32 1, %v3249
      %v3251 = vrot.slane %v3093, %v3250
      %v3252 = vlaneseq
      %v3253 = vshrl.u32 %v3252, 7
      %v3254 = vsub.s32 1, %v3253
      %v3255 = vrot.slane %v3098, %v3254
      %v3256 = vlaneseq
      %v3257 = vshrl.u32 %v3256, 7
      %v3258 = vsub.s32 1, %v3257
      %v3259 = vrot.slane %v3103, %v3258
      %v3260 = vlaneseq
      %v3261 = vshrl.u32 %v3260, 7
      %v3262 = vsub.s32 1, %v3261
      %v3263 = vrot.slane %v3108, %v3262
      %v3264 = vlaneseq
      %v3265 = vshrl.u32 %v3264, 7
      %v3266 = vsub.s32 1, %v3265
      %v3267 = vrot.slane %v3113, %v3266
      %v3268 = vlaneseq
      %v3269 = vshrl.u32 %v3268, 7
      %v3270 = vsub.s32 1, %v3269
      %v3271 = vrot.slane %v3118, %v3270
      %v3272 = vlaneseq
      %v3273 = vshrl.u32 %v3272, 7
      %v3274 = vsub.s32 1, %v3273
      %v3275 = vrot.slane %v3123, %v3274
      %v3276 = vlaneseq
      %v3277 = vshrl.u32 %v3276, 7
      %v3278 = vsub.s32 1, %v3277
      %v3279 = vrot.slane %v3128, %v3278
      %v3280 = vlaneseq
      %v3281 = vshrl.u32 %v3280, 7
      %v3282 = vsub.s32 1, %v3281
      %v3283 = vrot.slane %v3133, %v3282
      %v3284 = vlaneseq
      %v3285 = vshrl.u32 %v3284, 7
      %v3286 = vsub.s32 1, %v3285
      %v3287 = vrot.slane %v3138, %v3286
      %v3288 = vlaneseq
      %v3289 = vshrl.u32 %v3288, 7
      %v3290 = vsub.s32 1, %v3289
      %v3291 = vrot.slane %v3143, %v3290
      %v3292 = vlaneseq
      %v3293 = vshrl.u32 %v3292, 7
      %v3294 = vsub.s32 1, %v3293
      %v3295 = vrot.slane %v3148, %v3294
      %v3296 = vlaneseq
      %v3297 = vshrl.u32 %v3296, 7
      %v3298 = vsub.s32 1, %v3297
      %v3299 = vrot.slane %v3153, %v3298
      %v3300 = vmul.f32 %v750, %v3239
      %v3301 = vmul.f32 %v754, %v3243
      %v3302 = vmul.f32 %v758, %v3247
      %v3303 = vmul.f32 %v762, %v3251
      %v3304 = vmul.f32 %v766, %v3255
      %v3305 = vmul.f32 %v770, %v3259
      %v3306 = vmul.f32 %v774, %v3263
      %v3307 = vmul.f32 %v778, %v3267
      %v3308 = vmul.f32 %v782, %v3271
      %v3309 = vmul.f32 %v786, %v3275
      %v3310 = vmul.f32 %v790, %v3279
      %v3311 = vmul.f32 %v794, %v3283
      %v3312 = vmul.f32 %v798, %v3287
      %v3313 = vmul.f32 %v802, %v3291
      %v3314 = vmul.f32 %v806, %v3295
      %v3315 = vmul.f32 %v810, %v3299
      %v3316 = vadd.f32 %v3220, %v3300
      %v3317 = vadd.f32 %v3221, %v3301
      %v3318 = vadd.f32 %v3222, %v3302
      %v3319 = vadd.f32 %v3223, %v3303
      %v3320 = vadd.f32 %v3224, %v3304
      %v3321 = vadd.f32 %v3225, %v3305
      %v3322 = vadd.f32 %v3226, %v3306
      %v3323 = vadd.f32 %v3227, %v3307
      %v3324 = vadd.f32 %v3228, %v3308
      %v3325 = vadd.f32 %v3229, %v3309
      %v3326 = vadd.f32 %v3230, %v3310
      %v3327 = vadd.f32 %v3231, %v3311
      %v3328 = vadd.f32 %v3232, %v3312
      %v3329 = vadd.f32 %v3233, %v3313
      %v3330 = vadd.f32 %v3234, %v3314
      %v3331 = vadd.f32 %v3235, %v3315
      %v3332 = vlaneseq
      %v3333 = vshrl.u32 %v3332, 7
      %v3334 = vsub.s32 2, %v3333
      %v3335 = vrot.slane %v3078, %v3334
      %v3336 = vlaneseq
      %v3337 = vshrl.u32 %v3336, 7
      %v3338 = vsub.s32 2, %v3337
      %v3339 = vrot.slane %v3083, %v3338
      %v3340 = vlaneseq
      %v3341 = vshrl.u32 %v3340, 7
      %v3342 = vsub.s32 2, %v3341
      %v3343 = vrot.slane %v3088, %v3342
      %v3344 = vlaneseq
      %v3345 = vshrl.u32 %v3344, 7
      %v3346 = vsub.s32 2, %v3345
      %v3347 = vrot.slane %v3093, %v3346
      %v3348 = vlaneseq
      %v3349 = vshrl.u32 %v3348, 7
      %v3350 = vsub.s32 2, %v3349
      %v3351 = vrot.slane %v3098, %v3350
      %v3352 = vlaneseq
      %v3353 = vshrl.u32 %v3352, 7
      %v3354 = vsub.s32 2, %v3353
      %v3355 = vrot.slane %v3103, %v3354
      %v3356 = vlaneseq
      %v3357 = vshrl.u32 %v3356, 7
      %v3358 = vsub.s32 2, %v3357
      %v3359 = vrot.slane %v3108, %v3358
      %v3360 = vlaneseq
      %v3361 = vshrl.u32 %v3360, 7
      %v3362 = vsub.s32 2, %v3361
      %v3363 = vrot.slane %v3113, %v3362
      %v3364 = vlaneseq
      %v3365 = vshrl.u32 %v3364, 7
      %v3366 = vsub.s32 2, %v3365
      %v3367 = vrot.slane %v3118, %v3366
      %v3368 = vlaneseq
      %v3369 = vshrl.u32 %v3368, 7
      %v3370 = vsub.s32 2, %v3369
      %v3371 = vrot.slane %v3123, %v3370
      %v3372 = vlaneseq
      %v3373 = vshrl.u32 %v3372, 7
      %v3374 = vsub.s32 2, %v3373
      %v3375 = vrot.slane %v3128, %v3374
      %v3376 = vlaneseq
      %v3377 = vshrl.u32 %v3376, 7
      %v3378 = vsub.s32 2, %v3377
      %v3379 = vrot.slane %v3133, %v3378
      %v3380 = vlaneseq
      %v3381 = vshrl.u32 %v3380, 7
      %v3382 = vsub.s32 2, %v3381
      %v3383 = vrot.slane %v3138, %v3382
      %v3384 = vlaneseq
      %v3385 = vshrl.u32 %v3384, 7
      %v3386 = vsub.s32 2, %v3385
      %v3387 = vrot.slane %v3143, %v3386
      %v3388 = vlaneseq
      %v3389 = vshrl.u32 %v3388, 7
      %v3390 = vsub.s32 2, %v3389
      %v3391 = vrot.slane %v3148, %v3390
      %v3392 = vlaneseq
      %v3393 = vshrl.u32 %v3392, 7
      %v3394 = vsub.s32 2, %v3393
      %v3395 = vrot.slane %v3153, %v3394
      %v3396 = vmul.f32 %v910, %v3335
      %v3397 = vmul.f32 %v914, %v3339
      %v3398 = vmul.f32 %v918, %v3343
      %v3399 = vmul.f32 %v922, %v3347
      %v3400 = vmul.f32 %v926, %v3351
      %v3401 = vmul.f32 %v930, %v3355
      %v3402 = vmul.f32 %v934, %v3359
      %v3403 = vmul.f32 %v938, %v3363
      %v3404 = vmul.f32 %v942, %v3367
      %v3405 = vmul.f32 %v946, %v3371
      %v3406 = vmul.f32 %v950, %v3375
      %v3407 = vmul.f32 %v954, %v3379
      %v3408 = vmul.f32 %v958, %v3383
      %v3409 = vmul.f32 %v962, %v3387
      %v3410 = vmul.f32 %v966, %v3391
      %v3411 = vmul.f32 %v970, %v3395
      %v3412 = vadd.f32 %v3316, %v3396
      %v3413 = vadd.f32 %v3317, %v3397
      %v3414 = vadd.f32 %v3318, %v3398
      %v3415 = vadd.f32 %v3319, %v3399
      %v3416 = vadd.f32 %v3320, %v3400
      %v3417 = vadd.f32 %v3321, %v3401
      %v3418 = vadd.f32 %v3322, %v3402
      %v3419 = vadd.f32 %v3323, %v3403
      %v3420 = vadd.f32 %v3324, %v3404
      %v3421 = vadd.f32 %v3325, %v3405
      %v3422 = vadd.f32 %v3326, %v3406
      %v3423 = vadd.f32 %v3327, %v3407
      %v3424 = vadd.f32 %v3328, %v3408
      %v3425 = vadd.f32 %v3329, %v3409
      %v3426 = vadd.f32 %v3330, %v3410
      %v3427 = vadd.f32 %v3331, %v3411
      %v3428 = vlaneseq
      %v3429 = vshrl.u32 %v3428, 7
      %v3430 = vsub.s32 3, %v3429
      %v3431 = vrot.slane %v3078, %v3430
      %v3432 = vlaneseq
      %v3433 = vshrl.u32 %v3432, 7
      %v3434 = vsub.s32 3, %v3433
      %v3435 = vrot.slane %v3083, %v3434
      %v3436 = vlaneseq
      %v3437 = vshrl.u32 %v3436, 7
      %v3438 = vsub.s32 3, %v3437
      %v3439 = vrot.slane %v3088, %v3438
      %v3440 = vlaneseq
      %v3441 = vshrl.u32 %v3440, 7
      %v3442 = vsub.s32 3, %v3441
      %v3443 = vrot.slane %v3093, %v3442
      %v3444 = vlaneseq
      %v3445 = vshrl.u32 %v3444, 7
      %v3446 = vsub.s32 3, %v3445
      %v3447 = vrot.slane %v3098, %v3446
      %v3448 = vlaneseq
      %v3449 = vshrl.u32 %v3448, 7
      %v3450 = vsub.s32 3, %v3449
      %v3451 = vrot.slane %v3103, %v3450
      %v3452 = vlaneseq
      %v3453 = vshrl.u32 %v3452, 7
      %v3454 = vsub.s32 3, %v3453
      %v3455 = vrot.slane %v3108, %v3454
      %v3456 = vlaneseq
      %v3457 = vshrl.u32 %v3456, 7
      %v3458 = vsub.s32 3, %v3457
      %v3459 = vrot.slane %v3113, %v3458
      %v3460 = vlaneseq
      %v3461 = vshrl.u32 %v3460, 7
      %v3462 = vsub.s32 3, %v3461
      %v3463 = vrot.slane %v3118, %v3462
      %v3464 = vlaneseq
      %v3465 = vshrl.u32 %v3464, 7
      %v3466 = vsub.s32 3, %v3465
      %v3467 = vrot.slane %v3123, %v3466
      %v3468 = vlaneseq
      %v3469 = vshrl.u32 %v3468, 7
      %v3470 = vsub.s32 3, %v3469
      %v3471 = vrot.slane %v3128, %v3470
      %v3472 = vlaneseq
      %v3473 = vshrl.u32 %v3472, 7
      %v3474 = vsub.s32 3, %v3473
      %v3475 = vrot.slane %v3133, %v3474
      %v3476 = vlaneseq
      %v3477 = vshrl.u32 %v3476, 7
      %v3478 = vsub.s32 3, %v3477
      %v3479 = vrot.slane %v3138, %v3478
      %v3480 = vlaneseq
      %v3481 = vshrl.u32 %v3480, 7
      %v3482 = vsub.s32 3, %v3481
      %v3483 = vrot.slane %v3143, %v3482
      %v3484 = vlaneseq
      %v3485 = vshrl.u32 %v3484, 7
      %v3486 = vsub.s32 3, %v3485
      %v3487 = vrot.slane %v3148, %v3486
      %v3488 = vlaneseq
      %v3489 = vshrl.u32 %v3488, 7
      %v3490 = vsub.s32 3, %v3489
      %v3491 = vrot.slane %v3153, %v3490
      %v3492 = vmul.f32 %v1070, %v3431
      %v3493 = vmul.f32 %v1074, %v3435
      %v3494 = vmul.f32 %v1078, %v3439
      %v3495 = vmul.f32 %v1082, %v3443
      %v3496 = vmul.f32 %v1086, %v3447
      %v3497 = vmul.f32 %v1090, %v3451
      %v3498 = vmul.f32 %v1094, %v3455
      %v3499 = vmul.f32 %v1098, %v3459
      %v3500 = vmul.f32 %v1102, %v3463
      %v3501 = vmul.f32 %v1106, %v3467
      %v3502 = vmul.f32 %v1110, %v3471
      %v3503 = vmul.f32 %v1114, %v3475
      %v3504 = vmul.f32 %v1118, %v3479
      %v3505 = vmul.f32 %v1122, %v3483
      %v3506 = vmul.f32 %v1126, %v3487
      %v3507 = vmul.f32 %v1130, %v3491
      %v3508 = vadd.f32 %v3412, %v3492
      %v3509 = vadd.f32 %v3413, %v3493
      %v3510 = vadd.f32 %v3414, %v3494
      %v3511 = vadd.f32 %v3415, %v3495
      %v3512 = vadd.f32 %v3416, %v3496
      %v3513 = vadd.f32 %v3417, %v3497
      %v3514 = vadd.f32 %v3418, %v3498
      %v3515 = vadd.f32 %v3419, %v3499
      %v3516 = vadd.f32 %v3420, %v3500
      %v3517 = vadd.f32 %v3421, %v3501
      %v3518 = vadd.f32 %v3422, %v3502
      %v3519 = vadd.f32 %v3423, %v3503
      %v3520 = vadd.f32 %v3424, %v3504
      %v3521 = vadd.f32 %v3425, %v3505
      %v3522 = vadd.f32 %v3426, %v3506
      %v3523 = vadd.f32 %v3427, %v3507
      %v3524 = vlaneseq
      %v3525 = vshrl.u32 %v3524, 7
      %v3526 = vsub.s32 4, %v3525
      %v3527 = vrot.slane %v3078, %v3526
      %v3528 = vlaneseq
      %v3529 = vshrl.u32 %v3528, 7
      %v3530 = vsub.s32 4, %v3529
      %v3531 = vrot.slane %v3083, %v3530
      %v3532 = vlaneseq
      %v3533 = vshrl.u32 %v3532, 7
      %v3534 = vsub.s32 4, %v3533
      %v3535 = vrot.slane %v3088, %v3534
      %v3536 = vlaneseq
      %v3537 = vshrl.u32 %v3536, 7
      %v3538 = vsub.s32 4, %v3537
      %v3539 = vrot.slane %v3093, %v3538
      %v3540 = vlaneseq
      %v3541 = vshrl.u32 %v3540, 7
      %v3542 = vsub.s32 4, %v3541
      %v3543 = vrot.slane %v3098, %v3542
      %v3544 = vlaneseq
      %v3545 = vshrl.u32 %v3544, 7
      %v3546 = vsub.s32 4, %v3545
      %v3547 = vrot.slane %v3103, %v3546
      %v3548 = vlaneseq
      %v3549 = vshrl.u32 %v3548, 7
      %v3550 = vsub.s32 4, %v3549
      %v3551 = vrot.slane %v3108, %v3550
      %v3552 = vlaneseq
      %v3553 = vshrl.u32 %v3552, 7
      %v3554 = vsub.s32 4, %v3553
      %v3555 = vrot.slane %v3113, %v3554
      %v3556 = vlaneseq
      %v3557 = vshrl.u32 %v3556, 7
      %v3558 = vsub.s32 4, %v3557
      %v3559 = vrot.slane %v3118, %v3558
      %v3560 = vlaneseq
      %v3561 = vshrl.u32 %v3560, 7
      %v3562 = vsub.s32 4, %v3561
      %v3563 = vrot.slane %v3123, %v3562
      %v3564 = vlaneseq
      %v3565 = vshrl.u32 %v3564, 7
      %v3566 = vsub.s32 4, %v3565
      %v3567 = vrot.slane %v3128, %v3566
      %v3568 = vlaneseq
      %v3569 = vshrl.u32 %v3568, 7
      %v3570 = vsub.s32 4, %v3569
      %v3571 = vrot.slane %v3133, %v3570
      %v3572 = vlaneseq
      %v3573 = vshrl.u32 %v3572, 7
      %v3574 = vsub.s32 4, %v3573
      %v3575 = vrot.slane %v3138, %v3574
      %v3576 = vlaneseq
      %v3577 = vshrl.u32 %v3576, 7
      %v3578 = vsub.s32 4, %v3577
      %v3579 = vrot.slane %v3143, %v3578
      %v3580 = vlaneseq
      %v3581 = vshrl.u32 %v3580, 7
      %v3582 = vsub.s32 4, %v3581
      %v3583 = vrot.slane %v3148, %v3582
      %v3584 = vlaneseq
      %v3585 = vshrl.u32 %v3584, 7
      %v3586 = vsub.s32 4, %v3585
      %v3587 = vrot.slane %v3153, %v3586
      %v3588 = vmul.f32 %v1230, %v3527
      %v3589 = vmul.f32 %v1234, %v3531
      %v3590 = vmul.f32 %v1238, %v3535
      %v3591 = vmul.f32 %v1242, %v3539
      %v3592 = vmul.f32 %v1246, %v3543
      %v3593 = vmul.f32 %v1250, %v3547
      %v3594 = vmul.f32 %v1254, %v3551
      %v3595 = vmul.f32 %v1258, %v3555
      %v3596 = vmul.f32 %v1262, %v3559
      %v3597 = vmul.f32 %v1266, %v3563
      %v3598 = vmul.f32 %v1270, %v3567
      %v3599 = vmul.f32 %v1274, %v3571
      %v3600 = vmul.f32 %v1278, %v3575
      %v3601 = vmul.f32 %v1282, %v3579
      %v3602 = vmul.f32 %v1286, %v3583
      %v3603 = vmul.f32 %v1290, %v3587
      %v3604 = vadd.f32 %v3508, %v3588
      %v3605 = vadd.f32 %v3509, %v3589
      %v3606 = vadd.f32 %v3510, %v3590
      %v3607 = vadd.f32 %v3511, %v3591
      %v3608 = vadd.f32 %v3512, %v3592
      %v3609 = vadd.f32 %v3513, %v3593
      %v3610 = vadd.f32 %v3514, %v3594
      %v3611 = vadd.f32 %v3515, %v3595
      %v3612 = vadd.f32 %v3516, %v3596
      %v3613 = vadd.f32 %v3517, %v3597
      %v3614 = vadd.f32 %v3518, %v3598
      %v3615 = vadd.f32 %v3519, %v3599
      %v3616 = vadd.f32 %v3520, %v3600
      %v3617 = vadd.f32 %v3521, %v3601
      %v3618 = vadd.f32 %v3522, %v3602
      %v3619 = vadd.f32 %v3523, %v3603
      %v3620 = vlaneseq
      %v3621 = vshrl.u32 %v3620, 7
      %v3622 = vsub.s32 5, %v3621
      %v3623 = vrot.slane %v3078, %v3622
      %v3624 = vlaneseq
      %v3625 = vshrl.u32 %v3624, 7
      %v3626 = vsub.s32 5, %v3625
      %v3627 = vrot.slane %v3083, %v3626
      %v3628 = vlaneseq
      %v3629 = vshrl.u32 %v3628, 7
      %v3630 = vsub.s32 5, %v3629
      %v3631 = vrot.slane %v3088, %v3630
      %v3632 = vlaneseq
      %v3633 = vshrl.u32 %v3632, 7
      %v3634 = vsub.s32 5, %v3633
      %v3635 = vrot.slane %v3093, %v3634
      %v3636 = vlaneseq
      %v3637 = vshrl.u32 %v3636, 7
      %v3638 = vsub.s32 5, %v3637
      %v3639 = vrot.slane %v3098, %v3638
      %v3640 = vlaneseq
      %v3641 = vshrl.u32 %v3640, 7
      %v3642 = vsub.s32 5, %v3641
      %v3643 = vrot.slane %v3103, %v3642
      %v3644 = vlaneseq
      %v3645 = vshrl.u32 %v3644, 7
      %v3646 = vsub.s32 5, %v3645
      %v3647 = vrot.slane %v3108, %v3646
      %v3648 = vlaneseq
      %v3649 = vshrl.u32 %v3648, 7
      %v3650 = vsub.s32 5, %v3649
      %v3651 = vrot.slane %v3113, %v3650
      %v3652 = vlaneseq
      %v3653 = vshrl.u32 %v3652, 7
      %v3654 = vsub.s32 5, %v3653
      %v3655 = vrot.slane %v3118, %v3654
      %v3656 = vlaneseq
      %v3657 = vshrl.u32 %v3656, 7
      %v3658 = vsub.s32 5, %v3657
      %v3659 = vrot.slane %v3123, %v3658
      %v3660 = vlaneseq
      %v3661 = vshrl.u32 %v3660, 7
      %v3662 = vsub.s32 5, %v3661
      %v3663 = vrot.slane %v3128, %v3662
      %v3664 = vlaneseq
      %v3665 = vshrl.u32 %v3664, 7
      %v3666 = vsub.s32 5, %v3665
      %v3667 = vrot.slane %v3133, %v3666
      %v3668 = vlaneseq
      %v3669 = vshrl.u32 %v3668, 7
      %v3670 = vsub.s32 5, %v3669
      %v3671 = vrot.slane %v3138, %v3670
      %v3672 = vlaneseq
      %v3673 = vshrl.u32 %v3672, 7
      %v3674 = vsub.s32 5, %v3673
      %v3675 = vrot.slane %v3143, %v3674
      %v3676 = vlaneseq
      %v3677 = vshrl.u32 %v3676, 7
      %v3678 = vsub.s32 5, %v3677
      %v3679 = vrot.slane %v3148, %v3678
      %v3680 = vlaneseq
      %v3681 = vshrl.u32 %v3680, 7
      %v3682 = vsub.s32 5, %v3681
      %v3683 = vrot.slane %v3153, %v3682
      %v3684 = vmul.f32 %v1390, %v3623
      %v3685 = vmul.f32 %v1394, %v3627
      %v3686 = vmul.f32 %v1398, %v3631
      %v3687 = vmul.f32 %v1402, %v3635
      %v3688 = vmul.f32 %v1406, %v3639
      %v3689 = vmul.f32 %v1410, %v3643
      %v3690 = vmul.f32 %v1414, %v3647
      %v3691 = vmul.f32 %v1418, %v3651
      %v3692 = vmul.f32 %v1422, %v3655
      %v3693 = vmul.f32 %v1426, %v3659
      %v3694 = vmul.f32 %v1430, %v3663
      %v3695 = vmul.f32 %v1434, %v3667
      %v3696 = vmul.f32 %v1438, %v3671
      %v3697 = vmul.f32 %v1442, %v3675
      %v3698 = vmul.f32 %v1446, %v3679
      %v3699 = vmul.f32 %v1450, %v3683
      %v3700 = vadd.f32 %v3604, %v3684
      %v3701 = vadd.f32 %v3605, %v3685
      %v3702 = vadd.f32 %v3606, %v3686
      %v3703 = vadd.f32 %v3607, %v3687
      %v3704 = vadd.f32 %v3608, %v3688
      %v3705 = vadd.f32 %v3609, %v3689
      %v3706 = vadd.f32 %v3610, %v3690
      %v3707 = vadd.f32 %v3611, %v3691
      %v3708 = vadd.f32 %v3612, %v3692
      %v3709 = vadd.f32 %v3613, %v3693
      %v3710 = vadd.f32 %v3614, %v3694
      %v3711 = vadd.f32 %v3615, %v3695
      %v3712 = vadd.f32 %v3616, %v3696
      %v3713 = vadd.f32 %v3617, %v3697
      %v3714 = vadd.f32 %v3618, %v3698
      %v3715 = vadd.f32 %v3619, %v3699
      %v3716 = vlaneseq
      %v3717 = vshrl.u32 %v3716, 7
      %v3718 = vsub.s32 6, %v3717
      %v3719 = vrot.slane %v3078, %v3718
      %v3720 = vlaneseq
      %v3721 = vshrl.u32 %v3720, 7
      %v3722 = vsub.s32 6, %v3721
      %v3723 = vrot.slane %v3083, %v3722
      %v3724 = vlaneseq
      %v3725 = vshrl.u32 %v3724, 7
      %v3726 = vsub.s32 6, %v3725
      %v3727 = vrot.slane %v3088, %v3726
      %v3728 = vlaneseq
      %v3729 = vshrl.u32 %v3728, 7
      %v3730 = vsub.s32 6, %v3729
      %v3731 = vrot.slane %v3093, %v3730
      %v3732 = vlaneseq
      %v3733 = vshrl.u32 %v3732, 7
      %v3734 = vsub.s32 6, %v3733
      %v3735 = vrot.slane %v3098, %v3734
      %v3736 = vlaneseq
      %v3737 = vshrl.u32 %v3736, 7
      %v3738 = vsub.s32 6, %v3737
      %v3739 = vrot.slane %v3103, %v3738
      %v3740 = vlaneseq
      %v3741 = vshrl.u32 %v3740, 7
      %v3742 = vsub.s32 6, %v3741
      %v3743 = vrot.slane %v3108, %v3742
      %v3744 = vlaneseq
      %v3745 = vshrl.u32 %v3744, 7
      %v3746 = vsub.s32 6, %v3745
      %v3747 = vrot.slane %v3113, %v3746
      %v3748 = vlaneseq
      %v3749 = vshrl.u32 %v3748, 7
      %v3750 = vsub.s32 6, %v3749
      %v3751 = vrot.slane %v3118, %v3750
      %v3752 = vlaneseq
      %v3753 = vshrl.u32 %v3752, 7
      %v3754 = vsub.s32 6, %v3753
      %v3755 = vrot.slane %v3123, %v3754
      %v3756 = vlaneseq
      %v3757 = vshrl.u32 %v3756, 7
      %v3758 = vsub.s32 6, %v3757
      %v3759 = vrot.slane %v3128, %v3758
      %v3760 = vlaneseq
      %v3761 = vshrl.u32 %v3760, 7
      %v3762 = vsub.s32 6, %v3761
      %v3763 = vrot.slane %v3133, %v3762
      %v3764 = vlaneseq
      %v3765 = vshrl.u32 %v3764, 7
      %v3766 = vsub.s32 6, %v3765
      %v3767 = vrot.slane %v3138, %v3766
      %v3768 = vlaneseq
      %v3769 = vshrl.u32 %v3768, 7
      %v3770 = vsub.s32 6, %v3769
      %v3771 = vrot.slane %v3143, %v3770
      %v3772 = vlaneseq
      %v3773 = vshrl.u32 %v3772, 7
      %v3774 = vsub.s32 6, %v3773
      %v3775 = vrot.slane %v3148, %v3774
      %v3776 = vlaneseq
      %v3777 = vshrl.u32 %v3776, 7
      %v3778 = vsub.s32 6, %v3777
      %v3779 = vrot.slane %v3153, %v3778
      %v3780 = vmul.f32 %v1550, %v3719
      %v3781 = vmul.f32 %v1554, %v3723
      %v3782 = vmul.f32 %v1558, %v3727
      %v3783 = vmul.f32 %v1562, %v3731
      %v3784 = vmul.f32 %v1566, %v3735
      %v3785 = vmul.f32 %v1570, %v3739
      %v3786 = vmul.f32 %v1574, %v3743
      %v3787 = vmul.f32 %v1578, %v3747
      %v3788 = vmul.f32 %v1582, %v3751
      %v3789 = vmul.f32 %v1586, %v3755
      %v3790 = vmul.f32 %v1590, %v3759
      %v3791 = vmul.f32 %v1594, %v3763
      %v3792 = vmul.f32 %v1598, %v3767
      %v3793 = vmul.f32 %v1602, %v3771
      %v3794 = vmul.f32 %v1606, %v3775
      %v3795 = vmul.f32 %v1610, %v3779
      %v3796 = vadd.f32 %v3700, %v3780
      %v3797 = vadd.f32 %v3701, %v3781
      %v3798 = vadd.f32 %v3702, %v3782
      %v3799 = vadd.f32 %v3703, %v3783
      %v3800 = vadd.f32 %v3704, %v3784
      %v3801 = vadd.f32 %v3705, %v3785
      %v3802 = vadd.f32 %v3706, %v3786
      %v3803 = vadd.f32 %v3707, %v3787
      %v3804 = vadd.f32 %v3708, %v3788
      %v3805 = vadd.f32 %v3709, %v3789
      %v3806 = vadd.f32 %v3710, %v3790
      %v3807 = vadd.f32 %v3711, %v3791
      %v3808 = vadd.f32 %v3712, %v3792
      %v3809 = vadd.f32 %v3713, %v3793
      %v3810 = vadd.f32 %v3714, %v3794
      %v3811 = vadd.f32 %v3715, %v3795
      %v3812 = vlaneseq
      %v3813 = vshrl.u32 %v3812, 7
      %v3814 = vsub.s32 7, %v3813
      %v3815 = vrot.slane %v3078, %v3814
      %v3816 = vlaneseq
      %v3817 = vshrl.u32 %v3816, 7
      %v3818 = vsub.s32 7, %v3817
      %v3819 = vrot.slane %v3083, %v3818
      %v3820 = vlaneseq
      %v3821 = vshrl.u32 %v3820, 7
      %v3822 = vsub.s32 7, %v3821
      %v3823 = vrot.slane %v3088, %v3822
      %v3824 = vlaneseq
      %v3825 = vshrl.u32 %v3824, 7
      %v3826 = vsub.s32 7, %v3825
      %v3827 = vrot.slane %v3093, %v3826
      %v3828 = vlaneseq
      %v3829 = vshrl.u32 %v3828, 7
      %v3830 = vsub.s32 7, %v3829
      %v3831 = vrot.slane %v3098, %v3830
      %v3832 = vlaneseq
      %v3833 = vshrl.u32 %v3832, 7
      %v3834 = vsub.s32 7, %v3833
      %v3835 = vrot.slane %v3103, %v3834
      %v3836 = vlaneseq
      %v3837 = vshrl.u32 %v3836, 7
      %v3838 = vsub.s32 7, %v3837
      %v3839 = vrot.slane %v3108, %v3838
      %v3840 = vlaneseq
      %v3841 = vshrl.u32 %v3840, 7
      %v3842 = vsub.s32 7, %v3841
      %v3843 = vrot.slane %v3113, %v3842
      %v3844 = vlaneseq
      %v3845 = vshrl.u32 %v3844, 7
      %v3846 = vsub.s32 7, %v3845
      %v3847 = vrot.slane %v3118, %v3846
      %v3848 = vlaneseq
      %v3849 = vshrl.u32 %v3848, 7
      %v3850 = vsub.s32 7, %v3849
      %v3851 = vrot.slane %v3123, %v3850
      %v3852 = vlaneseq
      %v3853 = vshrl.u32 %v3852, 7
      %v3854 = vsub.s32 7, %v3853
      %v3855 = vrot.slane %v3128, %v3854
      %v3856 = vlaneseq
      %v3857 = vshrl.u32 %v3856, 7
      %v3858 = vsub.s32 7, %v3857
      %v3859 = vrot.slane %v3133, %v3858
      %v3860 = vlaneseq
      %v3861 = vshrl.u32 %v3860, 7
      %v3862 = vsub.s32 7, %v3861
      %v3863 = vrot.slane %v3138, %v3862
      %v3864 = vlaneseq
      %v3865 = vshrl.u32 %v3864, 7
      %v3866 = vsub.s32 7, %v3865
      %v3867 = vrot.slane %v3143, %v3866
      %v3868 = vlaneseq
      %v3869 = vshrl.u32 %v3868, 7
      %v3870 = vsub.s32 7, %v3869
      %v3871 = vrot.slane %v3148, %v3870
      %v3872 = vlaneseq
      %v3873 = vshrl.u32 %v3872, 7
      %v3874 = vsub.s32 7, %v3873
      %v3875 = vrot.slane %v3153, %v3874
      %v3876 = vmul.f32 %v1710, %v3815
      %v3877 = vmul.f32 %v1714, %v3819
      %v3878 = vmul.f32 %v1718, %v3823
      %v3879 = vmul.f32 %v1722, %v3827
      %v3880 = vmul.f32 %v1726, %v3831
      %v3881 = vmul.f32 %v1730, %v3835
      %v3882 = vmul.f32 %v1734, %v3839
      %v3883 = vmul.f32 %v1738, %v3843
      %v3884 = vmul.f32 %v1742, %v3847
      %v3885 = vmul.f32 %v1746, %v3851
      %v3886 = vmul.f32 %v1750, %v3855
      %v3887 = vmul.f32 %v1754, %v3859
      %v3888 = vmul.f32 %v1758, %v3863
      %v3889 = vmul.f32 %v1762, %v3867
      %v3890 = vmul.f32 %v1766, %v3871
      %v3891 = vmul.f32 %v1770, %v3875
      %v3892 = vadd.f32 %v3796, %v3876
      %v3893 = vadd.f32 %v3797, %v3877
      %v3894 = vadd.f32 %v3798, %v3878
      %v3895 = vadd.f32 %v3799, %v3879
      %v3896 = vadd.f32 %v3800, %v3880
      %v3897 = vadd.f32 %v3801, %v3881
      %v3898 = vadd.f32 %v3802, %v3882
      %v3899 = vadd.f32 %v3803, %v3883
      %v3900 = vadd.f32 %v3804, %v3884
      %v3901 = vadd.f32 %v3805, %v3885
      %v3902 = vadd.f32 %v3806, %v3886
      %v3903 = vadd.f32 %v3807, %v3887
      %v3904 = vadd.f32 %v3808, %v3888
      %v3905 = vadd.f32 %v3809, %v3889
      %v3906 = vadd.f32 %v3810, %v3890
      %v3907 = vadd.f32 %v3811, %v3891
      %v3908 = vld [vmem:[%s7] sm:$0x1]
      %v3910 = vlaneseq
      %v3911 = vshrl.u32 %v3910, 7
      %v3912 = vsub.s32 0, %v3911
      %v3913 = vrot.slane %v3908, %v3912
      %v3915 = vadd.f32 %v3892, %v3913
      %v3916 = vadd.f32 %v3893, %v3913
      %v3917 = vadd.f32 %v3894, %v3913
      %v3918 = vadd.f32 %v3895, %v3913
      %v3919 = vadd.f32 %v3896, %v3913
      %v3920 = vadd.f32 %v3897, %v3913
      %v3921 = vadd.f32 %v3898, %v3913
      %v3922 = vadd.f32 %v3899, %v3913
      %v3923 = vadd.f32 %v3900, %v3913
      %v3924 = vadd.f32 %v3901, %v3913
      %v3925 = vadd.f32 %v3902, %v3913
      %v3926 = vadd.f32 %v3903, %v3913
      %v3927 = vadd.f32 %v3904, %v3913
      %v3928 = vadd.f32 %v3905, %v3913
      %v3929 = vadd.f32 %v3906, %v3913
      %v3930 = vadd.f32 %v3907, %v3913
      %v3931 = vld [vmem:[%s8] sm:$0xff]
      %v3932 = vld [vmem:[%s8 + $0x8] sm:$0xff]
      %vm3933 = vcmask 130048
      %v3935 = vsel %vm3933, %v3915, 0
      %v3938 = vsel %vm3933, %v3916, 0
      %v3941 = vsel %vm3933, %v3917, 0
      %v3944 = vsel %vm3933, %v3918, 0
      %v3947 = vsel %vm3933, %v3919, 0
      %v3950 = vsel %vm3933, %v3920, 0
      %v3953 = vsel %vm3933, %v3921, 0
      %v3956 = vsel %vm3933, %v3922, 0
      %v3959 = vsel %vm3933, %v3923, 0
      %v3962 = vsel %vm3933, %v3924, 0
      %v3965 = vsel %vm3933, %v3925, 0
      %v3968 = vsel %vm3933, %v3926, 0
      %v3971 = vsel %vm3933, %v3927, 0
      %v3974 = vsel %vm3933, %v3928, 0
      %v3977 = vsel %vm3933, %v3929, 0
      %v3980 = vsel %vm3933, %v3930, 0
      %3982 = vmatprep.subr.mxu0 0.0
      %3983 = vmatpush1.msra.mxu0 %v3931
      %3984 = vmatprep.subr.mxu0 0.0
      %3985 = vmatpush1.msra.mxu0 %v3932
      %3986 = vmatprep.subr.mxu0 0.0
      %3987 = vmatpush1.msra.mxu0 0.0
      %3988 = vmatprep.subr.mxu0 0.0
      %3989 = vmatpush1.msra.mxu0 0.0
      %3990 = vmatprep.subr.mxu0 0.0
      %3991 = vmatpush1.msra.mxu0 0.0
      %3992 = vmatprep.subr.mxu0 0.0
      %3993 = vmatpush1.msra.mxu0 0.0
      %3994 = vmatprep.subr.mxu0 0.0
      %3995 = vmatpush1.msra.mxu0 0.0
      %3996 = vmatprep.subr.mxu0 0.0
      %3997 = vmatpush1.msra.mxu0 0.0
      %3998 = vmatprep.subr.mxu0 0.0
      %3999 = vmatpush1.msra.mxu0 0.0
      %4000 = vmatprep.subr.mxu0 0.0
      %4001 = vmatpush1.msra.mxu0 0.0
      %4002 = vmatprep.subr.mxu0 0.0
      %4003 = vmatpush1.msra.mxu0 0.0
      %4004 = vmatprep.subr.mxu0 0.0
      %4005 = vmatpush1.msra.mxu0 0.0
      %4006 = vmatprep.subr.mxu0 0.0
      %4007 = vmatpush1.msra.mxu0 0.0
      %4008 = vmatprep.subr.mxu0 0.0
      %4009 = vmatpush1.msra.mxu0 0.0
      %4010 = vmatprep.subr.mxu0 0.0
      %4011 = vmatpush1.msra.mxu0 0.0
      %4012 = vmatprep.subr.mxu0 0.0
      %4013 = vmatpush1.msra.mxu0 0.0
      %4014 = vmatprep.subr.mxu0 0.0
      %4015 = vmatpush1.msra.mxu0 0.0
      %4016 = vmatprep.subr.mxu0 0.0
      %4017 = vmatpush1.msra.mxu0 0.0
      %4018 = vmatprep.subr.mxu0 0.0
      %4019 = vmatpush1.msra.mxu0 0.0
      %4020 = vmatprep.subr.mxu0 0.0
      %4021 = vmatpush1.msra.mxu0 0.0
      %4022 = vmatprep.subr.mxu0 0.0
      %4023 = vmatpush1.msra.mxu0 0.0
      %4024 = vmatprep.subr.mxu0 0.0
      %4025 = vmatpush1.msra.mxu0 0.0
      %4026 = vmatprep.subr.mxu0 0.0
      %4027 = vmatpush1.msra.mxu0 0.0
      %4028 = vmatprep.subr.mxu0 0.0
      %4029 = vmatpush1.msra.mxu0 0.0
      %4030 = vmatprep.subr.mxu0 0.0
      %4031 = vmatpush1.msra.mxu0 0.0
      %4032 = vmatprep.subr.mxu0 0.0
      %4033 = vmatpush1.msra.mxu0 0.0
      %4034 = vmatprep.subr.mxu0 0.0
      %4035 = vmatpush1.msra.mxu0 0.0
      %4036 = vmatprep.subr.mxu0 0.0
      %4037 = vmatpush1.msra.mxu0 0.0
      %4038 = vmatprep.subr.mxu0 0.0
      %4039 = vmatpush1.msra.mxu0 0.0
      %4040 = vmatprep.subr.mxu0 0.0
      %4041 = vmatpush1.msra.mxu0 0.0
      %4042 = vmatprep.subr.mxu0 0.0
      %4043 = vmatpush1.msra.mxu0 0.0
      %4044 = vmatprep.subr.mxu0 0.0
      %4045 = vmatpush1.msra.mxu0 0.0
      %4046 = vmatprep.mubr.f32.mxu0 0.0
      %4047 = vmatmul.mubr.f32.gmra.mrb[0].mxu0 %v3935
      %v4048 = vpop.f32.mrb[0].mxu0
      %v4049 = vadd.f32 0.0, %v4048
      %v4050 = vpop.f32.mrb[0].mxu0
      %4051 = vmatprep.mubr.f32.mxu0 0.0
      %4052 = vmatmul.mubr.f32.gmra.mrb[0].mxu0 %v3938
      %v4053 = vpop.f32.mrb[0].mxu0
      %v4054 = vadd.f32 0.0, %v4053
      %v4055 = vpop.f32.mrb[0].mxu0
      %4056 = vmatprep.mubr.f32.mxu0 0.0
      %4057 = vmatmul.mubr.f32.gmra.mrb[0].mxu0 %v3941
      %v4058 = vpop.f32.mrb[0].mxu0
      %v4059 = vadd.f32 0.0, %v4058
      %v4060 = vpop.f32.mrb[0].mxu0
      %4061 = vmatprep.mubr.f32.mxu0 0.0
      %4062 = vmatmul.mubr.f32.gmra.mrb[0].mxu0 %v3944
      %v4063 = vpop.f32.mrb[0].mxu0
      %v4064 = vadd.f32 0.0, %v4063
      %v4065 = vpop.f32.mrb[0].mxu0
      %4066 = vmatprep.mubr.f32.mxu0 0.0
      %4067 = vmatmul.mubr.f32.gmra.mrb[0].mxu0 %v3947
      %v4068 = vpop.f32.mrb[0].mxu0
      %v4069 = vadd.f32 0.0, %v4068
      %v4070 = vpop.f32.mrb[0].mxu0
      %4071 = vmatprep.mubr.f32.mxu0 0.0
      %4072 = vmatmul.mubr.f32.gmra.mrb[0].mxu0 %v3950
      %v4073 = vpop.f32.mrb[0].mxu0
      %v4074 = vadd.f32 0.0, %v4073
      %v4075 = vpop.f32.mrb[0].mxu0
      %4076 = vmatprep.mubr.f32.mxu0 0.0
      %4077 = vmatmul.mubr.f32.gmra.mrb[0].mxu0 %v3953
      %v4078 = vpop.f32.mrb[0].mxu0
      %v4079 = vadd.f32 0.0, %v4078
      %v4080 = vpop.f32.mrb[0].mxu0
      %4081 = vmatprep.mubr.f32.mxu0 0.0
      %4082 = vmatmul.mubr.f32.gmra.mrb[0].mxu0 %v3956
      %v4083 = vpop.f32.mrb[0].mxu0
      %v4084 = vadd.f32 0.0, %v4083
      %v4085 = vpop.f32.mrb[0].mxu0
      %4086 = vmatprep.mubr.f32.mxu0 0.0
      %4087 = vmatmul.mubr.f32.gmra.mrb[0].mxu0 %v3959
      %v4088 = vpop.f32.mrb[0].mxu0
      %v4089 = vadd.f32 0.0, %v4088
      %v4090 = vpop.f32.mrb[0].mxu0
      %4091 = vmatprep.mubr.f32.mxu0 0.0
      %4092 = vmatmul.mubr.f32.gmra.mrb[0].mxu0 %v3962
      %v4093 = vpop.f32.mrb[0].mxu0
      %v4094 = vadd.f32 0.0, %v4093
      %v4095 = vpop.f32.mrb[0].mxu0
      %4096 = vmatprep.mubr.f32.mxu0 0.0
      %4097 = vmatmul.mubr.f32.gmra.mrb[0].mxu0 %v3965
      %v4098 = vpop.f32.mrb[0].mxu0
      %v4099 = vadd.f32 0.0, %v4098
      %v4100 = vpop.f32.mrb[0].mxu0
      %4101 = vmatprep.mubr.f32.mxu0 0.0
      %4102 = vmatmul.mubr.f32.gmra.mrb[0].mxu0 %v3968
      %v4103 = vpop.f32.mrb[0].mxu0
      %v4104 = vadd.f32 0.0, %v4103
      %v4105 = vpop.f32.mrb[0].mxu0
      %4106 = vmatprep.mubr.f32.mxu0 0.0
      %4107 = vmatmul.mubr.f32.gmra.mrb[0].mxu0 %v3971
      %v4108 = vpop.f32.mrb[0].mxu0
      %v4109 = vadd.f32 0.0, %v4108
      %v4110 = vpop.f32.mrb[0].mxu0
      %4111 = vmatprep.mubr.f32.mxu0 0.0
      %4112 = vmatmul.mubr.f32.gmra.mrb[0].mxu0 %v3974
      %v4113 = vpop.f32.mrb[0].mxu0
      %v4114 = vadd.f32 0.0, %v4113
      %v4115 = vpop.f32.mrb[0].mxu0
      %4116 = vmatprep.mubr.f32.mxu0 0.0
      %4117 = vmatmul.mubr.f32.gmra.mrb[0].mxu0 %v3977
      %v4118 = vpop.f32.mrb[0].mxu0
      %v4119 = vadd.f32 0.0, %v4118
      %v4120 = vpop.f32.mrb[0].mxu0
      %4121 = vmatprep.mubr.f32.mxu0 0.0
      %4122 = vmatmul.mubr.f32.gmra.mrb[0].mxu0 %v3980
      %v4123 = vpop.f32.mrb[0].mxu0
      %v4124 = vadd.f32 0.0, %v4123
      %v4125 = vpop.f32.mrb[0].mxu0
      %4126 = vdwg.mxu0
      %vm4127 = vcmask 31744
      %v4128 = vsel %vm4127, %v4049, -inf
      %4129 = vmax.xlane.f32.xlu0 %v4128
      %v4130 = vpop.xlane.xlu0 %4129
      %v4131 = vsel %vm4127, %v4054, -inf
      %4132 = vmax.xlane.f32.xlu0 %v4131
      %v4133 = vpop.xlane.xlu0 %4132
      %v4134 = vsel %vm4127, %v4059, -inf
      %4135 = vmax.xlane.f32.xlu0 %v4134
      %v4136 = vpop.xlane.xlu0 %4135
      %v4137 = vsel %vm4127, %v4064, -inf
      %4138 = vmax.xlane.f32.xlu0 %v4137
      %v4139 = vpop.xlane.xlu0 %4138
      %v4140 = vsel %vm4127, %v4069, -inf
      %4141 = vmax.xlane.f32.xlu0 %v4140
      %v4142 = vpop.xlane.xlu0 %4141
      %v4143 = vsel %vm4127, %v4074, -inf
      %4144 = vmax.xlane.f32.xlu0 %v4143
      %v4145 = vpop.xlane.xlu0 %4144
      %v4146 = vsel %vm4127, %v4079, -inf
      %4147 = vmax.xlane.f32.xlu0 %v4146
      %v4148 = vpop.xlane.xlu0 %4147
      %v4149 = vsel %vm4127, %v4084, -inf
      %4150 = vmax.xlane.f32.xlu0 %v4149
      %v4151 = vpop.xlane.xlu0 %4150
      %v4152 = vsel %vm4127, %v4089, -inf
      %4153 = vmax.xlane.f32.xlu0 %v4152
      %v4154 = vpop.xlane.xlu0 %4153
      %v4155 = vsel %vm4127, %v4094, -inf
      %4156 = vmax.xlane.f32.xlu0 %v4155
      %v4157 = vpop.xlane.xlu0 %4156
      %v4158 = vsel %vm4127, %v4099, -inf
      %4159 = vmax.xlane.f32.xlu0 %v4158
      %v4160 = vpop.xlane.xlu0 %4159
      %v4161 = vsel %vm4127, %v4104, -inf
      %4162 = vmax.xlane.f32.xlu0 %v4161
      %v4163 = vpop.xlane.xlu0 %4162
      %v4164 = vsel %vm4127, %v4109, -inf
      %4165 = vmax.xlane.f32.xlu0 %v4164
      %v4166 = vpop.xlane.xlu0 %4165
      %v4167 = vsel %vm4127, %v4114, -inf
      %4168 = vmax.xlane.f32.xlu0 %v4167
      %v4169 = vpop.xlane.xlu0 %4168
      %v4170 = vsel %vm4127, %v4119, -inf
      %4171 = vmax.xlane.f32.xlu0 %v4170
      %v4172 = vpop.xlane.xlu0 %4171
      %v4173 = vsel %vm4127, %v4124, -inf
      %4174 = vmax.xlane.f32.xlu0 %v4173
      %v4175 = vpop.xlane.xlu0 %4174
      %v4176 = vsub.f32 %v4049, %v4130
      %v4177 = vsub.f32 %v4054, %v4133
      %v4178 = vsub.f32 %v4059, %v4136
      %v4179 = vsub.f32 %v4064, %v4139
      %v4180 = vsub.f32 %v4069, %v4142
      %v4181 = vsub.f32 %v4074, %v4145
      %v4182 = vsub.f32 %v4079, %v4148
      %v4183 = vsub.f32 %v4084, %v4151
      %v4184 = vsub.f32 %v4089, %v4154
      %v4185 = vsub.f32 %v4094, %v4157
      %v4186 = vsub.f32 %v4099, %v4160
      %v4187 = vsub.f32 %v4104, %v4163
      %v4188 = vsub.f32 %v4109, %v4166
      %v4189 = vsub.f32 %v4114, %v4169
      %v4190 = vsub.f32 %v4119, %v4172
      %v4191 = vsub.f32 %v4124, %v4175
      %v4192 = vmul.f32 %v4176, 1.442695
      %v4193 = vpow.pop %v4192
      %v4194 = vmul.f32 %v4177, 1.442695
      %v4195 = vpow.pop %v4194
      %v4196 = vmul.f32 %v4178, 1.442695
      %v4197 = vpow.pop %v4196
      %v4198 = vmul.f32 %v4179, 1.442695
      %v4199 = vpow.pop %v4198
      %v4200 = vmul.f32 %v4180, 1.442695
      %v4201 = vpow.pop %v4200
      %v4202 = vmul.f32 %v4181, 1.442695
      %v4203 = vpow.pop %v4202
      %v4204 = vmul.f32 %v4182, 1.442695
      %v4205 = vpow.pop %v4204
      %v4206 = vmul.f32 %v4183, 1.442695
      %v4207 = vpow.pop %v4206
      %v4208 = vmul.f32 %v4184, 1.442695
      %v4209 = vpow.pop %v4208
      %v4210 = vmul.f32 %v4185, 1.442695
      %v4211 = vpow.pop %v4210
      %v4212 = vmul.f32 %v4186, 1.442695
      %v4213 = vpow.pop %v4212
      %v4214 = vmul.f32 %v4187, 1.442695
      %v4215 = vpow.pop %v4214
      %v4216 = vmul.f32 %v4188, 1.442695
      %v4217 = vpow.pop %v4216
      %v4218 = vmul.f32 %v4189, 1.442695
      %v4219 = vpow.pop %v4218
      %v4220 = vmul.f32 %v4190, 1.442695
      %v4221 = vpow.pop %v4220
      %v4222 = vmul.f32 %v4191, 1.442695
      %v4223 = vpow.pop %v4222
      %v4224 = vsel %vm4127, %v4193, 0.0
      %4225 = vadd.xlane.f32.xlu0 %v4224
      %v4226 = vpop.xlane.xlu0 %4225
      %v4227 = vsel %vm4127, %v4195, 0.0
      %4228 = vadd.xlane.f32.xlu0 %v4227
      %v4229 = vpop.xlane.xlu0 %4228
      %v4230 = vsel %vm4127, %v4197, 0.0
      %4231 = vadd.xlane.f32.xlu0 %v4230
      %v4232 = vpop.xlane.xlu0 %4231
      %v4233 = vsel %vm4127, %v4199, 0.0
      %4234 = vadd.xlane.f32.xlu0 %v4233
      %v4235 = vpop.xlane.xlu0 %4234
      %v4236 = vsel %vm4127, %v4201, 0.0
      %4237 = vadd.xlane.f32.xlu0 %v4236
      %v4238 = vpop.xlane.xlu0 %4237
      %v4239 = vsel %vm4127, %v4203, 0.0
      %4240 = vadd.xlane.f32.xlu0 %v4239
      %v4241 = vpop.xlane.xlu0 %4240
      %v4242 = vsel %vm4127, %v4205, 0.0
      %4243 = vadd.xlane.f32.xlu0 %v4242
      %v4244 = vpop.xlane.xlu0 %4243
      %v4245 = vsel %vm4127, %v4207, 0.0
      %4246 = vadd.xlane.f32.xlu0 %v4245
      %v4247 = vpop.xlane.xlu0 %4246
      %v4248 = vsel %vm4127, %v4209, 0.0
      %4249 = vadd.xlane.f32.xlu0 %v4248
      %v4250 = vpop.xlane.xlu0 %4249
      %v4251 = vsel %vm4127, %v4211, 0.0
      %4252 = vadd.xlane.f32.xlu0 %v4251
      %v4253 = vpop.xlane.xlu0 %4252
      %v4254 = vsel %vm4127, %v4213, 0.0
      %4255 = vadd.xlane.f32.xlu0 %v4254
      %v4256 = vpop.xlane.xlu0 %4255
      %v4257 = vsel %vm4127, %v4215, 0.0
      %4258 = vadd.xlane.f32.xlu0 %v4257
      %v4259 = vpop.xlane.xlu0 %4258
      %v4260 = vsel %vm4127, %v4217, 0.0
      %4261 = vadd.xlane.f32.xlu0 %v4260
      %v4262 = vpop.xlane.xlu0 %4261
      %v4263 = vsel %vm4127, %v4219, 0.0
      %4264 = vadd.xlane.f32.xlu0 %v4263
      %v4265 = vpop.xlane.xlu0 %4264
      %v4266 = vsel %vm4127, %v4221, 0.0
      %4267 = vadd.xlane.f32.xlu0 %v4266
      %v4268 = vpop.xlane.xlu0 %4267
      %v4269 = vsel %vm4127, %v4223, 0.0
      %4270 = vadd.xlane.f32.xlu0 %v4269
      %v4271 = vpop.xlane.xlu0 %4270
      %v4272 = vrcp.pop %v4226
      %v4273 = vrcp.pop %v4229
      %v4274 = vrcp.pop %v4232
      %v4275 = vrcp.pop %v4235
      %v4276 = vrcp.pop %v4238
      %v4277 = vrcp.pop %v4241
      %v4278 = vrcp.pop %v4244
      %v4279 = vrcp.pop %v4247
      %v4280 = vrcp.pop %v4250
      %v4281 = vrcp.pop %v4253
      %v4282 = vrcp.pop %v4256
      %v4283 = vrcp.pop %v4259
      %v4284 = vrcp.pop %v4262
      %v4285 = vrcp.pop %v4265
      %v4286 = vrcp.pop %v4268
      %v4287 = vrcp.pop %v4271
      %v4288 = vmul.f32 %v4226, %v4272
      %v4289 = vmul.f32 %v4229, %v4273
      %v4290 = vmul.f32 %v4232, %v4274
      %v4291 = vmul.f32 %v4235, %v4275
      %v4292 = vmul.f32 %v4238, %v4276
      %v4293 = vmul.f32 %v4241, %v4277
      %v4294 = vmul.f32 %v4244, %v4278
      %v4295 = vmul.f32 %v4247, %v4279
      %v4296 = vmul.f32 %v4250, %v4280
      %v4297 = vmul.f32 %v4253, %v4281
      %v4298 = vmul.f32 %v4256, %v4282
      %v4299 = vmul.f32 %v4259, %v4283
      %v4300 = vmul.f32 %v4262, %v4284
      %v4301 = vmul.f32 %v4265, %v4285
      %v4302 = vmul.f32 %v4268, %v4286
      %v4303 = vmul.f32 %v4271, %v4287
      %v4304 = vsub.f32 2.0, %v4288
      %v4305 = vsub.f32 2.0, %v4289
      %v4306 = vsub.f32 2.0, %v4290
      %v4307 = vsub.f32 2.0, %v4291
      %v4308 = vsub.f32 2.0, %v4292
      %v4309 = vsub.f32 2.0, %v4293
      %v4310 = vsub.f32 2.0, %v4294
      %v4311 = vsub.f32 2.0, %v4295
      %v4312 = vsub.f32 2.0, %v4296
      %v4313 = vsub.f32 2.0, %v4297
      %v4314 = vsub.f32 2.0, %v4298
      %v4315 = vsub.f32 2.0, %v4299
      %v4316 = vsub.f32 2.0, %v4300
      %v4317 = vsub.f32 2.0, %v4301
      %v4318 = vsub.f32 2.0, %v4302
      %v4319 = vsub.f32 2.0, %v4303
      %v4320 = vmul.f32 %v4272, %v4304
      %v4321 = vmul.f32 %v4273, %v4305
      %v4322 = vmul.f32 %v4274, %v4306
      %v4323 = vmul.f32 %v4275, %v4307
      %v4324 = vmul.f32 %v4276, %v4308
      %v4325 = vmul.f32 %v4277, %v4309
      %v4326 = vmul.f32 %v4278, %v4310
      %v4327 = vmul.f32 %v4279, %v4311
      %v4328 = vmul.f32 %v4280, %v4312
      %v4329 = vmul.f32 %v4281, %v4313
      %v4330 = vmul.f32 %v4282, %v4314
      %v4331 = vmul.f32 %v4283, %v4315
      %v4332 = vmul.f32 %v4284, %v4316
      %v4333 = vmul.f32 %v4285, %v4317
      %v4334 = vmul.f32 %v4286, %v4318
      %v4335 = vmul.f32 %v4287, %v4319
      %v4336 = vmul.f32 %v4193, %v4320
      %v4337 = vmul.f32 %v4195, %v4321
      %v4338 = vmul.f32 %v4197, %v4322
      %v4339 = vmul.f32 %v4199, %v4323
      %v4340 = vmul.f32 %v4201, %v4324
      %v4341 = vmul.f32 %v4203, %v4325
      %v4342 = vmul.f32 %v4205, %v4326
      %v4343 = vmul.f32 %v4207, %v4327
      %v4344 = vmul.f32 %v4209, %v4328
      %v4345 = vmul.f32 %v4211, %v4329
      %v4346 = vmul.f32 %v4213, %v4330
      %v4347 = vmul.f32 %v4215, %v4331
      %v4348 = vmul.f32 %v4217, %v4332
      %v4349 = vmul.f32 %v4219, %v4333
      %v4350 = vmul.f32 %v4221, %v4334
      %v4351 = vmul.f32 %v4223, %v4335
      %4352 = vst.msk [vmem:[%s356] sm:$0xff] %vm4127, %v4336
      %4353 = vst.msk [vmem:[%s356 + $0x8] sm:$0xff] %vm4127, %v4337
      %4354 = vst.msk [vmem:[%s356 + $0x10] sm:$0xff] %vm4127, %v4338
      %4355 = vst.msk [vmem:[%s356 + $0x18] sm:$0xff] %vm4127, %v4339
      %4356 = vst.msk [vmem:[%s356 + $0x20] sm:$0xff] %vm4127, %v4340
      %4357 = vst.msk [vmem:[%s356 + $0x28] sm:$0xff] %vm4127, %v4341
      %4358 = vst.msk [vmem:[%s356 + $0x30] sm:$0xff] %vm4127, %v4342
      %4359 = vst.msk [vmem:[%s356 + $0x38] sm:$0xff] %vm4127, %v4343
      %4360 = vst.msk [vmem:[%s356 + $0x40] sm:$0xff] %vm4127, %v4344
      %4361 = vst.msk [vmem:[%s356 + $0x48] sm:$0xff] %vm4127, %v4345
      %4362 = vst.msk [vmem:[%s356 + $0x50] sm:$0xff] %vm4127, %v4346
      %4363 = vst.msk [vmem:[%s356 + $0x58] sm:$0xff] %vm4127, %v4347
      %4364 = vst.msk [vmem:[%s356 + $0x60] sm:$0xff] %vm4127, %v4348
      %4365 = vst.msk [vmem:[%s356 + $0x68] sm:$0xff] %vm4127, %v4349
      %4366 = vst.msk [vmem:[%s356 + $0x70] sm:$0xff] %vm4127, %v4350
      %4367 = vst.msk [vmem:[%s356 + $0x78] sm:$0xff] %vm4127, %v4351
      %s4368 = smul.u32 16, %s20
      %p4369 = scmp.lt.s32.totalorder %s4368, 63
      %s4370 = scalar_select %p4369, %s4368, 63
      %s4371 = smul.addr %s4370, 8
      %s4372 = scalar_lea.vmem %s9, %s4371
      // Predicated region
      $region57: #{tpu_custom_call.1} parent=55 // pred_check
        %p4373 = pneg %p237
      $region58: #{tpu_custom_call.1} parent=55 // pred_check_branch
        %4375 = sbr.rel (%p4373) target = $region60
      $region59: #{tpu_custom_call.1} parent=55 // pred_region
        %s4376 = smul.u32 16, %s20
      $region60: #{tpu_custom_call.1} parent=55 // pred_fallthru
        _
    $region56: #{tpu_custom_call.1} parent=5 // pred_fallthru
      _
    %p4377 = scmp.le.s32.totalorder 2, %s15
    // Predicated region
    $region61: #{tpu_custom_call.1} parent=5 // pred_check
      %p4378 = pneg %p4377
    $region62: #{tpu_custom_call.1} parent=5 // pred_check_branch
      %4380 = sbr.rel (%p4378) target = $region64
    $region63: #{tpu_custom_call.1} parent=5 // pred_region
      %s4381 = ssub.s32 %s15, 2
      // Predicated region
      $region65: #{tpu_custom_call.1} parent=63 // pred_check
        %p4382 = pneg %p243
      $region66: #{tpu_custom_call.1} parent=63 // pred_check_branch
        %4384 = sbr.rel (%p4382) target = $region68
      $region67: #{tpu_custom_call.1} parent=63 // pred_region
        %s4385 = smul.u32 16, %s21
        %p4386 = scmp.lt.s32.totalorder %s4385, 63
        %s4387 = scalar_select %p4386, %s4385, 63
        %s4388 = smul.addr %s4387, 8
        %s4389 = scalar_lea.vmem %s9, %s4388
      $region68: #{tpu_custom_call.1} parent=63 // pred_fallthru
        _
    $region64: #{tpu_custom_call.1} parent=5 // pred_fallthru
      _
  $region6: #{tpu_custom_call.1} parent=0 // loop_footer
    %s19 = sadd.s32 1, %s15
  $region7: #{tpu_custom_call.1} parent=0 // loop_footer_branch
    %14 = sbr.rel target = $region3
  $region8: #{tpu_custom_call.1} parent=0 // loop_exit
    _

</llo_original>
